<compile_context>
chip_gen: v7x
topology: tpu7x:2x2x1
jax: 0.10.0
libtpu: 0.0.40
codegen_flags: <defaults>
</compile_context>

<pallas_src>
import functools

import jax
import jax.numpy as jnp
from jax.experimental import pallas as pl
from jax.experimental.pallas import tpu as pltpu

EPS = 1e-12  # LayerNorm epsilon from the PyTorch module


# ---------------------------------------------------------------------------
# in-kernel math helpers
# ---------------------------------------------------------------------------
def _layernorm(x, gamma, beta):
    # matches torch: mean over last dim, *unbiased* variance (N-1 divisor)
    n = x.shape[-1]
    mean = jnp.mean(x, axis=-1, keepdims=True)
    d = x - mean
    var = jnp.sum(d * d, axis=-1, keepdims=True) * (1.0 / (n - 1))
    return gamma * (d * jax.lax.rsqrt(var + EPS)) + beta


def _split_heads(x2, bb, s, num_heads, d_head, col0):
    """(bb*s, lanes) -> (bb*num_heads, s, d_head).

    Takes `num_heads` blocks of width `d_head` starting at lane `col0` and
    moves the head axis to a leading batch axis, using only static lane
    slices, a major-axis concat and leading-dim reshapes (Mosaic-safe).
    """
    parts = [
        x2[:, col0 + h * d_head: col0 + (h + 1) * d_head].reshape(bb, 1, s, d_head)
        for h in range(num_heads)
    ]
    return jnp.concatenate(parts, axis=1).reshape(bb * num_heads, s, d_head)


def _merge_heads(ctx, bb, sq, num_heads, d_head):
    """(bb*num_heads, sq, d_head) -> (bb*sq, num_heads*d_head)."""
    ctx4 = ctx.reshape(bb, num_heads, sq, d_head)
    cat = jnp.concatenate([ctx4[:, h] for h in range(num_heads)], axis=-1)
    return cat.reshape(bb * sq, num_heads * d_head)


def _mha(xq2, xkv2, bb, sq, skv, w_ref, wo_ref, b_ref, num_heads, d_head):
    """Multi-head attention with all heads batched into single einsums.

    xq2   : (bb*sq, E)      query-side activations
    xkv2  : (bb*skv, E)     key/value-side activations
    w_ref : (E, 3*H*Dh)     fused [Wq | Wk | Wv] weight slab (one DMA)
    wo_ref: (H*Dh, E)       output projection
    b_ref : (1, 3*H*Dh + E) fused [bq | bk | bv | bo]
    Returns (bb*sq, E) in float32.
    """
    hdh = num_heads * d_head
    scale = 1.0 / jnp.sqrt(jnp.float32(d_head))
    b = b_ref[...]

    # Q and fused-KV projections against contiguous column windows of the
    # resident weight slab.  Scale applied to q in-kernel (one VPU multiply),
    # not folded into the weights.
    q2 = (jnp.dot(xq2, w_ref[:, :hdh], preferred_element_type=jnp.float32)
          + b[:, :hdh]) * scale
    kv2 = (jnp.dot(xkv2, w_ref[:, hdh:3 * hdh], preferred_element_type=jnp.float32)
           + b[:, hdh:3 * hdh])

    # heads -> leading batch axis: (bb*H, s, Dh)
    q_bh = _split_heads(q2, bb, sq, num_heads, d_head, 0)
    k_bh = _split_heads(kv2, bb, skv, num_heads, d_head, 0)
    v_bh = _split_heads(kv2, bb, skv, num_heads, d_head, hdh)

    # ONE batched score einsum + ONE softmax + ONE batched context einsum.
    s = jnp.einsum('bqd,bkd->bqk', q_bh, k_bh, preferred_element_type=jnp.float32)
    s = s - jnp.max(s, axis=-1, keepdims=True)
    p = jnp.exp(s)
    inv_l = pl.reciprocal(jnp.sum(p, axis=-1, keepdims=True), approx=True)  # EUP
    ctx = jnp.einsum('bqk,bkd->bqd', p, v_bh,
                     preferred_element_type=jnp.float32) * inv_l

    # single contraction-(H*Dh) output projection
    cat = _merge_heads(ctx, bb, sq, num_heads, d_head)
    return (jnp.dot(cat, wo_ref[...], preferred_element_type=jnp.float32)
            + b[:, 3 * hdh:])


# ---------------------------------------------------------------------------
# Pallas kernel: a whole batch block per grid step, weights resident in VMEM
# ---------------------------------------------------------------------------
def decoder_block_kernel(num_heads, d_head,
                         dec_ref, enc_ref,
                         sa_w, sa_wo, sa_b,
                         ca_w, ca_wo, ca_b,
                         ff_w1, ff_w2, ff_b,
                         ln_ref,
                         out_ref):
    BB, Sd, E = dec_ref.shape
    Se = enc_ref.shape[1]
    FF = ff_w1.shape[1]

    x2 = dec_ref[...].astype(jnp.float32).reshape(BB * Sd, E)
    e2 = enc_ref[...].astype(jnp.float32).reshape(BB * Se, E)
    ln = ln_ref[...]

    # masked self-attention (mask=None path) + residual + LayerNorm1
    a1 = _mha(x2, x2, BB, Sd, Sd, sa_w, sa_wo, sa_b, num_heads, d_head)
    out1 = _layernorm(a1 + x2, ln[0:1, :], ln[1:2, :])
    # dropout -> identity (eval mode)

    # cross-attention + residual + LayerNorm2
    a2 = _mha(out1, e2, BB, Sd, Se, ca_w, ca_wo, ca_b, num_heads, d_head)
    out2 = _layernorm(a2 + out1, ln[2:3, :], ln[3:4, :])

    # feed-forward (linear -> relu -> linear) + residual + LayerNorm3
    h = jnp.maximum(
        jnp.dot(out2, ff_w1[...], preferred_element_type=jnp.float32)
        + ff_b[:, :FF], 0.0)
    f = jnp.dot(h, ff_w2[...], preferred_element_type=jnp.float32) + ff_b[:, FF:]
    out3 = _layernorm(f + out2, ln[4:5, :], ln[5:6, :])

    out_ref[...] = out3.reshape(BB, Sd, E).astype(out_ref.dtype)


# ---------------------------------------------------------------------------
# wrapper: pack per-head module parameters into a few fused slabs + pallas_call
# ---------------------------------------------------------------------------
def _pack_params(params, num_heads, d_head):
    E = params['sa_wq'].shape[1]
    hdh = num_heads * d_head

    def attn(prefix):
        wq = jnp.transpose(params[f'{prefix}_wq'], (1, 0, 2)).reshape(E, hdh)
        wk = jnp.transpose(params[f'{prefix}_wk'], (1, 0, 2)).reshape(E, hdh)
        wv = jnp.transpose(params[f'{prefix}_wv'], (1, 0, 2)).reshape(E, hdh)
        w = jnp.concatenate([wq, wk, wv], axis=1)                        # (E, 3*H*Dh)
        b = jnp.concatenate(
            [params[f'{prefix}_bq'].reshape(1, hdh),
             params[f'{prefix}_bk'].reshape(1, hdh),
             params[f'{prefix}_bv'].reshape(1, hdh),
             params[f'{prefix}_bo'].reshape(1, E)], axis=1)              # (1, 3*H*Dh+E)
        return w, params[f'{prefix}_wo'], b

    sa_w, sa_wo, sa_b = attn('sa')
    ca_w, ca_wo, ca_b = attn('ca')
    ff_b = jnp.concatenate([params['ff_b1'], params['ff_b2']], axis=1)   # (1, FF+E)
    ln_p = jnp.concatenate([params['ln1_g'], params['ln1_b'],
                            params['ln2_g'], params['ln2_b'],
                            params['ln3_g'], params['ln3_b']], axis=0)   # (6, E)
    return (sa_w, sa_wo, sa_b, ca_w, ca_wo, ca_b,
            params['ff_w1'], params['ff_w2'], ff_b, ln_p)


def _two_tensorcore_device():
    # v7x has 2 TensorCores per chip; engage both by splitting the batch.
    try:
        return "v7" in jax.devices()[0].device_kind.lower()
    except Exception:
        return False


def decoder_block(dec, enc, params, *, batch_block=None):
    B, Sd, E = dec.shape
    _, Se, _ = enc.shape
    H, _, Dh = params['sa_wq'].shape
    packed = _pack_params(params, H, Dh)

    if batch_block is None:
        # One grid step on single-TC chips (v5e/v6e); split the batch over the
        # two TensorCores on v7x (the grid axis is marked "parallel").
        batch_block = B // 2 if (_two_tensorcore_device() and B % 2 == 0) else B
    BB = batch_block
    assert B % BB == 0, "batch_block must divide batch size"
    grid = (B // BB,)

    def full_spec(w):
        # Whole slab resident in VMEM each step.  For production E/FF, add
        # pipeline_mode=pl.Buffered(1) here (constant block index -> double
        # buffering wastes VMEM, critical on v7x's 64 MiB / v5e's 16 MiB scoped
        # default) and tile ff_w1/ff_w2 along FF.
        nd = w.ndim
        return pl.BlockSpec(w.shape, lambda i, _nd=nd: (0,) * _nd)

    in_specs = ([pl.BlockSpec((BB, Sd, E), lambda i: (i, 0, 0)),
                 pl.BlockSpec((BB, Se, E), lambda i: (i, 0, 0))]
                + [full_spec(w) for w in packed])

    kernel = functools.partial(decoder_block_kernel, H, Dh)

    return pl.pallas_call(
        kernel,
        out_shape=jax.ShapeDtypeStruct((B, Sd, E), dec.dtype),
        grid_spec=pltpu.PrefetchScalarGridSpec(
            num_scalar_prefetch=0,
            grid=grid,
            in_specs=in_specs,
            out_specs=pl.BlockSpec((BB, Sd, E), lambda i: (i, 0, 0))),
        compiler_params=pltpu.CompilerParams(
            dimension_semantics=("parallel",),
            vmem_limit_bytes=64 * 1024 * 1024),
    )(dec, enc, *packed)


# ---------------------------------------------------------------------------
# deterministic parameter init (synthetic; shapes follow the module __init__)
# ---------------------------------------------------------------------------
def make_params(key, E, H, DH, FF):
    shapes = {
        'sa_wq': (H, E, DH), 'sa_bq': (H, 1, DH),
        'sa_wk': (H, E, DH), 'sa_bk': (H, 1, DH),
        'sa_wv': (H, E, DH), 'sa_bv': (H, 1, DH),
        'sa_wo': (H * DH, E), 'sa_bo': (1, E),
        'ln1_g': (1, E), 'ln1_b': (1, E),
        'ca_wq': (H, E, DH), 'ca_bq': (H, 1, DH),
        'ca_wk': (H, E, DH), 'ca_bk': (H, 1, DH),
        'ca_wv': (H, E, DH), 'ca_bv': (H, 1, DH),
        'ca_wo': (H * DH, E), 'ca_bo': (1, E),
        'ln2_g': (1, E), 'ln2_b': (1, E),
        'ff_w1': (E, FF), 'ff_b1': (1, FF),
        'ff_w2': (FF, E), 'ff_b2': (1, E),
        'ln3_g': (1, E), 'ln3_b': (1, E),
    }
    params = {}
    keys = jax.random.split(key, len(shapes))
    for k, (name, shape) in zip(keys, shapes.items()):
        if name.startswith('ln') and name.endswith('_g'):
            params[name] = jnp.ones(shape, jnp.float32)   # gamma = 1
        elif name.startswith('ln') and name.endswith('_b'):
            params[name] = jnp.zeros(shape, jnp.float32)  # beta = 0
        else:
            params[name] = 0.1 * jax.random.normal(k, shape, dtype=jnp.float32)
    return params


# ---------------------------------------------------------------------------
# pure-JAX reference (unfused, per-head math) for correctness check
# ---------------------------------------------------------------------------
def _ln_ref(x, g, b):
    n = x.shape[-1]
    mean = jnp.mean(x, axis=-1, keepdims=True)
    var = jnp.sum((x - mean) ** 2, axis=-1, keepdims=True) / (n - 1)
    return g * ((x - mean) / jnp.sqrt(var + EPS)) + b


def _mha_ref(xq, xkv, wq, bq, wk, bk, wv, bv, wo, bo):
    H, _, dh = wq.shape
    scale = 1.0 / jnp.sqrt(jnp.float32(dh))
    heads = []
    for h in range(H):
        q = xq @ wq[h] + bq[h]
        k = xkv @ wk[h] + bk[h]
        v = xkv @ wv[h] + bv[h]
        s = (q @ k.T) * scale
        p = jax.nn.softmax(s, axis=-1)
        heads.append(p @ v)
    cat = jnp.concatenate(heads, axis=-1)
    return cat @ wo + bo


def reference(dec, enc, P):
    def one(x, e):
        a1 = _mha_ref(x, x, P['sa_wq'], P['sa_bq'], P['sa_wk'], P['sa_bk'],
                      P['sa_wv'], P['sa_bv'], P['sa_wo'], P['sa_bo'])
        o1 = _ln_ref(a1 + x, P['ln1_g'], P['ln1_b'])
        a2 = _mha_ref(o1, e, P['ca_wq'], P['ca_bq'], P['ca_wk'], P['ca_bk'],
                      P['ca_wv'], P['ca_bv'], P['ca_wo'], P['ca_bo'])
        o2 = _ln_ref(a2 + o1, P['ln2_g'], P['ln2_b'])
        h = jnp.maximum(jnp.dot(o2, P['ff_w1']) + P['ff_b1'], 0.0)
        f = jnp.dot(h, P['ff_w2']) + P['ff_b2']
        return _ln_ref(f + o2, P['ln3_g'], P['ln3_b'])
    return jax.vmap(one)(dec, enc)


if __name__ == "__main__":
    emb_dim, num_heads, ff_dim = 32, 4, 64
    d_head = emb_dim // num_heads
    B, seq_de, seq_en = 2, 8, 10

    key = jax.random.PRNGKey(0)
    kp, kd, ke = jax.random.split(key, 3)
    params = make_params(kp, emb_dim, num_heads, d_head, ff_dim)
    decoder_input = jax.random.normal(kd, (B, seq_de, emb_dim), dtype=jnp.float32)
    encoder_output = jax.random.normal(ke, (B, seq_en, emb_dim), dtype=jnp.float32)

    out = decoder_block(decoder_input, encoder_output, params)
    out = jax.block_until_ready(out)

    ref = reference(decoder_input, encoder_output, params)
    assert out.shape == (B, seq_de, emb_dim)
    err = float(jnp.max(jnp.abs(out - ref)))
    # tolerance allows for the EUP approximate reciprocal in the softmax
    # denominator and for f32 accumulation-order differences.
    assert jnp.allclose(out, ref, atol=2e-3, rtol=2e-3), f"max abs err {err}"

    print("KERNEL_OK")
</pallas_src>

<mosaic_0001>
module attributes {stable_mosaic.version = 11 : i64} {
  func.func @decoder_block_kernel(%arg0: i32, %arg1: memref<2x8x32xf32, #tpu.memory_space<vmem>>, %arg2: memref<2x10x32xf32, #tpu.memory_space<vmem>>, %arg3: memref<32x96xf32, #tpu.memory_space<vmem>>, %arg4: memref<32x32xf32, #tpu.memory_space<vmem>>, %arg5: memref<1x128xf32, #tpu.memory_space<vmem>>, %arg6: memref<32x96xf32, #tpu.memory_space<vmem>>, %arg7: memref<32x32xf32, #tpu.memory_space<vmem>>, %arg8: memref<1x128xf32, #tpu.memory_space<vmem>>, %arg9: memref<32x64xf32, #tpu.memory_space<vmem>>, %arg10: memref<64x32xf32, #tpu.memory_space<vmem>>, %arg11: memref<1x96xf32, #tpu.memory_space<vmem>>, %arg12: memref<6x32xf32, #tpu.memory_space<vmem>>, %arg13: memref<2x8x32xf32, #tpu.memory_space<vmem>>) attributes {dimension_semantics = [#tpu.dimension_semantics<parallel>], iteration_bounds = array<i64: 1>, scalar_prefetch = 0 : i64, scratch_operands = 0 : i64, tpu.core_type = #tpu.core_type<tc>, window_params = [{transform_indices = @transform_0, window_bounds = array<i64: 2, 8, 32>}, {transform_indices = @transform_1, window_bounds = array<i64: 2, 10, 32>}, {pipeline_mode = #tpu.pipeline_mode<synchronous>, transform_indices = @transform_2, window_bounds = array<i64: 32, 96>}, {pipeline_mode = #tpu.pipeline_mode<synchronous>, transform_indices = @transform_3, window_bounds = array<i64: 32, 32>}, {pipeline_mode = #tpu.pipeline_mode<synchronous>, transform_indices = @transform_4, window_bounds = array<i64: 1, 128>}, {pipeline_mode = #tpu.pipeline_mode<synchronous>, transform_indices = @transform_5, window_bounds = array<i64: 32, 96>}, {pipeline_mode = #tpu.pipeline_mode<synchronous>, transform_indices = @transform_6, window_bounds = array<i64: 32, 32>}, {pipeline_mode = #tpu.pipeline_mode<synchronous>, transform_indices = @transform_7, window_bounds = array<i64: 1, 128>}, {pipeline_mode = #tpu.pipeline_mode<synchronous>, transform_indices = @transform_8, window_bounds = array<i64: 32, 64>}, {pipeline_mode = #tpu.pipeline_mode<synchronous>, transform_indices = @transform_9, window_bounds = array<i64: 64, 32>}, {pipeline_mode = #tpu.pipeline_mode<synchronous>, transform_indices = @transform_10, window_bounds = array<i64: 1, 96>}, {pipeline_mode = #tpu.pipeline_mode<synchronous>, transform_indices = @transform_11, window_bounds = array<i64: 6, 32>}, {transform_indices = @transform_12, window_bounds = array<i64: 2, 8, 32>}]} {
    %c0 = arith.constant 0 : index
    %c0_0 = arith.constant 0 : index
    %c0_1 = arith.constant 0 : index
    %0 = vector.load %arg1[%c0, %c0_0, %c0_1] : memref<2x8x32xf32, #tpu.memory_space<vmem>>, vector<2x8x32xf32>
    %1 = vector.shape_cast %0 : vector<2x8x32xf32> to vector<16x32xf32>
    %c0_2 = arith.constant 0 : index
    %c0_3 = arith.constant 0 : index
    %c0_4 = arith.constant 0 : index
    %2 = vector.load %arg2[%c0_2, %c0_3, %c0_4] : memref<2x10x32xf32, #tpu.memory_space<vmem>>, vector<2x10x32xf32>
    %3 = vector.shape_cast %2 : vector<2x10x32xf32> to vector<20x32xf32>
    %c0_5 = arith.constant 0 : index
    %c0_6 = arith.constant 0 : index
    %4 = vector.load %arg12[%c0_5, %c0_6] : memref<6x32xf32, #tpu.memory_space<vmem>>, vector<6x32xf32>
    %cst = arith.constant 8.000000e+00 : f32
    %5 = math.sqrt %cst : f32
    %cst_7 = arith.constant 1.000000e+00 : f32
    %6 = arith.divf %cst_7, %5 : f32
    %c0_8 = arith.constant 0 : index
    %c0_9 = arith.constant 0 : index
    %7 = vector.load %arg5[%c0_8, %c0_9] : memref<1x128xf32, #tpu.memory_space<vmem>>, vector<1x128xf32>
    %c0_10 = arith.constant 0 : index
    %c0_11 = arith.constant 0 : index
    %8 = vector.load %arg3[%c0_10, %c0_11] : memref<32x96xf32, #tpu.memory_space<vmem>>, vector<32x32xf32>
    %cst_12 = arith.constant dense<0.000000e+00> : vector<16x32xf32>
    %9 = tpu.matmul %1, %8, %cst_12 {dimension_numbers = #tpu.dot_dimension_numbers<[1], [0], [0], [1], [0, 0, 1, 1], [], []>} : vector<16x32xf32>, vector<32x32xf32>, vector<16x32xf32> -> vector<16x32xf32>
    %10 = vector.extract_strided_slice %7 {offsets = [0, 0], sizes = [1, 32], strides = [1, 1]} : vector<1x128xf32> to vector<1x32xf32>
    %11 = vector.broadcast %10 : vector<1x32xf32> to vector<16x32xf32>
    %12 = arith.addf %9, %11 : vector<16x32xf32>
    %13 = vector.broadcast %6 : f32 to vector<16x32xf32>
    %14 = arith.mulf %12, %13 : vector<16x32xf32>
    %c0_13 = arith.constant 0 : index
    %c32 = arith.constant 32 : index
    %15 = vector.load %arg3[%c0_13, %c32] : memref<32x96xf32, #tpu.memory_space<vmem>>, vector<32x64xf32>
    %cst_14 = arith.constant dense<0.000000e+00> : vector<16x64xf32>
    %16 = tpu.matmul %1, %15, %cst_14 {dimension_numbers = #tpu.dot_dimension_numbers<[1], [0], [0], [1], [0, 0, 1, 1], [], []>} : vector<16x32xf32>, vector<32x64xf32>, vector<16x64xf32> -> vector<16x64xf32>
    %17 = vector.extract_strided_slice %7 {offsets = [0, 32], sizes = [1, 64], strides = [1, 1]} : vector<1x128xf32> to vector<1x64xf32>
    %18 = vector.broadcast %17 : vector<1x64xf32> to vector<16x64xf32>
    %19 = arith.addf %16, %18 : vector<16x64xf32>
    %20 = vector.extract_strided_slice %14 {offsets = [0, 0], sizes = [16, 8], strides = [1, 1]} : vector<16x32xf32> to vector<16x8xf32>
    %21 = vector.shape_cast %20 : vector<16x8xf32> to vector<2x1x8x8xf32>
    %22 = vector.extract_strided_slice %14 {offsets = [0, 8], sizes = [16, 8], strides = [1, 1]} : vector<16x32xf32> to vector<16x8xf32>
    %23 = vector.shape_cast %22 : vector<16x8xf32> to vector<2x1x8x8xf32>
    %24 = vector.extract_strided_slice %14 {offsets = [0, 16], sizes = [16, 8], strides = [1, 1]} : vector<16x32xf32> to vector<16x8xf32>
    %25 = vector.shape_cast %24 : vector<16x8xf32> to vector<2x1x8x8xf32>
    %26 = vector.extract_strided_slice %14 {offsets = [0, 24], sizes = [16, 8], strides = [1, 1]} : vector<16x32xf32> to vector<16x8xf32>
    %27 = vector.shape_cast %26 : vector<16x8xf32> to vector<2x1x8x8xf32>
    %28 = tpu.concatenate %21, %23, %25, %27 in 1 : vector<2x1x8x8xf32>, vector<2x1x8x8xf32>, vector<2x1x8x8xf32>, vector<2x1x8x8xf32> -> vector<2x4x8x8xf32>
    %29 = vector.shape_cast %28 : vector<2x4x8x8xf32> to vector<8x8x8xf32>
    %30 = vector.extract_strided_slice %19 {offsets = [0, 0], sizes = [16, 8], strides = [1, 1]} : vector<16x64xf32> to vector<16x8xf32>
    %31 = vector.shape_cast %30 : vector<16x8xf32> to vector<2x1x8x8xf32>
    %32 = vector.extract_strided_slice %19 {offsets = [0, 8], sizes = [16, 8], strides = [1, 1]} : vector<16x64xf32> to vector<16x8xf32>
    %33 = vector.shape_cast %32 : vector<16x8xf32> to vector<2x1x8x8xf32>
    %34 = vector.extract_strided_slice %19 {offsets = [0, 16], sizes = [16, 8], strides = [1, 1]} : vector<16x64xf32> to vector<16x8xf32>
    %35 = vector.shape_cast %34 : vector<16x8xf32> to vector<2x1x8x8xf32>
    %36 = vector.extract_strided_slice %19 {offsets = [0, 24], sizes = [16, 8], strides = [1, 1]} : vector<16x64xf32> to vector<16x8xf32>
    %37 = vector.shape_cast %36 : vector<16x8xf32> to vector<2x1x8x8xf32>
    %38 = tpu.concatenate %31, %33, %35, %37 in 1 : vector<2x1x8x8xf32>, vector<2x1x8x8xf32>, vector<2x1x8x8xf32>, vector<2x1x8x8xf32> -> vector<2x4x8x8xf32>
    %39 = vector.shape_cast %38 : vector<2x4x8x8xf32> to vector<8x8x8xf32>
    %40 = vector.extract_strided_slice %19 {offsets = [0, 32], sizes = [16, 8], strides = [1, 1]} : vector<16x64xf32> to vector<16x8xf32>
    %41 = vector.shape_cast %40 : vector<16x8xf32> to vector<2x1x8x8xf32>
    %42 = vector.extract_strided_slice %19 {offsets = [0, 40], sizes = [16, 8], strides = [1, 1]} : vector<16x64xf32> to vector<16x8xf32>
    %43 = vector.shape_cast %42 : vector<16x8xf32> to vector<2x1x8x8xf32>
    %44 = vector.extract_strided_slice %19 {offsets = [0, 48], sizes = [16, 8], strides = [1, 1]} : vector<16x64xf32> to vector<16x8xf32>
    %45 = vector.shape_cast %44 : vector<16x8xf32> to vector<2x1x8x8xf32>
    %46 = vector.extract_strided_slice %19 {offsets = [0, 56], sizes = [16, 8], strides = [1, 1]} : vector<16x64xf32> to vector<16x8xf32>
    %47 = vector.shape_cast %46 : vector<16x8xf32> to vector<2x1x8x8xf32>
    %48 = tpu.concatenate %41, %43, %45, %47 in 1 : vector<2x1x8x8xf32>, vector<2x1x8x8xf32>, vector<2x1x8x8xf32>, vector<2x1x8x8xf32> -> vector<2x4x8x8xf32>
    %49 = vector.shape_cast %48 : vector<2x4x8x8xf32> to vector<8x8x8xf32>
    "tpu.trace_start"() <{level = 10 : i32, message = "bqd,bkd->bqk"}> : () -> ()
    %cst_15 = arith.constant dense<0.000000e+00> : vector<8x8x8xf32>
    %50 = tpu.matmul %29, %39, %cst_15 {dimension_numbers = #tpu.dot_dimension_numbers<[2], [2], [1], [1], [0, 0, 0, 1, 1, 1], [0], [0]>} : vector<8x8x8xf32>, vector<8x8x8xf32>, vector<8x8x8xf32> -> vector<8x8x8xf32>
    "tpu.trace_stop"() : () -> ()
    %cst_16 = arith.constant dense<0xFF800000> : vector<8x8xf32>
    %51 = vector.multi_reduction <maximumf>, %50, %cst_16 [2] : vector<8x8x8xf32> to vector<8x8xf32>
    %52 = vector.shape_cast %51 : vector<8x8xf32> to vector<8x8x1xf32>
    %53 = vector.broadcast %52 : vector<8x8x1xf32> to vector<8x8x8xf32>
    %54 = arith.subf %50, %53 : vector<8x8x8xf32>
    %55 = math.exp %54 : vector<8x8x8xf32>
    %cst_17 = arith.constant dense<0.000000e+00> : vector<8x8xf32>
    %56 = vector.multi_reduction <add>, %55, %cst_17 [2] : vector<8x8x8xf32> to vector<8x8xf32>
    %57 = vector.shape_cast %56 : vector<8x8xf32> to vector<8x8x1xf32>
    %58 = tpu.reciprocal %57 {approx = true} : vector<8x8x1xf32> -> vector<8x8x1xf32>
    "tpu.trace_start"() <{level = 10 : i32, message = "bqk,bkd->bqd"}> : () -> ()
    %cst_18 = arith.constant dense<0.000000e+00> : vector<8x8x8xf32>
    %59 = tpu.matmul %55, %49, %cst_18 {dimension_numbers = #tpu.dot_dimension_numbers<[2], [1], [1], [2], [0, 0, 0, 1, 1, 2], [0], [0]>} : vector<8x8x8xf32>, vector<8x8x8xf32>, vector<8x8x8xf32> -> vector<8x8x8xf32>
    "tpu.trace_stop"() : () -> ()
    %60 = vector.broadcast %58 : vector<8x8x1xf32> to vector<8x8x8xf32>
    %61 = arith.mulf %59, %60 : vector<8x8x8xf32>
    %62 = vector.shape_cast %61 : vector<8x8x8xf32> to vector<2x4x8x8xf32>
    %63 = vector.extract_strided_slice %62 {offsets = [0, 0, 0, 0], sizes = [2, 1, 8, 8], strides = [1, 1, 1, 1]} : vector<2x4x8x8xf32> to vector<2x1x8x8xf32>
    %64 = vector.shape_cast %63 : vector<2x1x8x8xf32> to vector<2x8x8xf32>
    %65 = vector.extract_strided_slice %62 {offsets = [0, 1, 0, 0], sizes = [2, 1, 8, 8], strides = [1, 1, 1, 1]} : vector<2x4x8x8xf32> to vector<2x1x8x8xf32>
    %66 = vector.shape_cast %65 : vector<2x1x8x8xf32> to vector<2x8x8xf32>
    %67 = vector.extract_strided_slice %62 {offsets = [0, 2, 0, 0], sizes = [2, 1, 8, 8], strides = [1, 1, 1, 1]} : vector<2x4x8x8xf32> to vector<2x1x8x8xf32>
    %68 = vector.shape_cast %67 : vector<2x1x8x8xf32> to vector<2x8x8xf32>
    %69 = vector.extract_strided_slice %62 {offsets = [0, 3, 0, 0], sizes = [2, 1, 8, 8], strides = [1, 1, 1, 1]} : vector<2x4x8x8xf32> to vector<2x1x8x8xf32>
    %70 = vector.shape_cast %69 : vector<2x1x8x8xf32> to vector<2x8x8xf32>
    %71 = tpu.concatenate %64, %66, %68, %70 in 2 : vector<2x8x8xf32>, vector<2x8x8xf32>, vector<2x8x8xf32>, vector<2x8x8xf32> -> vector<2x8x32xf32>
    %72 = vector.shape_cast %71 : vector<2x8x32xf32> to vector<16x32xf32>
    %c0_19 = arith.constant 0 : index
    %c0_20 = arith.constant 0 : index
    %73 = vector.load %arg4[%c0_19, %c0_20] : memref<32x32xf32, #tpu.memory_space<vmem>>, vector<32x32xf32>
    %cst_21 = arith.constant dense<0.000000e+00> : vector<16x32xf32>
    %74 = tpu.matmul %72, %73, %cst_21 {dimension_numbers = #tpu.dot_dimension_numbers<[1], [0], [0], [1], [0, 0, 1, 1], [], []>} : vector<16x32xf32>, vector<32x32xf32>, vector<16x32xf32> -> vector<16x32xf32>
    %75 = vector.extract_strided_slice %7 {offsets = [0, 96], sizes = [1, 32], strides = [1, 1]} : vector<1x128xf32> to vector<1x32xf32>
    %76 = vector.broadcast %75 : vector<1x32xf32> to vector<16x32xf32>
    %77 = arith.addf %74, %76 : vector<16x32xf32>
    %78 = arith.addf %77, %1 : vector<16x32xf32>
    %79 = vector.extract_strided_slice %4 {offsets = [0, 0], sizes = [1, 32], strides = [1, 1]} : vector<6x32xf32> to vector<1x32xf32>
    %80 = vector.extract_strided_slice %4 {offsets = [1, 0], sizes = [1, 32], strides = [1, 1]} : vector<6x32xf32> to vector<1x32xf32>
    %cst_22 = arith.constant dense<0.000000e+00> : vector<16xf32>
    %81 = vector.multi_reduction <add>, %78, %cst_22 [1] : vector<16x32xf32> to vector<16xf32>
    %82 = vector.shape_cast %81 : vector<16xf32> to vector<16x1xf32>
    %cst_23 = arith.constant 3.200000e+01 : f32
    %83 = vector.broadcast %cst_23 : f32 to vector<16x1xf32>
    %84 = arith.divf %82, %83 : vector<16x1xf32>
    %85 = vector.broadcast %84 : vector<16x1xf32> to vector<16x32xf32>
    %86 = arith.subf %78, %85 : vector<16x32xf32>
    %87 = arith.mulf %86, %86 : vector<16x32xf32>
    %cst_24 = arith.constant dense<0.000000e+00> : vector<16xf32>
    %88 = vector.multi_reduction <add>, %87, %cst_24 [1] : vector<16x32xf32> to vector<16xf32>
    %89 = vector.shape_cast %88 : vector<16xf32> to vector<16x1xf32>
    %cst_25 = arith.constant 0.0322580636 : f32
    %90 = vector.broadcast %cst_25 : f32 to vector<16x1xf32>
    %91 = arith.mulf %89, %90 : vector<16x1xf32>
    %cst_26 = arith.constant 9.99999996E-13 : f32
    %92 = vector.broadcast %cst_26 : f32 to vector<16x1xf32>
    %93 = arith.addf %91, %92 : vector<16x1xf32>
    %94 = math.rsqrt %93 : vector<16x1xf32>
    %95 = vector.broadcast %94 : vector<16x1xf32> to vector<16x32xf32>
    %96 = arith.mulf %86, %95 : vector<16x32xf32>
    %97 = vector.broadcast %79 : vector<1x32xf32> to vector<16x32xf32>
    %98 = arith.mulf %97, %96 : vector<16x32xf32>
    %99 = vector.broadcast %80 : vector<1x32xf32> to vector<16x32xf32>
    %100 = arith.addf %98, %99 : vector<16x32xf32>
    %cst_27 = arith.constant 8.000000e+00 : f32
    %101 = math.sqrt %cst_27 : f32
    %cst_28 = arith.constant 1.000000e+00 : f32
    %102 = arith.divf %cst_28, %101 : f32
    %c0_29 = arith.constant 0 : index
    %c0_30 = arith.constant 0 : index
    %103 = vector.load %arg8[%c0_29, %c0_30] : memref<1x128xf32, #tpu.memory_space<vmem>>, vector<1x128xf32>
    %c0_31 = arith.constant 0 : index
    %c0_32 = arith.constant 0 : index
    %104 = vector.load %arg6[%c0_31, %c0_32] : memref<32x96xf32, #tpu.memory_space<vmem>>, vector<32x32xf32>
    %cst_33 = arith.constant dense<0.000000e+00> : vector<16x32xf32>
    %105 = tpu.matmul %100, %104, %cst_33 {dimension_numbers = #tpu.dot_dimension_numbers<[1], [0], [0], [1], [0, 0, 1, 1], [], []>} : vector<16x32xf32>, vector<32x32xf32>, vector<16x32xf32> -> vector<16x32xf32>
    %106 = vector.extract_strided_slice %103 {offsets = [0, 0], sizes = [1, 32], strides = [1, 1]} : vector<1x128xf32> to vector<1x32xf32>
    %107 = vector.broadcast %106 : vector<1x32xf32> to vector<16x32xf32>
    %108 = arith.addf %105, %107 : vector<16x32xf32>
    %109 = vector.broadcast %102 : f32 to vector<16x32xf32>
    %110 = arith.mulf %108, %109 : vector<16x32xf32>
    %c0_34 = arith.constant 0 : index
    %c32_35 = arith.constant 32 : index
    %111 = vector.load %arg6[%c0_34, %c32_35] : memref<32x96xf32, #tpu.memory_space<vmem>>, vector<32x64xf32>
    %cst_36 = arith.constant dense<0.000000e+00> : vector<20x64xf32>
    %112 = tpu.matmul %3, %111, %cst_36 {dimension_numbers = #tpu.dot_dimension_numbers<[1], [0], [0], [1], [0, 0, 1, 1], [], []>} : vector<20x32xf32>, vector<32x64xf32>, vector<20x64xf32> -> vector<20x64xf32>
    %113 = vector.extract_strided_slice %103 {offsets = [0, 32], sizes = [1, 64], strides = [1, 1]} : vector<1x128xf32> to vector<1x64xf32>
    %114 = vector.broadcast %113 : vector<1x64xf32> to vector<20x64xf32>
    %115 = arith.addf %112, %114 : vector<20x64xf32>
    %116 = vector.extract_strided_slice %110 {offsets = [0, 0], sizes = [16, 8], strides = [1, 1]} : vector<16x32xf32> to vector<16x8xf32>
    %117 = vector.shape_cast %116 : vector<16x8xf32> to vector<2x1x8x8xf32>
    %118 = vector.extract_strided_slice %110 {offsets = [0, 8], sizes = [16, 8], strides = [1, 1]} : vector<16x32xf32> to vector<16x8xf32>
    %119 = vector.shape_cast %118 : vector<16x8xf32> to vector<2x1x8x8xf32>
    %120 = vector.extract_strided_slice %110 {offsets = [0, 16], sizes = [16, 8], strides = [1, 1]} : vector<16x32xf32> to vector<16x8xf32>
    %121 = vector.shape_cast %120 : vector<16x8xf32> to vector<2x1x8x8xf32>
    %122 = vector.extract_strided_slice %110 {offsets = [0, 24], sizes = [16, 8], strides = [1, 1]} : vector<16x32xf32> to vector<16x8xf32>
    %123 = vector.shape_cast %122 : vector<16x8xf32> to vector<2x1x8x8xf32>
    %124 = tpu.concatenate %117, %119, %121, %123 in 1 : vector<2x1x8x8xf32>, vector<2x1x8x8xf32>, vector<2x1x8x8xf32>, vector<2x1x8x8xf32> -> vector<2x4x8x8xf32>
    %125 = vector.shape_cast %124 : vector<2x4x8x8xf32> to vector<8x8x8xf32>
    %126 = vector.extract_strided_slice %115 {offsets = [0, 0], sizes = [20, 8], strides = [1, 1]} : vector<20x64xf32> to vector<20x8xf32>
    %127 = vector.shape_cast %126 : vector<20x8xf32> to vector<2x1x10x8xf32>
    %128 = vector.extract_strided_slice %115 {offsets = [0, 8], sizes = [20, 8], strides = [1, 1]} : vector<20x64xf32> to vector<20x8xf32>
    %129 = vector.shape_cast %128 : vector<20x8xf32> to vector<2x1x10x8xf32>
    %130 = vector.extract_strided_slice %115 {offsets = [0, 16], sizes = [20, 8], strides = [1, 1]} : vector<20x64xf32> to vector<20x8xf32>
    %131 = vector.shape_cast %130 : vector<20x8xf32> to vector<2x1x10x8xf32>
    %132 = vector.extract_strided_slice %115 {offsets = [0, 24], sizes = [20, 8], strides = [1, 1]} : vector<20x64xf32> to vector<20x8xf32>
    %133 = vector.shape_cast %132 : vector<20x8xf32> to vector<2x1x10x8xf32>
    %134 = tpu.concatenate %127, %129, %131, %133 in 1 : vector<2x1x10x8xf32>, vector<2x1x10x8xf32>, vector<2x1x10x8xf32>, vector<2x1x10x8xf32> -> vector<2x4x10x8xf32>
    %135 = vector.shape_cast %134 : vector<2x4x10x8xf32> to vector<8x10x8xf32>
    %136 = vector.extract_strided_slice %115 {offsets = [0, 32], sizes = [20, 8], strides = [1, 1]} : vector<20x64xf32> to vector<20x8xf32>
    %137 = vector.shape_cast %136 : vector<20x8xf32> to vector<2x1x10x8xf32>
    %138 = vector.extract_strided_slice %115 {offsets = [0, 40], sizes = [20, 8], strides = [1, 1]} : vector<20x64xf32> to vector<20x8xf32>
    %139 = vector.shape_cast %138 : vector<20x8xf32> to vector<2x1x10x8xf32>
    %140 = vector.extract_strided_slice %115 {offsets = [0, 48], sizes = [20, 8], strides = [1, 1]} : vector<20x64xf32> to vector<20x8xf32>
    %141 = vector.shape_cast %140 : vector<20x8xf32> to vector<2x1x10x8xf32>
    %142 = vector.extract_strided_slice %115 {offsets = [0, 56], sizes = [20, 8], strides = [1, 1]} : vector<20x64xf32> to vector<20x8xf32>
    %143 = vector.shape_cast %142 : vector<20x8xf32> to vector<2x1x10x8xf32>
    %144 = tpu.concatenate %137, %139, %141, %143 in 1 : vector<2x1x10x8xf32>, vector<2x1x10x8xf32>, vector<2x1x10x8xf32>, vector<2x1x10x8xf32> -> vector<2x4x10x8xf32>
    %145 = vector.shape_cast %144 : vector<2x4x10x8xf32> to vector<8x10x8xf32>
    "tpu.trace_start"() <{level = 10 : i32, message = "bqd,bkd->bqk"}> : () -> ()
    %cst_37 = arith.constant dense<0.000000e+00> : vector<8x8x10xf32>
    %146 = tpu.matmul %125, %135, %cst_37 {dimension_numbers = #tpu.dot_dimension_numbers<[2], [2], [1], [1], [0, 0, 0, 1, 1, 1], [0], [0]>} : vector<8x8x8xf32>, vector<8x10x8xf32>, vector<8x8x10xf32> -> vector<8x8x10xf32>
    "tpu.trace_stop"() : () -> ()
    %cst_38 = arith.constant dense<0xFF800000> : vector<8x8xf32>
    %147 = vector.multi_reduction <maximumf>, %146, %cst_38 [2] : vector<8x8x10xf32> to vector<8x8xf32>
    %148 = vector.shape_cast %147 : vector<8x8xf32> to vector<8x8x1xf32>
    %149 = vector.broadcast %148 : vector<8x8x1xf32> to vector<8x8x10xf32>
    %150 = arith.subf %146, %149 : vector<8x8x10xf32>
    %151 = math.exp %150 : vector<8x8x10xf32>
    %cst_39 = arith.constant dense<0.000000e+00> : vector<8x8xf32>
    %152 = vector.multi_reduction <add>, %151, %cst_39 [2] : vector<8x8x10xf32> to vector<8x8xf32>
    %153 = vector.shape_cast %152 : vector<8x8xf32> to vector<8x8x1xf32>
    %154 = tpu.reciprocal %153 {approx = true} : vector<8x8x1xf32> -> vector<8x8x1xf32>
    "tpu.trace_start"() <{level = 10 : i32, message = "bqk,bkd->bqd"}> : () -> ()
    %cst_40 = arith.constant dense<0.000000e+00> : vector<8x8x8xf32>
    %155 = tpu.matmul %151, %145, %cst_40 {dimension_numbers = #tpu.dot_dimension_numbers<[2], [1], [1], [2], [0, 0, 0, 1, 1, 2], [0], [0]>} : vector<8x8x10xf32>, vector<8x10x8xf32>, vector<8x8x8xf32> -> vector<8x8x8xf32>
    "tpu.trace_stop"() : () -> ()
    %156 = vector.broadcast %154 : vector<8x8x1xf32> to vector<8x8x8xf32>
    %157 = arith.mulf %155, %156 : vector<8x8x8xf32>
    %158 = vector.shape_cast %157 : vector<8x8x8xf32> to vector<2x4x8x8xf32>
    %159 = vector.extract_strided_slice %158 {offsets = [0, 0, 0, 0], sizes = [2, 1, 8, 8], strides = [1, 1, 1, 1]} : vector<2x4x8x8xf32> to vector<2x1x8x8xf32>
    %160 = vector.shape_cast %159 : vector<2x1x8x8xf32> to vector<2x8x8xf32>
    %161 = vector.extract_strided_slice %158 {offsets = [0, 1, 0, 0], sizes = [2, 1, 8, 8], strides = [1, 1, 1, 1]} : vector<2x4x8x8xf32> to vector<2x1x8x8xf32>
    %162 = vector.shape_cast %161 : vector<2x1x8x8xf32> to vector<2x8x8xf32>
    %163 = vector.extract_strided_slice %158 {offsets = [0, 2, 0, 0], sizes = [2, 1, 8, 8], strides = [1, 1, 1, 1]} : vector<2x4x8x8xf32> to vector<2x1x8x8xf32>
    %164 = vector.shape_cast %163 : vector<2x1x8x8xf32> to vector<2x8x8xf32>
    %165 = vector.extract_strided_slice %158 {offsets = [0, 3, 0, 0], sizes = [2, 1, 8, 8], strides = [1, 1, 1, 1]} : vector<2x4x8x8xf32> to vector<2x1x8x8xf32>
    %166 = vector.shape_cast %165 : vector<2x1x8x8xf32> to vector<2x8x8xf32>
    %167 = tpu.concatenate %160, %162, %164, %166 in 2 : vector<2x8x8xf32>, vector<2x8x8xf32>, vector<2x8x8xf32>, vector<2x8x8xf32> -> vector<2x8x32xf32>
    %168 = vector.shape_cast %167 : vector<2x8x32xf32> to vector<16x32xf32>
    %c0_41 = arith.constant 0 : index
    %c0_42 = arith.constant 0 : index
    %169 = vector.load %arg7[%c0_41, %c0_42] : memref<32x32xf32, #tpu.memory_space<vmem>>, vector<32x32xf32>
    %cst_43 = arith.constant dense<0.000000e+00> : vector<16x32xf32>
    %170 = tpu.matmul %168, %169, %cst_43 {dimension_numbers = #tpu.dot_dimension_numbers<[1], [0], [0], [1], [0, 0, 1, 1], [], []>} : vector<16x32xf32>, vector<32x32xf32>, vector<16x32xf32> -> vector<16x32xf32>
    %171 = vector.extract_strided_slice %103 {offsets = [0, 96], sizes = [1, 32], strides = [1, 1]} : vector<1x128xf32> to vector<1x32xf32>
    %172 = vector.broadcast %171 : vector<1x32xf32> to vector<16x32xf32>
    %173 = arith.addf %170, %172 : vector<16x32xf32>
    %174 = arith.addf %173, %100 : vector<16x32xf32>
    %175 = vector.extract_strided_slice %4 {offsets = [2, 0], sizes = [1, 32], strides = [1, 1]} : vector<6x32xf32> to vector<1x32xf32>
    %176 = vector.extract_strided_slice %4 {offsets = [3, 0], sizes = [1, 32], strides = [1, 1]} : vector<6x32xf32> to vector<1x32xf32>
    %cst_44 = arith.constant dense<0.000000e+00> : vector<16xf32>
    %177 = vector.multi_reduction <add>, %174, %cst_44 [1] : vector<16x32xf32> to vector<16xf32>
    %178 = vector.shape_cast %177 : vector<16xf32> to vector<16x1xf32>
    %cst_45 = arith.constant 3.200000e+01 : f32
    %179 = vector.broadcast %cst_45 : f32 to vector<16x1xf32>
    %180 = arith.divf %178, %179 : vector<16x1xf32>
    %181 = vector.broadcast %180 : vector<16x1xf32> to vector<16x32xf32>
    %182 = arith.subf %174, %181 : vector<16x32xf32>
    %183 = arith.mulf %182, %182 : vector<16x32xf32>
    %cst_46 = arith.constant dense<0.000000e+00> : vector<16xf32>
    %184 = vector.multi_reduction <add>, %183, %cst_46 [1] : vector<16x32xf32> to vector<16xf32>
    %185 = vector.shape_cast %184 : vector<16xf32> to vector<16x1xf32>
    %cst_47 = arith.constant 0.0322580636 : f32
    %186 = vector.broadcast %cst_47 : f32 to vector<16x1xf32>
    %187 = arith.mulf %185, %186 : vector<16x1xf32>
    %cst_48 = arith.constant 9.99999996E-13 : f32
    %188 = vector.broadcast %cst_48 : f32 to vector<16x1xf32>
    %189 = arith.addf %187, %188 : vector<16x1xf32>
    %190 = math.rsqrt %189 : vector<16x1xf32>
    %191 = vector.broadcast %190 : vector<16x1xf32> to vector<16x32xf32>
    %192 = arith.mulf %182, %191 : vector<16x32xf32>
    %193 = vector.broadcast %175 : vector<1x32xf32> to vector<16x32xf32>
    %194 = arith.mulf %193, %192 : vector<16x32xf32>
    %195 = vector.broadcast %176 : vector<1x32xf32> to vector<16x32xf32>
    %196 = arith.addf %194, %195 : vector<16x32xf32>
    %c0_49 = arith.constant 0 : index
    %c0_50 = arith.constant 0 : index
    %197 = vector.load %arg9[%c0_49, %c0_50] : memref<32x64xf32, #tpu.memory_space<vmem>>, vector<32x64xf32>
    %cst_51 = arith.constant dense<0.000000e+00> : vector<16x64xf32>
    %198 = tpu.matmul %196, %197, %cst_51 {dimension_numbers = #tpu.dot_dimension_numbers<[1], [0], [0], [1], [0, 0, 1, 1], [], []>} : vector<16x32xf32>, vector<32x64xf32>, vector<16x64xf32> -> vector<16x64xf32>
    %c0_52 = arith.constant 0 : index
    %c0_53 = arith.constant 0 : index
    %199 = vector.load %arg11[%c0_52, %c0_53] : memref<1x96xf32, #tpu.memory_space<vmem>>, vector<1x64xf32>
    %200 = vector.broadcast %199 : vector<1x64xf32> to vector<16x64xf32>
    %201 = arith.addf %198, %200 : vector<16x64xf32>
    %cst_54 = arith.constant 0.000000e+00 : f32
    %202 = vector.broadcast %cst_54 : f32 to vector<16x64xf32>
    %203 = arith.maximumf %201, %202 : vector<16x64xf32>
    %c0_55 = arith.constant 0 : index
    %c0_56 = arith.constant 0 : index
    %204 = vector.load %arg10[%c0_55, %c0_56] : memref<64x32xf32, #tpu.memory_space<vmem>>, vector<64x32xf32>
    %cst_57 = arith.constant dense<0.000000e+00> : vector<16x32xf32>
    %205 = tpu.matmul %203, %204, %cst_57 {dimension_numbers = #tpu.dot_dimension_numbers<[1], [0], [0], [1], [0, 0, 1, 1], [], []>} : vector<16x64xf32>, vector<64x32xf32>, vector<16x32xf32> -> vector<16x32xf32>
    %c0_58 = arith.constant 0 : index
    %c64 = arith.constant 64 : index
    %206 = vector.load %arg11[%c0_58, %c64] : memref<1x96xf32, #tpu.memory_space<vmem>>, vector<1x32xf32>
    %207 = vector.broadcast %206 : vector<1x32xf32> to vector<16x32xf32>
    %208 = arith.addf %205, %207 : vector<16x32xf32>
    %209 = arith.addf %208, %196 : vector<16x32xf32>
    %210 = vector.extract_strided_slice %4 {offsets = [4, 0], sizes = [1, 32], strides = [1, 1]} : vector<6x32xf32> to vector<1x32xf32>
    %211 = vector.extract_strided_slice %4 {offsets = [5, 0], sizes = [1, 32], strides = [1, 1]} : vector<6x32xf32> to vector<1x32xf32>
    %cst_59 = arith.constant dense<0.000000e+00> : vector<16xf32>
    %212 = vector.multi_reduction <add>, %209, %cst_59 [1] : vector<16x32xf32> to vector<16xf32>
    %213 = vector.shape_cast %212 : vector<16xf32> to vector<16x1xf32>
    %cst_60 = arith.constant 3.200000e+01 : f32
    %214 = vector.broadcast %cst_60 : f32 to vector<16x1xf32>
    %215 = arith.divf %213, %214 : vector<16x1xf32>
    %216 = vector.broadcast %215 : vector<16x1xf32> to vector<16x32xf32>
    %217 = arith.subf %209, %216 : vector<16x32xf32>
    %218 = arith.mulf %217, %217 : vector<16x32xf32>
    %cst_61 = arith.constant dense<0.000000e+00> : vector<16xf32>
    %219 = vector.multi_reduction <add>, %218, %cst_61 [1] : vector<16x32xf32> to vector<16xf32>
    %220 = vector.shape_cast %219 : vector<16xf32> to vector<16x1xf32>
    %cst_62 = arith.constant 0.0322580636 : f32
    %221 = vector.broadcast %cst_62 : f32 to vector<16x1xf32>
    %222 = arith.mulf %220, %221 : vector<16x1xf32>
    %cst_63 = arith.constant 9.99999996E-13 : f32
    %223 = vector.broadcast %cst_63 : f32 to vector<16x1xf32>
    %224 = arith.addf %222, %223 : vector<16x1xf32>
    %225 = math.rsqrt %224 : vector<16x1xf32>
    %226 = vector.broadcast %225 : vector<16x1xf32> to vector<16x32xf32>
    %227 = arith.mulf %217, %226 : vector<16x32xf32>
    %228 = vector.broadcast %210 : vector<1x32xf32> to vector<16x32xf32>
    %229 = arith.mulf %228, %227 : vector<16x32xf32>
    %230 = vector.broadcast %211 : vector<1x32xf32> to vector<16x32xf32>
    %231 = arith.addf %229, %230 : vector<16x32xf32>
    %232 = vector.shape_cast %231 : vector<16x32xf32> to vector<2x8x32xf32>
    %c0_64 = arith.constant 0 : index
    %c0_65 = arith.constant 0 : index
    %c0_66 = arith.constant 0 : index
    %233 = vector.load %arg13[%c0_64, %c0_65, %c0_66] : memref<2x8x32xf32, #tpu.memory_space<vmem>>, vector<2x8x32xf32>
    tpu.vector_store %arg13[%c0_64, %c0_65, %c0_66], %232 {strides = array<i32>} : memref<2x8x32xf32, #tpu.memory_space<vmem>>, vector<2x8x32xf32>,
    return
  }
  func.func @transform_0(%arg0: i32) -> (i32, i32, i32) {
    %c0_i32 = arith.constant 0 : i32
    %c0_i32_0 = arith.constant 0 : i32
    %c0_i32_1 = arith.constant 0 : i32
    return %arg0, %c0_i32, %c0_i32_0 : i32, i32, i32
  }
  func.func @transform_1(%arg0: i32) -> (i32, i32, i32) {
    %c0_i32 = arith.constant 0 : i32
    %c0_i32_0 = arith.constant 0 : i32
    %c0_i32_1 = arith.constant 0 : i32
    return %arg0, %c0_i32, %c0_i32_0 : i32, i32, i32
  }
  func.func @transform_2(%arg0: i32) -> (i32, i32) {
    %c0_i32 = arith.constant 0 : i32
    %c0_i32_0 = arith.constant 0 : i32
    %c0_i32_1 = arith.constant 0 : i32
    return %c0_i32, %c0_i32_0 : i32, i32
  }
  func.func @transform_3(%arg0: i32) -> (i32, i32) {
    %c0_i32 = arith.constant 0 : i32
    %c0_i32_0 = arith.constant 0 : i32
    %c0_i32_1 = arith.constant 0 : i32
    return %c0_i32, %c0_i32_0 : i32, i32
  }
  func.func @transform_4(%arg0: i32) -> (i32, i32) {
    %c0_i32 = arith.constant 0 : i32
    %c0_i32_0 = arith.constant 0 : i32
    %c0_i32_1 = arith.constant 0 : i32
    return %c0_i32, %c0_i32_0 : i32, i32
  }
  func.func @transform_5(%arg0: i32) -> (i32, i32) {
    %c0_i32 = arith.constant 0 : i32
    %c0_i32_0 = arith.constant 0 : i32
    %c0_i32_1 = arith.constant 0 : i32
    return %c0_i32, %c0_i32_0 : i32, i32
  }
  func.func @transform_6(%arg0: i32) -> (i32, i32) {
    %c0_i32 = arith.constant 0 : i32
    %c0_i32_0 = arith.constant 0 : i32
    %c0_i32_1 = arith.constant 0 : i32
    return %c0_i32, %c0_i32_0 : i32, i32
  }
  func.func @transform_7(%arg0: i32) -> (i32, i32) {
    %c0_i32 = arith.constant 0 : i32
    %c0_i32_0 = arith.constant 0 : i32
    %c0_i32_1 = arith.constant 0 : i32
    return %c0_i32, %c0_i32_0 : i32, i32
  }
  func.func @transform_8(%arg0: i32) -> (i32, i32) {
    %c0_i32 = arith.constant 0 : i32
    %c0_i32_0 = arith.constant 0 : i32
    %c0_i32_1 = arith.constant 0 : i32
    return %c0_i32, %c0_i32_0 : i32, i32
  }
  func.func @transform_9(%arg0: i32) -> (i32, i32) {
    %c0_i32 = arith.constant 0 : i32
    %c0_i32_0 = arith.constant 0 : i32
    %c0_i32_1 = arith.constant 0 : i32
    return %c0_i32, %c0_i32_0 : i32, i32
  }
  func.func @transform_10(%arg0: i32) -> (i32, i32) {
    %c0_i32 = arith.constant 0 : i32
    %c0_i32_0 = arith.constant 0 : i32
    %c0_i32_1 = arith.constant 0 : i32
    return %c0_i32, %c0_i32_0 : i32, i32
  }
  func.func @transform_11(%arg0: i32) -> (i32, i32) {
    %c0_i32 = arith.constant 0 : i32
    %c0_i32_0 = arith.constant 0 : i32
    %c0_i32_1 = arith.constant 0 : i32
    return %c0_i32, %c0_i32_0 : i32, i32
  }
  func.func @transform_12(%arg0: i32) -> (i32, i32, i32) {
    %c0_i32 = arith.constant 0 : i32
    %c0_i32_0 = arith.constant 0 : i32
    %c0_i32_1 = arith.constant 0 : i32
    return %arg0, %c0_i32, %c0_i32_0 : i32, i32, i32
  }
}

</mosaic_0001>

<llo_original>
// kernel: tpu_custom_call.1
$region0: #{tpu_custom_call.1}
  #allocation0 [shape = 'u32[]', space=smem, size = 0x4, offset = 0x4, fixed_abs, tag = 'smem constant byte address 0x4 - core index']
  #allocation1 [shape = 'u32[144,128]{1,0:T(1,128)}', space=vmem, size = 0x12000, scoped, tag = 'internal scratch']
  %s0 = inlined_call_operand.hbm [shape: f32[2,8,32], index: 0, kind: input, shape index: {}]
  %s1 = inlined_call_operand.hbm [shape: f32[2,10,32], index: 1, kind: input, shape index: {}]
  %s2 = inlined_call_operand.hbm [shape: f32[32,96], index: 2, kind: input, shape index: {}]
  %s3 = inlined_call_operand.hbm [shape: f32[32,32], index: 3, kind: input, shape index: {}]
  %s4 = inlined_call_operand.hbm [shape: f32[1,128], index: 4, kind: input, shape index: {}]
  %s5 = inlined_call_operand.hbm [shape: f32[32,96], index: 5, kind: input, shape index: {}]
  %s6 = inlined_call_operand.hbm [shape: f32[32,32], index: 6, kind: input, shape index: {}]
  %s7 = inlined_call_operand.hbm [shape: f32[1,128], index: 7, kind: input, shape index: {}]
  %s8 = inlined_call_operand.hbm [shape: f32[32,64], index: 8, kind: input, shape index: {}]
  %s9 = inlined_call_operand.hbm [shape: f32[64,32], index: 9, kind: input, shape index: {}]
  %s10 = inlined_call_operand.hbm [shape: f32[1,96], index: 10, kind: input, shape index: {}]
  %s11 = inlined_call_operand.hbm [shape: f32[6,32], index: 11, kind: input, shape index: {}]
  %s12 = inlined_call_operand.hbm [shape: f32[2,8,32], index: 12, kind: output, shape index: {}]
  %s13 = sld [smem:[#allocation0]]
  $region106: #{tpu_custom_call.1} parent=0
    _
  %s15 = ssub.s32 1, %s13
  %s16 = scalar_select 0, %s15, %s13
  $region1: #{tpu_custom_call.1} parent=0
    #allocation2 [shape = 'u8[8192]{0}', space=vmem, size = 0x2000, scoped, tag = 'input window, operand 0, single buffered']
    #allocation3 [shape = 's32[1]{0}', space=sflag, size = 0x4, scoped, tag = 'scoped memory for tpu_custom_call.1']
    #allocation4 [shape = 's32[1]{0}', space=sflag, size = 0x4, scoped, tag = 'scoped memory for tpu_custom_call.1']
    #allocation5 [shape = 'u8[16384]{0}', space=vmem, size = 0x4000, scoped, tag = 'input window, operand 1, single buffered']
    #allocation6 [shape = 's32[1]{0}', space=sflag, size = 0x4, scoped, tag = 'scoped memory for tpu_custom_call.1']
    #allocation7 [shape = 'u8[16384]{0}', space=vmem, size = 0x4000, scoped, tag = 'input window, operand 2, single buffered']
    #allocation8 [shape = 'u8[16384]{0}', space=vmem, size = 0x4000, scoped, tag = 'input window, operand 3, single buffered']
    #allocation9 [shape = 's32[1]{0}', space=sflag, size = 0x4, scoped, tag = 'scoped memory for tpu_custom_call.1']
    #allocation10 [shape = 'u8[512]{0}', space=vmem, size = 0x400, scoped, tag = 'input window, operand 4, single buffered']
    #allocation11 [shape = 'u8[16384]{0}', space=vmem, size = 0x4000, scoped, tag = 'input window, operand 5, single buffered']
    #allocation12 [shape = 's32[1]{0}', space=sflag, size = 0x4, scoped, tag = 'scoped memory for tpu_custom_call.1']
    #allocation13 [shape = 'u8[16384]{0}', space=vmem, size = 0x4000, scoped, tag = 'input window, operand 6, single buffered']
    #allocation14 [shape = 'u8[512]{0}', space=vmem, size = 0x400, scoped, tag = 'input window, operand 7, single buffered']
    #allocation15 [shape = 's32[1]{0}', space=sflag, size = 0x4, scoped, tag = 'scoped memory for tpu_custom_call.1']
    #allocation16 [shape = 'u8[16384]{0}', space=vmem, size = 0x4000, scoped, tag = 'input window, operand 8, single buffered']
    #allocation17 [shape = 'u8[32768]{0}', space=vmem, size = 0x8000, scoped, tag = 'input window, operand 9, single buffered']
    #allocation18 [shape = 's32[1]{0}', space=sflag, size = 0x4, scoped, tag = 'scoped memory for tpu_custom_call.1']
    #allocation19 [shape = 'u8[512]{0}', space=vmem, size = 0x400, scoped, tag = 'input window, operand 10, single buffered']
    #allocation20 [shape = 'u8[4096]{0}', space=vmem, size = 0x1000, scoped, tag = 'input window, operand 11, single buffered']
    #allocation21 [shape = 's32[1]{0}', space=sflag, size = 0x4, scoped, tag = 'scoped memory for tpu_custom_call.1']
    #allocation22 [shape = 'u8[8192]{0}', space=vmem, size = 0x2000, scoped, tag = 'output window, operand 0, single buffered']
    %17 = vsyncpa [#allocation3], 0
    %18 = vsyncpa [#allocation6], 0
    %19 = vsyncpa [#allocation9], 0
    %20 = vsyncpa [#allocation12], 0
    %21 = vsyncpa [#allocation15], 0
    %22 = vsyncpa [#allocation18], 0
    %23 = vsyncpa [#allocation21], 0
    %24 = vsyncpa [#allocation4], 0
    // Predicated region
    $region2: #{tpu_custom_call.1} parent=1 // pred_check
      _
    $region3: #{tpu_custom_call.1} parent=1 // pred_check_branch
      %26 = sbr.rel (0) target = $region5
    $region4: #{tpu_custom_call.1} parent=1 // pred_region
      %s28 = ssub.s32 256, 256
      %29 = vsyncadd [#allocation3], %s28
      %s30 = sshll.u32 [#allocation2], 4
      %s31 = int_to_ptr.vmem [resolvable:$true] %s30
      %36 = dma.hbm_to_vmem [thread:$0]  %s0, 256, %s31, [#allocation3], 128, 128, 8
    $region5: #{tpu_custom_call.1} parent=1 // pred_fallthru
      _
    // Predicated region
    $region6: #{tpu_custom_call.1} parent=1 // pred_check
      _
    $region7: #{tpu_custom_call.1} parent=1 // pred_check_branch
      %38 = sbr.rel (0) target = $region9
    $region8: #{tpu_custom_call.1} parent=1 // pred_region
      %s40 = ssub.s32 512, 512
      %41 = vsyncadd [#allocation6], %s40
      %s42 = sshll.u32 [#allocation5], 4
      %s43 = int_to_ptr.vmem [resolvable:$true] %s42
      %48 = dma.hbm_to_vmem [thread:$0]  %s1, 512, %s43, [#allocation6], 128, 128, 8
    $region9: #{tpu_custom_call.1} parent=1 // pred_fallthru
      _
    // Predicated region
    $region10: #{tpu_custom_call.1} parent=1 // pred_check
      _
    $region11: #{tpu_custom_call.1} parent=1 // pred_check_branch
      %50 = sbr.rel (0) target = $region13
    $region12: #{tpu_custom_call.1} parent=1 // pred_region
      %s52 = ssub.s32 512, 512
      %53 = vsyncadd [#allocation6], %s52
      %s54 = sshll.u32 [#allocation7], 4
      %s55 = int_to_ptr.vmem [resolvable:$true] %s54
      %60 = dma.hbm_to_vmem [thread:$0]  %s2, 512, %s55, [#allocation6], 128, 128, 8
    $region13: #{tpu_custom_call.1} parent=1 // pred_fallthru
      _
    // Predicated region
    $region14: #{tpu_custom_call.1} parent=1 // pred_check
      _
    $region15: #{tpu_custom_call.1} parent=1 // pred_check_branch
      %62 = sbr.rel (0) target = $region17
    $region16: #{tpu_custom_call.1} parent=1 // pred_region
      %s64 = ssub.s32 512, 512
      %65 = vsyncadd [#allocation9], %s64
      %s66 = sshll.u32 [#allocation8], 4
      %s67 = int_to_ptr.vmem [resolvable:$true] %s66
      %72 = dma.hbm_to_vmem [thread:$0]  %s3, 512, %s67, [#allocation9], 128, 128, 8
    $region17: #{tpu_custom_call.1} parent=1 // pred_fallthru
      _
    // Predicated region
    $region18: #{tpu_custom_call.1} parent=1 // pred_check
      _
    $region19: #{tpu_custom_call.1} parent=1 // pred_check_branch
      %74 = sbr.rel (0) target = $region21
    $region20: #{tpu_custom_call.1} parent=1 // pred_region
      %s76 = ssub.s32 16, 16
      %77 = vsyncadd [#allocation9], %s76
      %s79 = sshll.u32 [#allocation10], 4
      %s80 = int_to_ptr.vmem [resolvable:$true] %s79
      %82 = dma.hbm_to_vmem [thread:$0]  %s4, 16, %s80, [#allocation9]
    $region21: #{tpu_custom_call.1} parent=1 // pred_fallthru
      _
    // Predicated region
    $region22: #{tpu_custom_call.1} parent=1 // pred_check
      _
    $region23: #{tpu_custom_call.1} parent=1 // pred_check_branch
      %84 = sbr.rel (0) target = $region25
    $region24: #{tpu_custom_call.1} parent=1 // pred_region
      %s86 = ssub.s32 512, 512
      %87 = vsyncadd [#allocation12], %s86
      %s88 = sshll.u32 [#allocation11], 4
      %s89 = int_to_ptr.vmem [resolvable:$true] %s88
      %94 = dma.hbm_to_vmem [thread:$0]  %s5, 512, %s89, [#allocation12], 128, 128, 8
    $region25: #{tpu_custom_call.1} parent=1 // pred_fallthru
      _
    // Predicated region
    $region26: #{tpu_custom_call.1} parent=1 // pred_check
      _
    $region27: #{tpu_custom_call.1} parent=1 // pred_check_branch
      %96 = sbr.rel (0) target = $region29
    $region28: #{tpu_custom_call.1} parent=1 // pred_region
      %s98 = ssub.s32 512, 512
      %99 = vsyncadd [#allocation12], %s98
      %s100 = sshll.u32 [#allocation13], 4
      %s101 = int_to_ptr.vmem [resolvable:$true] %s100
      %106 = dma.hbm_to_vmem [thread:$0]  %s6, 512, %s101, [#allocation12], 128, 128, 8
    $region29: #{tpu_custom_call.1} parent=1 // pred_fallthru
      _
    // Predicated region
    $region30: #{tpu_custom_call.1} parent=1 // pred_check
      _
    $region31: #{tpu_custom_call.1} parent=1 // pred_check_branch
      %108 = sbr.rel (0) target = $region33
    $region32: #{tpu_custom_call.1} parent=1 // pred_region
      %s110 = ssub.s32 16, 16
      %111 = vsyncadd [#allocation15], %s110
      %s113 = sshll.u32 [#allocation14], 4
      %s114 = int_to_ptr.vmem [resolvable:$true] %s113
      %116 = dma.hbm_to_vmem [thread:$0]  %s7, 16, %s114, [#allocation15]
    $region33: #{tpu_custom_call.1} parent=1 // pred_fallthru
      _
    // Predicated region
    $region34: #{tpu_custom_call.1} parent=1 // pred_check
      _
    $region35: #{tpu_custom_call.1} parent=1 // pred_check_branch
      %118 = sbr.rel (0) target = $region37
    $region36: #{tpu_custom_call.1} parent=1 // pred_region
      %s120 = ssub.s32 512, 512
      %121 = vsyncadd [#allocation15], %s120
      %s122 = sshll.u32 [#allocation16], 4
      %s123 = int_to_ptr.vmem [resolvable:$true] %s122
      %128 = dma.hbm_to_vmem [thread:$0]  %s8, 512, %s123, [#allocation15], 128, 128, 8
    $region37: #{tpu_custom_call.1} parent=1 // pred_fallthru
      _
    // Predicated region
    $region38: #{tpu_custom_call.1} parent=1 // pred_check
      _
    $region39: #{tpu_custom_call.1} parent=1 // pred_check_branch
      %130 = sbr.rel (0) target = $region41
    $region40: #{tpu_custom_call.1} parent=1 // pred_region
      %s132 = ssub.s32 1024, 1024
      %133 = vsyncadd [#allocation18], %s132
      %s134 = sshll.u32 [#allocation17], 4
      %s135 = int_to_ptr.vmem [resolvable:$true] %s134
      %140 = dma.hbm_to_vmem [thread:$0]  %s9, 1024, %s135, [#allocation18], 128, 128, 8
    $region41: #{tpu_custom_call.1} parent=1 // pred_fallthru
      _
    // Predicated region
    $region42: #{tpu_custom_call.1} parent=1 // pred_check
      _
    $region43: #{tpu_custom_call.1} parent=1 // pred_check_branch
      %142 = sbr.rel (0) target = $region45
    $region44: #{tpu_custom_call.1} parent=1 // pred_region
      %s144 = ssub.s32 16, 16
      %145 = vsyncadd [#allocation18], %s144
      %s147 = sshll.u32 [#allocation19], 4
      %s148 = int_to_ptr.vmem [resolvable:$true] %s147
      %150 = dma.hbm_to_vmem [thread:$0]  %s10, 16, %s148, [#allocation18]
    $region45: #{tpu_custom_call.1} parent=1 // pred_fallthru
      _
    // Predicated region
    $region46: #{tpu_custom_call.1} parent=1 // pred_check
      _
    $region47: #{tpu_custom_call.1} parent=1 // pred_check_branch
      %152 = sbr.rel (0) target = $region49
    $region48: #{tpu_custom_call.1} parent=1 // pred_region
      %s154 = ssub.s32 128, 128
      %155 = vsyncadd [#allocation21], %s154
      %s157 = sshll.u32 [#allocation20], 4
      %s158 = int_to_ptr.vmem [resolvable:$true] %s157
      %160 = dma.hbm_to_vmem [thread:$0]  %s11, 128, %s158, [#allocation21]
    $region49: #{tpu_custom_call.1} parent=1 // pred_fallthru
      _
    // Predicated region
    $region50: #{tpu_custom_call.1} parent=1 // pred_check
      _
    $region51: #{tpu_custom_call.1} parent=1 // pred_check_branch
      %162 = sbr.rel (0) target = $region53
    $region52: #{tpu_custom_call.1} parent=1 // pred_region
      %163 = dma.done [#allocation3], 256
    $region53: #{tpu_custom_call.1} parent=1 // pred_fallthru
      _
    // Predicated region
    $region54: #{tpu_custom_call.1} parent=1 // pred_check
      _
    $region55: #{tpu_custom_call.1} parent=1 // pred_check_branch
      %165 = sbr.rel (0) target = $region57
    $region56: #{tpu_custom_call.1} parent=1 // pred_region
      %166 = dma.done [#allocation6], 512
    $region57: #{tpu_custom_call.1} parent=1 // pred_fallthru
      _
    // Predicated region
    $region58: #{tpu_custom_call.1} parent=1 // pred_check
      _
    $region59: #{tpu_custom_call.1} parent=1 // pred_check_branch
      %168 = sbr.rel (0) target = $region61
    $region60: #{tpu_custom_call.1} parent=1 // pred_region
      %169 = dma.done [#allocation6], 512
    $region61: #{tpu_custom_call.1} parent=1 // pred_fallthru
      _
    // Predicated region
    $region62: #{tpu_custom_call.1} parent=1 // pred_check
      _
    $region63: #{tpu_custom_call.1} parent=1 // pred_check_branch
      %171 = sbr.rel (0) target = $region65
    $region64: #{tpu_custom_call.1} parent=1 // pred_region
      %172 = dma.done [#allocation9], 512
    $region65: #{tpu_custom_call.1} parent=1 // pred_fallthru
      _
    // Predicated region
    $region66: #{tpu_custom_call.1} parent=1 // pred_check
      _
    $region67: #{tpu_custom_call.1} parent=1 // pred_check_branch
      %174 = sbr.rel (0) target = $region69
    $region68: #{tpu_custom_call.1} parent=1 // pred_region
      %175 = dma.done [#allocation9], 16
    $region69: #{tpu_custom_call.1} parent=1 // pred_fallthru
      _
    // Predicated region
    $region70: #{tpu_custom_call.1} parent=1 // pred_check
      _
    $region71: #{tpu_custom_call.1} parent=1 // pred_check_branch
      %177 = sbr.rel (0) target = $region73
    $region72: #{tpu_custom_call.1} parent=1 // pred_region
      %178 = dma.done [#allocation12], 512
    $region73: #{tpu_custom_call.1} parent=1 // pred_fallthru
      _
    // Predicated region
    $region74: #{tpu_custom_call.1} parent=1 // pred_check
      _
    $region75: #{tpu_custom_call.1} parent=1 // pred_check_branch
      %180 = sbr.rel (0) target = $region77
    $region76: #{tpu_custom_call.1} parent=1 // pred_region
      %181 = dma.done [#allocation12], 512
    $region77: #{tpu_custom_call.1} parent=1 // pred_fallthru
      _
    // Predicated region
    $region78: #{tpu_custom_call.1} parent=1 // pred_check
      _
    $region79: #{tpu_custom_call.1} parent=1 // pred_check_branch
      %183 = sbr.rel (0) target = $region81
    $region80: #{tpu_custom_call.1} parent=1 // pred_region
      %184 = dma.done [#allocation15], 16
    $region81: #{tpu_custom_call.1} parent=1 // pred_fallthru
      _
    // Predicated region
    $region82: #{tpu_custom_call.1} parent=1 // pred_check
      _
    $region83: #{tpu_custom_call.1} parent=1 // pred_check_branch
      %186 = sbr.rel (0) target = $region85
    $region84: #{tpu_custom_call.1} parent=1 // pred_region
      %187 = dma.done [#allocation15], 512
    $region85: #{tpu_custom_call.1} parent=1 // pred_fallthru
      _
    // Predicated region
    $region86: #{tpu_custom_call.1} parent=1 // pred_check
      _
    $region87: #{tpu_custom_call.1} parent=1 // pred_check_branch
      %189 = sbr.rel (0) target = $region89
    $region88: #{tpu_custom_call.1} parent=1 // pred_region
      %190 = dma.done [#allocation18], 1024
    $region89: #{tpu_custom_call.1} parent=1 // pred_fallthru
      _
    // Predicated region
    $region90: #{tpu_custom_call.1} parent=1 // pred_check
      _
    $region91: #{tpu_custom_call.1} parent=1 // pred_check_branch
      %192 = sbr.rel (0) target = $region93
    $region92: #{tpu_custom_call.1} parent=1 // pred_region
      %193 = dma.done [#allocation18], 16
    $region93: #{tpu_custom_call.1} parent=1 // pred_fallthru
      _
    // Predicated region
    $region94: #{tpu_custom_call.1} parent=1 // pred_check
      _
    $region95: #{tpu_custom_call.1} parent=1 // pred_check_branch
      %195 = sbr.rel (0) target = $region97
    $region96: #{tpu_custom_call.1} parent=1 // pred_region
      %196 = dma.done [#allocation21], 128
    $region97: #{tpu_custom_call.1} parent=1 // pred_fallthru
      _
    %v197 = vld [vmem:[#allocation2] sm:$0xff]
    %v198 = vld [vmem:[#allocation2 + $0x8] sm:$0xff]
    %v199 = vld [vmem:[#allocation5] sm:$0xff]
    %v200 = vld [vmem:[#allocation5 + $0x8] sm:$0x3]
    %v201 = vld [vmem:[#allocation5 + $0x10] sm:$0xff]
    %v202 = vld [vmem:[#allocation5 + $0x18] sm:$0x3]
    %v207 = vcombine.high %v199, %v199
    %v209 = vunpack.c.l.s4 1983009808
    %v210 = vunpack.c.0.s8 %v209
    %v211 = vlaneseq
    %v212 = vshrl.u32 %v211, 7
    %v213 = vsub.s32 %v210, %v212
    %v214 = vrot.slane %v199, %v213
    %v216 = vunpack.c.l.s4 1983009808
    %v217 = vunpack.c.0.s8 %v216
    %v218 = vlaneseq
    %v219 = vshrl.u32 %v218, 7
    %v220 = vsub.s32 %v217, %v219
    %v221 = vrot.slane %v207, %v220
    %v222 = vcombine.high %v214, %v214
    %v223 = vcombine.high %v221, %v221
    %v225 = vunpack.c.l.s4 1983009808
    %v226 = vunpack.c.0.s8 %v225
    %v227 = vlaneseq
    %v228 = vshrl.u32 %v227, 7
    %v229 = vsub.s32 %v226, %v228
    %v230 = vrot.slane %v200, %v229
    %v231 = vcombine.high %v201, %v201
    %v233 = vunpack.c.l.s4 1983009808
    %v234 = vunpack.c.0.s8 %v233
    %v235 = vlaneseq
    %v236 = vshrl.u32 %v235, 7
    %v237 = vsub.s32 %v234, %v236
    %v238 = vrot.slane %v201, %v237
    %v240 = vunpack.c.l.s4 1983009808
    %v241 = vunpack.c.0.s8 %v240
    %v242 = vlaneseq
    %v243 = vshrl.u32 %v242, 7
    %v244 = vsub.s32 %v241, %v243
    %v245 = vrot.slane %v231, %v244
    %v246 = vcombine.high %v238, %v238
    %v247 = vcombine.high %v245, %v245
    %v249 = vunpack.c.l.s4 1983009808
    %v250 = vunpack.c.0.s8 %v249
    %v251 = vlaneseq
    %v252 = vshrl.u32 %v251, 7
    %v253 = vsub.s32 %v250, %v252
    %v254 = vrot.slane %v202, %v253
    %v255 = vld [vmem:[#allocation20] sm:$0x3f]
    %v256 = vld [vmem:[#allocation10] sm:$0x1]
    %v257 = vld [vmem:[#allocation7] sm:$0xff]
    %v258 = vld [vmem:[#allocation7 + $0x8] sm:$0xff]
    %v259 = vld [vmem:[#allocation7 + $0x10] sm:$0xff]
    %v260 = vld [vmem:[#allocation7 + $0x18] sm:$0xff]
    %v262 = vlaneseq
    %v263 = vshrl.u32 %v262, 7
    %v264 = vsub.s32 0, %v263
    %v265 = vrot.slane %v256, %v264
    %vm267 = vcmask 261120
    %v269 = vsel %vm267, %v197, 0
    %v272 = vsel %vm267, %v198, 0
    %274 = vmatprep.subr.mxu0 0.0
    %275 = vmatpush1.msra.mxu0 %v257
    %276 = vmatprep.subr.mxu0 0.0
    %277 = vmatpush1.msra.mxu0 %v258
    %278 = vmatprep.subr.mxu0 0.0
    %279 = vmatpush1.msra.mxu0 %v259
    %280 = vmatprep.subr.mxu0 0.0
    %281 = vmatpush1.msra.mxu0 %v260
    %282 = vmatprep.subr.mxu0 0.0
    %283 = vmatpush1.msra.mxu0 0.0
    %284 = vmatprep.subr.mxu0 0.0
    %285 = vmatpush1.msra.mxu0 0.0
    %286 = vmatprep.subr.mxu0 0.0
    %287 = vmatpush1.msra.mxu0 0.0
    %288 = vmatprep.subr.mxu0 0.0
    %289 = vmatpush1.msra.mxu0 0.0
    %290 = vmatprep.subr.mxu0 0.0
    %291 = vmatpush1.msra.mxu0 0.0
    %292 = vmatprep.subr.mxu0 0.0
    %293 = vmatpush1.msra.mxu0 0.0
    %294 = vmatprep.subr.mxu0 0.0
    %295 = vmatpush1.msra.mxu0 0.0
    %296 = vmatprep.subr.mxu0 0.0
    %297 = vmatpush1.msra.mxu0 0.0
    %298 = vmatprep.subr.mxu0 0.0
    %299 = vmatpush1.msra.mxu0 0.0
    %300 = vmatprep.subr.mxu0 0.0
    %301 = vmatpush1.msra.mxu0 0.0
    %302 = vmatprep.subr.mxu0 0.0
    %303 = vmatpush1.msra.mxu0 0.0
    %304 = vmatprep.subr.mxu0 0.0
    %305 = vmatpush1.msra.mxu0 0.0
    %306 = vmatprep.subr.mxu0 0.0
    %307 = vmatpush1.msra.mxu0 0.0
    %308 = vmatprep.subr.mxu0 0.0
    %309 = vmatpush1.msra.mxu0 0.0
    %310 = vmatprep.subr.mxu0 0.0
    %311 = vmatpush1.msra.mxu0 0.0
    %312 = vmatprep.subr.mxu0 0.0
    %313 = vmatpush1.msra.mxu0 0.0
    %314 = vmatprep.subr.mxu0 0.0
    %315 = vmatpush1.msra.mxu0 0.0
    %316 = vmatprep.subr.mxu0 0.0
    %317 = vmatpush1.msra.mxu0 0.0
    %318 = vmatprep.subr.mxu0 0.0
    %319 = vmatpush1.msra.mxu0 0.0
    %320 = vmatprep.subr.mxu0 0.0
    %321 = vmatpush1.msra.mxu0 0.0
    %322 = vmatprep.subr.mxu0 0.0
    %323 = vmatpush1.msra.mxu0 0.0
    %324 = vmatprep.subr.mxu0 0.0
    %325 = vmatpush1.msra.mxu0 0.0
    %326 = vmatprep.subr.mxu0 0.0
    %327 = vmatpush1.msra.mxu0 0.0
    %328 = vmatprep.subr.mxu0 0.0
    %329 = vmatpush1.msra.mxu0 0.0
    %330 = vmatprep.subr.mxu0 0.0
    %331 = vmatpush1.msra.mxu0 0.0
    %332 = vmatprep.subr.mxu0 0.0
    %333 = vmatpush1.msra.mxu0 0.0
    %334 = vmatprep.subr.mxu0 0.0
    %335 = vmatpush1.msra.mxu0 0.0
    %336 = vmatprep.subr.mxu0 0.0
    %337 = vmatpush1.msra.mxu0 0.0
    %338 = vmatprep.mubr.f32.mxu0 0.0
    %339 = vmatmul.mubr.f32.gmra.mrb[0].mxu0 %v269
    %v340 = vpop.f32.mrb[0].mxu0
    %v341 = vadd.f32 %v265, %v340
    %v342 = vpop.f32.mrb[0].mxu0
    %343 = vmatprep.mubr.f32.mxu0 0.0
    %344 = vmatmul.mubr.f32.gmra.mrb[0].mxu0 %v272
    %v345 = vpop.f32.mrb[0].mxu0
    %v346 = vadd.f32 %v265, %v345
    %v347 = vpop.f32.mrb[0].mxu0
    %348 = vdwg.mxu0
    %v349 = vmul.f32 %v341, 0.35355338
    %v350 = vmul.f32 %v346, 0.35355338
    %355 = vrot.lane.b32.xlu0 %v257, 96
    %v356 = vpop.permute.xlu0 %355
    %357 = vrot.lane.b32.xlu0 %v258, 96
    %v358 = vpop.permute.xlu0 %357
    %359 = vrot.lane.b32.xlu0 %v259, 96
    %v360 = vpop.permute.xlu0 %359
    %361 = vrot.lane.b32.xlu0 %v260, 96
    %v362 = vpop.permute.xlu0 %361
    %367 = vrot.lane.b32.xlu0 %v265, 96
    %v368 = vpop.permute.xlu0 %367
    %370 = vmatprep.subr.mxu0 0.0
    %371 = vmatpush1.msra.mxu0 %v356
    %372 = vmatprep.subr.mxu0 0.0
    %373 = vmatpush1.msra.mxu0 %v358
    %374 = vmatprep.subr.mxu0 0.0
    %375 = vmatpush1.msra.mxu0 %v360
    %376 = vmatprep.subr.mxu0 0.0
    %377 = vmatpush1.msra.mxu0 %v362
    %378 = vmatprep.subr.mxu0 0.0
    %379 = vmatpush1.msra.mxu0 0.0
    %380 = vmatprep.subr.mxu0 0.0
    %381 = vmatpush1.msra.mxu0 0.0
    %382 = vmatprep.subr.mxu0 0.0
    %383 = vmatpush1.msra.mxu0 0.0
    %384 = vmatprep.subr.mxu0 0.0
    %385 = vmatpush1.msra.mxu0 0.0
    %386 = vmatprep.subr.mxu0 0.0
    %387 = vmatpush1.msra.mxu0 0.0
    %388 = vmatprep.subr.mxu0 0.0
    %389 = vmatpush1.msra.mxu0 0.0
    %390 = vmatprep.subr.mxu0 0.0
    %391 = vmatpush1.msra.mxu0 0.0
    %392 = vmatprep.subr.mxu0 0.0
    %393 = vmatpush1.msra.mxu0 0.0
    %394 = vmatprep.subr.mxu0 0.0
    %395 = vmatpush1.msra.mxu0 0.0
    %396 = vmatprep.subr.mxu0 0.0
    %397 = vmatpush1.msra.mxu0 0.0
    %398 = vmatprep.subr.mxu0 0.0
    %399 = vmatpush1.msra.mxu0 0.0
    %400 = vmatprep.subr.mxu0 0.0
    %401 = vmatpush1.msra.mxu0 0.0
    %402 = vmatprep.subr.mxu0 0.0
    %403 = vmatpush1.msra.mxu0 0.0
    %404 = vmatprep.subr.mxu0 0.0
    %405 = vmatpush1.msra.mxu0 0.0
    %406 = vmatprep.subr.mxu0 0.0
    %407 = vmatpush1.msra.mxu0 0.0
    %408 = vmatprep.subr.mxu0 0.0
    %409 = vmatpush1.msra.mxu0 0.0
    %410 = vmatprep.subr.mxu0 0.0
    %411 = vmatpush1.msra.mxu0 0.0
    %412 = vmatprep.subr.mxu0 0.0
    %413 = vmatpush1.msra.mxu0 0.0
    %414 = vmatprep.subr.mxu0 0.0
    %415 = vmatpush1.msra.mxu0 0.0
    %416 = vmatprep.subr.mxu0 0.0
    %417 = vmatpush1.msra.mxu0 0.0
    %418 = vmatprep.subr.mxu0 0.0
    %419 = vmatpush1.msra.mxu0 0.0
    %420 = vmatprep.subr.mxu0 0.0
    %421 = vmatpush1.msra.mxu0 0.0
    %422 = vmatprep.subr.mxu0 0.0
    %423 = vmatpush1.msra.mxu0 0.0
    %424 = vmatprep.subr.mxu0 0.0
    %425 = vmatpush1.msra.mxu0 0.0
    %426 = vmatprep.subr.mxu0 0.0
    %427 = vmatpush1.msra.mxu0 0.0
    %428 = vmatprep.subr.mxu0 0.0
    %429 = vmatpush1.msra.mxu0 0.0
    %430 = vmatprep.subr.mxu0 0.0
    %431 = vmatpush1.msra.mxu0 0.0
    %432 = vmatprep.subr.mxu0 0.0
    %433 = vmatpush1.msra.mxu0 0.0
    %434 = vmatprep.mubr.f32.mxu0 0.0
    %435 = vmatmul.mubr.f32.gmra.mrb[0].mxu0 %v269
    %v436 = vpop.f32.mrb[0].mxu0
    %v437 = vadd.f32 %v368, %v436
    %v438 = vpop.f32.mrb[0].mxu0
    %439 = vmatprep.mubr.f32.mxu0 0.0
    %440 = vmatmul.mubr.f32.gmra.mrb[0].mxu0 %v272
    %v441 = vpop.f32.mrb[0].mxu0
    %v442 = vadd.f32 %v368, %v441
    %v443 = vpop.f32.mrb[0].mxu0
    %444 = vdwg.mxu0
    %447 = vrot.lane.b32.xlu0 %v349, 120
    %v448 = vpop.permute.xlu0 %447
    %449 = vrot.lane.b32.xlu0 %v350, 120
    %v450 = vpop.permute.xlu0 %449
    %451 = vrot.lane.b32.xlu0 %v349, 112
    %v452 = vpop.permute.xlu0 %451
    %453 = vrot.lane.b32.xlu0 %v350, 112
    %v454 = vpop.permute.xlu0 %453
    %455 = vrot.lane.b32.xlu0 %v349, 104
    %v456 = vpop.permute.xlu0 %455
    %457 = vrot.lane.b32.xlu0 %v350, 104
    %v458 = vpop.permute.xlu0 %457
    %461 = vrot.lane.b32.xlu0 %v437, 120
    %v462 = vpop.permute.xlu0 %461
    %463 = vrot.lane.b32.xlu0 %v442, 120
    %v464 = vpop.permute.xlu0 %463
    %465 = vrot.lane.b32.xlu0 %v437, 112
    %v466 = vpop.permute.xlu0 %465
    %467 = vrot.lane.b32.xlu0 %v442, 112
    %v468 = vpop.permute.xlu0 %467
    %469 = vrot.lane.b32.xlu0 %v437, 104
    %v470 = vpop.permute.xlu0 %469
    %471 = vrot.lane.b32.xlu0 %v442, 104
    %v472 = vpop.permute.xlu0 %471
    %vm473 = vcmask 64512
    %v474 = vsel %vm473, %v349, 0
    %v476 = vsel %vm473, %v437, 0
    %478 = vmatprep.subr.mxu0 0.0
    %479 = vmatpush1.xpose.msra.mxu0 %v476
    %480 = vmatprep.subr.mxu0 0.0
    %481 = vmatpush1.xpose.msra.mxu0 0.0
    %482 = vmatprep.subr.mxu0 0.0
    %483 = vmatpush1.xpose.msra.mxu0 0.0
    %484 = vmatprep.subr.mxu0 0.0
    %485 = vmatpush1.xpose.msra.mxu0 0.0
    %486 = vmatprep.subr.mxu0 0.0
    %487 = vmatpush1.xpose.msra.mxu0 0.0
    %488 = vmatprep.subr.mxu0 0.0
    %489 = vmatpush1.xpose.msra.mxu0 0.0
    %490 = vmatprep.subr.mxu0 0.0
    %491 = vmatpush1.xpose.msra.mxu0 0.0
    %492 = vmatprep.subr.mxu0 0.0
    %493 = vmatpush1.xpose.msra.mxu0 0.0
    %494 = vmatprep.subr.mxu0 0.0
    %495 = vmatpush1.xpose.msra.mxu0 0.0
    %496 = vmatprep.subr.mxu0 0.0
    %497 = vmatpush1.xpose.msra.mxu0 0.0
    %498 = vmatprep.subr.mxu0 0.0
    %499 = vmatpush1.xpose.msra.mxu0 0.0
    %500 = vmatprep.subr.mxu0 0.0
    %501 = vmatpush1.xpose.msra.mxu0 0.0
    %502 = vmatprep.subr.mxu0 0.0
    %503 = vmatpush1.xpose.msra.mxu0 0.0
    %504 = vmatprep.subr.mxu0 0.0
    %505 = vmatpush1.xpose.msra.mxu0 0.0
    %506 = vmatprep.subr.mxu0 0.0
    %507 = vmatpush1.xpose.msra.mxu0 0.0
    %508 = vmatprep.subr.mxu0 0.0
    %509 = vmatpush1.xpose.msra.mxu0 0.0
    %510 = vmatprep.subr.mxu0 0.0
    %511 = vmatpush1.xpose.msra.mxu0 0.0
    %512 = vmatprep.subr.mxu0 0.0
    %513 = vmatpush1.xpose.msra.mxu0 0.0
    %514 = vmatprep.subr.mxu0 0.0
    %515 = vmatpush1.xpose.msra.mxu0 0.0
    %516 = vmatprep.subr.mxu0 0.0
    %517 = vmatpush1.xpose.msra.mxu0 0.0
    %518 = vmatprep.subr.mxu0 0.0
    %519 = vmatpush1.xpose.msra.mxu0 0.0
    %520 = vmatprep.subr.mxu0 0.0
    %521 = vmatpush1.xpose.msra.mxu0 0.0
    %522 = vmatprep.subr.mxu0 0.0
    %523 = vmatpush1.xpose.msra.mxu0 0.0
    %524 = vmatprep.subr.mxu0 0.0
    %525 = vmatpush1.xpose.msra.mxu0 0.0
    %526 = vmatprep.subr.mxu0 0.0
    %527 = vmatpush1.xpose.msra.mxu0 0.0
    %528 = vmatprep.subr.mxu0 0.0
    %529 = vmatpush1.xpose.msra.mxu0 0.0
    %530 = vmatprep.subr.mxu0 0.0
    %531 = vmatpush1.xpose.msra.mxu0 0.0
    %532 = vmatprep.subr.mxu0 0.0
    %533 = vmatpush1.xpose.msra.mxu0 0.0
    %534 = vmatprep.subr.mxu0 0.0
    %535 = vmatpush1.xpose.msra.mxu0 0.0
    %536 = vmatprep.subr.mxu0 0.0
    %537 = vmatpush1.xpose.msra.mxu0 0.0
    %538 = vmatprep.subr.mxu0 0.0
    %539 = vmatpush1.xpose.msra.mxu0 0.0
    %540 = vmatprep.subr.mxu0 0.0
    %541 = vmatpush1.xpose.msra.mxu0 0.0
    %542 = vmatprep.mubr.f32.mxu0 0.0
    %543 = vmatmul.mubr.f32.gmra.mrb[0].mxu0 %v474
    %v544 = vpop.f32.mrb[0].mxu0
    %v545 = vadd.f32 0.0, %v544
    %v546 = vpop.f32.mrb[0].mxu0
    %547 = vdwg.mxu0
    %v548 = vsel %vm473, %v448, 0
    %v550 = vsel %vm473, %v462, 0
    %552 = vmatprep.subr.mxu0 0.0
    %553 = vmatpush1.xpose.msra.mxu0 %v550
    %554 = vmatprep.subr.mxu0 0.0
    %555 = vmatpush1.xpose.msra.mxu0 0.0
    %556 = vmatprep.subr.mxu0 0.0
    %557 = vmatpush1.xpose.msra.mxu0 0.0
    %558 = vmatprep.subr.mxu0 0.0
    %559 = vmatpush1.xpose.msra.mxu0 0.0
    %560 = vmatprep.subr.mxu0 0.0
    %561 = vmatpush1.xpose.msra.mxu0 0.0
    %562 = vmatprep.subr.mxu0 0.0
    %563 = vmatpush1.xpose.msra.mxu0 0.0
    %564 = vmatprep.subr.mxu0 0.0
    %565 = vmatpush1.xpose.msra.mxu0 0.0
    %566 = vmatprep.subr.mxu0 0.0
    %567 = vmatpush1.xpose.msra.mxu0 0.0
    %568 = vmatprep.subr.mxu0 0.0
    %569 = vmatpush1.xpose.msra.mxu0 0.0
    %570 = vmatprep.subr.mxu0 0.0
    %571 = vmatpush1.xpose.msra.mxu0 0.0
    %572 = vmatprep.subr.mxu0 0.0
    %573 = vmatpush1.xpose.msra.mxu0 0.0
    %574 = vmatprep.subr.mxu0 0.0
    %575 = vmatpush1.xpose.msra.mxu0 0.0
    %576 = vmatprep.subr.mxu0 0.0
    %577 = vmatpush1.xpose.msra.mxu0 0.0
    %578 = vmatprep.subr.mxu0 0.0
    %579 = vmatpush1.xpose.msra.mxu0 0.0
    %580 = vmatprep.subr.mxu0 0.0
    %581 = vmatpush1.xpose.msra.mxu0 0.0
    %582 = vmatprep.subr.mxu0 0.0
    %583 = vmatpush1.xpose.msra.mxu0 0.0
    %584 = vmatprep.subr.mxu0 0.0
    %585 = vmatpush1.xpose.msra.mxu0 0.0
    %586 = vmatprep.subr.mxu0 0.0
    %587 = vmatpush1.xpose.msra.mxu0 0.0
    %588 = vmatprep.subr.mxu0 0.0
    %589 = vmatpush1.xpose.msra.mxu0 0.0
    %590 = vmatprep.subr.mxu0 0.0
    %591 = vmatpush1.xpose.msra.mxu0 0.0
    %592 = vmatprep.subr.mxu0 0.0
    %593 = vmatpush1.xpose.msra.mxu0 0.0
    %594 = vmatprep.subr.mxu0 0.0
    %595 = vmatpush1.xpose.msra.mxu0 0.0
    %596 = vmatprep.subr.mxu0 0.0
    %597 = vmatpush1.xpose.msra.mxu0 0.0
    %598 = vmatprep.subr.mxu0 0.0
    %599 = vmatpush1.xpose.msra.mxu0 0.0
    %600 = vmatprep.subr.mxu0 0.0
    %601 = vmatpush1.xpose.msra.mxu0 0.0
    %602 = vmatprep.subr.mxu0 0.0
    %603 = vmatpush1.xpose.msra.mxu0 0.0
    %604 = vmatprep.subr.mxu0 0.0
    %605 = vmatpush1.xpose.msra.mxu0 0.0
    %606 = vmatprep.subr.mxu0 0.0
    %607 = vmatpush1.xpose.msra.mxu0 0.0
    %608 = vmatprep.subr.mxu0 0.0
    %609 = vmatpush1.xpose.msra.mxu0 0.0
    %610 = vmatprep.subr.mxu0 0.0
    %611 = vmatpush1.xpose.msra.mxu0 0.0
    %612 = vmatprep.subr.mxu0 0.0
    %613 = vmatpush1.xpose.msra.mxu0 0.0
    %614 = vmatprep.subr.mxu0 0.0
    %615 = vmatpush1.xpose.msra.mxu0 0.0
    %616 = vmatprep.mubr.f32.mxu0 0.0
    %617 = vmatmul.mubr.f32.gmra.mrb[0].mxu0 %v548
    %v618 = vpop.f32.mrb[0].mxu0
    %v619 = vadd.f32 0.0, %v618
    %v620 = vpop.f32.mrb[0].mxu0
    %621 = vdwg.mxu0
    %v622 = vsel %vm473, %v452, 0
    %v624 = vsel %vm473, %v466, 0
    %626 = vmatprep.subr.mxu0 0.0
    %627 = vmatpush1.xpose.msra.mxu0 %v624
    %628 = vmatprep.subr.mxu0 0.0
    %629 = vmatpush1.xpose.msra.mxu0 0.0
    %630 = vmatprep.subr.mxu0 0.0
    %631 = vmatpush1.xpose.msra.mxu0 0.0
    %632 = vmatprep.subr.mxu0 0.0
    %633 = vmatpush1.xpose.msra.mxu0 0.0
    %634 = vmatprep.subr.mxu0 0.0
    %635 = vmatpush1.xpose.msra.mxu0 0.0
    %636 = vmatprep.subr.mxu0 0.0
    %637 = vmatpush1.xpose.msra.mxu0 0.0
    %638 = vmatprep.subr.mxu0 0.0
    %639 = vmatpush1.xpose.msra.mxu0 0.0
    %640 = vmatprep.subr.mxu0 0.0
    %641 = vmatpush1.xpose.msra.mxu0 0.0
    %642 = vmatprep.subr.mxu0 0.0
    %643 = vmatpush1.xpose.msra.mxu0 0.0
    %644 = vmatprep.subr.mxu0 0.0
    %645 = vmatpush1.xpose.msra.mxu0 0.0
    %646 = vmatprep.subr.mxu0 0.0
    %647 = vmatpush1.xpose.msra.mxu0 0.0
    %648 = vmatprep.subr.mxu0 0.0
    %649 = vmatpush1.xpose.msra.mxu0 0.0
    %650 = vmatprep.subr.mxu0 0.0
    %651 = vmatpush1.xpose.msra.mxu0 0.0
    %652 = vmatprep.subr.mxu0 0.0
    %653 = vmatpush1.xpose.msra.mxu0 0.0
    %654 = vmatprep.subr.mxu0 0.0
    %655 = vmatpush1.xpose.msra.mxu0 0.0
    %656 = vmatprep.subr.mxu0 0.0
    %657 = vmatpush1.xpose.msra.mxu0 0.0
    %658 = vmatprep.subr.mxu0 0.0
    %659 = vmatpush1.xpose.msra.mxu0 0.0
    %660 = vmatprep.subr.mxu0 0.0
    %661 = vmatpush1.xpose.msra.mxu0 0.0
    %662 = vmatprep.subr.mxu0 0.0
    %663 = vmatpush1.xpose.msra.mxu0 0.0
    %664 = vmatprep.subr.mxu0 0.0
    %665 = vmatpush1.xpose.msra.mxu0 0.0
    %666 = vmatprep.subr.mxu0 0.0
    %667 = vmatpush1.xpose.msra.mxu0 0.0
    %668 = vmatprep.subr.mxu0 0.0
    %669 = vmatpush1.xpose.msra.mxu0 0.0
    %670 = vmatprep.subr.mxu0 0.0
    %671 = vmatpush1.xpose.msra.mxu0 0.0
    %672 = vmatprep.subr.mxu0 0.0
    %673 = vmatpush1.xpose.msra.mxu0 0.0
    %674 = vmatprep.subr.mxu0 0.0
    %675 = vmatpush1.xpose.msra.mxu0 0.0
    %676 = vmatprep.subr.mxu0 0.0
    %677 = vmatpush1.xpose.msra.mxu0 0.0
    %678 = vmatprep.subr.mxu0 0.0
    %679 = vmatpush1.xpose.msra.mxu0 0.0
    %680 = vmatprep.subr.mxu0 0.0
    %681 = vmatpush1.xpose.msra.mxu0 0.0
    %682 = vmatprep.subr.mxu0 0.0
    %683 = vmatpush1.xpose.msra.mxu0 0.0
    %684 = vmatprep.subr.mxu0 0.0
    %685 = vmatpush1.xpose.msra.mxu0 0.0
    %686 = vmatprep.subr.mxu0 0.0
    %687 = vmatpush1.xpose.msra.mxu0 0.0
    %688 = vmatprep.subr.mxu0 0.0
    %689 = vmatpush1.xpose.msra.mxu0 0.0
    %690 = vmatprep.mubr.f32.mxu0 0.0
    %691 = vmatmul.mubr.f32.gmra.mrb[0].mxu0 %v622
    %v692 = vpop.f32.mrb[0].mxu0
    %v693 = vadd.f32 0.0, %v692
    %v694 = vpop.f32.mrb[0].mxu0
    %695 = vdwg.mxu0
    %v696 = vsel %vm473, %v456, 0
    %v698 = vsel %vm473, %v470, 0
    %700 = vmatprep.subr.mxu0 0.0
    %701 = vmatpush1.xpose.msra.mxu0 %v698
    %702 = vmatprep.subr.mxu0 0.0
    %703 = vmatpush1.xpose.msra.mxu0 0.0
    %704 = vmatprep.subr.mxu0 0.0
    %705 = vmatpush1.xpose.msra.mxu0 0.0
    %706 = vmatprep.subr.mxu0 0.0
    %707 = vmatpush1.xpose.msra.mxu0 0.0
    %708 = vmatprep.subr.mxu0 0.0
    %709 = vmatpush1.xpose.msra.mxu0 0.0
    %710 = vmatprep.subr.mxu0 0.0
    %711 = vmatpush1.xpose.msra.mxu0 0.0
    %712 = vmatprep.subr.mxu0 0.0
    %713 = vmatpush1.xpose.msra.mxu0 0.0
    %714 = vmatprep.subr.mxu0 0.0
    %715 = vmatpush1.xpose.msra.mxu0 0.0
    %716 = vmatprep.subr.mxu0 0.0
    %717 = vmatpush1.xpose.msra.mxu0 0.0
    %718 = vmatprep.subr.mxu0 0.0
    %719 = vmatpush1.xpose.msra.mxu0 0.0
    %720 = vmatprep.subr.mxu0 0.0
    %721 = vmatpush1.xpose.msra.mxu0 0.0
    %722 = vmatprep.subr.mxu0 0.0
    %723 = vmatpush1.xpose.msra.mxu0 0.0
    %724 = vmatprep.subr.mxu0 0.0
    %725 = vmatpush1.xpose.msra.mxu0 0.0
    %726 = vmatprep.subr.mxu0 0.0
    %727 = vmatpush1.xpose.msra.mxu0 0.0
    %728 = vmatprep.subr.mxu0 0.0
    %729 = vmatpush1.xpose.msra.mxu0 0.0
    %730 = vmatprep.subr.mxu0 0.0
    %731 = vmatpush1.xpose.msra.mxu0 0.0
    %732 = vmatprep.subr.mxu0 0.0
    %733 = vmatpush1.xpose.msra.mxu0 0.0
    %734 = vmatprep.subr.mxu0 0.0
    %735 = vmatpush1.xpose.msra.mxu0 0.0
    %736 = vmatprep.subr.mxu0 0.0
    %737 = vmatpush1.xpose.msra.mxu0 0.0
    %738 = vmatprep.subr.mxu0 0.0
    %739 = vmatpush1.xpose.msra.mxu0 0.0
    %740 = vmatprep.subr.mxu0 0.0
    %741 = vmatpush1.xpose.msra.mxu0 0.0
    %742 = vmatprep.subr.mxu0 0.0
    %743 = vmatpush1.xpose.msra.mxu0 0.0
    %744 = vmatprep.subr.mxu0 0.0
    %745 = vmatpush1.xpose.msra.mxu0 0.0
    %746 = vmatprep.subr.mxu0 0.0
    %747 = vmatpush1.xpose.msra.mxu0 0.0
    %748 = vmatprep.subr.mxu0 0.0
    %749 = vmatpush1.xpose.msra.mxu0 0.0
    %750 = vmatprep.subr.mxu0 0.0
    %751 = vmatpush1.xpose.msra.mxu0 0.0
    %752 = vmatprep.subr.mxu0 0.0
    %753 = vmatpush1.xpose.msra.mxu0 0.0
    %754 = vmatprep.subr.mxu0 0.0
    %755 = vmatpush1.xpose.msra.mxu0 0.0
    %756 = vmatprep.subr.mxu0 0.0
    %757 = vmatpush1.xpose.msra.mxu0 0.0
    %758 = vmatprep.subr.mxu0 0.0
    %759 = vmatpush1.xpose.msra.mxu0 0.0
    %760 = vmatprep.subr.mxu0 0.0
    %761 = vmatpush1.xpose.msra.mxu0 0.0
    %762 = vmatprep.subr.mxu0 0.0
    %763 = vmatpush1.xpose.msra.mxu0 0.0
    %764 = vmatprep.mubr.f32.mxu0 0.0
    %765 = vmatmul.mubr.f32.gmra.mrb[0].mxu0 %v696
    %v766 = vpop.f32.mrb[0].mxu0
    %v767 = vadd.f32 0.0, %v766
    %v768 = vpop.f32.mrb[0].mxu0
    %769 = vdwg.mxu0
    %v770 = vsel %vm473, %v350, 0
    %v772 = vsel %vm473, %v442, 0
    %774 = vmatprep.subr.mxu0 0.0
    %775 = vmatpush1.xpose.msra.mxu0 %v772
    %776 = vmatprep.subr.mxu0 0.0
    %777 = vmatpush1.xpose.msra.mxu0 0.0
    %778 = vmatprep.subr.mxu0 0.0
    %779 = vmatpush1.xpose.msra.mxu0 0.0
    %780 = vmatprep.subr.mxu0 0.0
    %781 = vmatpush1.xpose.msra.mxu0 0.0
    %782 = vmatprep.subr.mxu0 0.0
    %783 = vmatpush1.xpose.msra.mxu0 0.0
    %784 = vmatprep.subr.mxu0 0.0
    %785 = vmatpush1.xpose.msra.mxu0 0.0
    %786 = vmatprep.subr.mxu0 0.0
    %787 = vmatpush1.xpose.msra.mxu0 0.0
    %788 = vmatprep.subr.mxu0 0.0
    %789 = vmatpush1.xpose.msra.mxu0 0.0
    %790 = vmatprep.subr.mxu0 0.0
    %791 = vmatpush1.xpose.msra.mxu0 0.0
    %792 = vmatprep.subr.mxu0 0.0
    %793 = vmatpush1.xpose.msra.mxu0 0.0
    %794 = vmatprep.subr.mxu0 0.0
    %795 = vmatpush1.xpose.msra.mxu0 0.0
    %796 = vmatprep.subr.mxu0 0.0
    %797 = vmatpush1.xpose.msra.mxu0 0.0
    %798 = vmatprep.subr.mxu0 0.0
    %799 = vmatpush1.xpose.msra.mxu0 0.0
    %800 = vmatprep.subr.mxu0 0.0
    %801 = vmatpush1.xpose.msra.mxu0 0.0
    %802 = vmatprep.subr.mxu0 0.0
    %803 = vmatpush1.xpose.msra.mxu0 0.0
    %804 = vmatprep.subr.mxu0 0.0
    %805 = vmatpush1.xpose.msra.mxu0 0.0
    %806 = vmatprep.subr.mxu0 0.0
    %807 = vmatpush1.xpose.msra.mxu0 0.0
    %808 = vmatprep.subr.mxu0 0.0
    %809 = vmatpush1.xpose.msra.mxu0 0.0
    %810 = vmatprep.subr.mxu0 0.0
    %811 = vmatpush1.xpose.msra.mxu0 0.0
    %812 = vmatprep.subr.mxu0 0.0
    %813 = vmatpush1.xpose.msra.mxu0 0.0
    %814 = vmatprep.subr.mxu0 0.0
    %815 = vmatpush1.xpose.msra.mxu0 0.0
    %816 = vmatprep.subr.mxu0 0.0
    %817 = vmatpush1.xpose.msra.mxu0 0.0
    %818 = vmatprep.subr.mxu0 0.0
    %819 = vmatpush1.xpose.msra.mxu0 0.0
    %820 = vmatprep.subr.mxu0 0.0
    %821 = vmatpush1.xpose.msra.mxu0 0.0
    %822 = vmatprep.subr.mxu0 0.0
    %823 = vmatpush1.xpose.msra.mxu0 0.0
    %824 = vmatprep.subr.mxu0 0.0
    %825 = vmatpush1.xpose.msra.mxu0 0.0
    %826 = vmatprep.subr.mxu0 0.0
    %827 = vmatpush1.xpose.msra.mxu0 0.0
    %828 = vmatprep.subr.mxu0 0.0
    %829 = vmatpush1.xpose.msra.mxu0 0.0
    %830 = vmatprep.subr.mxu0 0.0
    %831 = vmatpush1.xpose.msra.mxu0 0.0
    %832 = vmatprep.subr.mxu0 0.0
    %833 = vmatpush1.xpose.msra.mxu0 0.0
    %834 = vmatprep.subr.mxu0 0.0
    %835 = vmatpush1.xpose.msra.mxu0 0.0
    %836 = vmatprep.subr.mxu0 0.0
    %837 = vmatpush1.xpose.msra.mxu0 0.0
    %838 = vmatprep.mubr.f32.mxu0 0.0
    %839 = vmatmul.mubr.f32.gmra.mrb[0].mxu0 %v770
    %v840 = vpop.f32.mrb[0].mxu0
    %v841 = vadd.f32 0.0, %v840
    %v842 = vpop.f32.mrb[0].mxu0
    %843 = vdwg.mxu0
    %v844 = vsel %vm473, %v450, 0
    %v846 = vsel %vm473, %v464, 0
    %848 = vmatprep.subr.mxu0 0.0
    %849 = vmatpush1.xpose.msra.mxu0 %v846
    %850 = vmatprep.subr.mxu0 0.0
    %851 = vmatpush1.xpose.msra.mxu0 0.0
    %852 = vmatprep.subr.mxu0 0.0
    %853 = vmatpush1.xpose.msra.mxu0 0.0
    %854 = vmatprep.subr.mxu0 0.0
    %855 = vmatpush1.xpose.msra.mxu0 0.0
    %856 = vmatprep.subr.mxu0 0.0
    %857 = vmatpush1.xpose.msra.mxu0 0.0
    %858 = vmatprep.subr.mxu0 0.0
    %859 = vmatpush1.xpose.msra.mxu0 0.0
    %860 = vmatprep.subr.mxu0 0.0
    %861 = vmatpush1.xpose.msra.mxu0 0.0
    %862 = vmatprep.subr.mxu0 0.0
    %863 = vmatpush1.xpose.msra.mxu0 0.0
    %864 = vmatprep.subr.mxu0 0.0
    %865 = vmatpush1.xpose.msra.mxu0 0.0
    %866 = vmatprep.subr.mxu0 0.0
    %867 = vmatpush1.xpose.msra.mxu0 0.0
    %868 = vmatprep.subr.mxu0 0.0
    %869 = vmatpush1.xpose.msra.mxu0 0.0
    %870 = vmatprep.subr.mxu0 0.0
    %871 = vmatpush1.xpose.msra.mxu0 0.0
    %872 = vmatprep.subr.mxu0 0.0
    %873 = vmatpush1.xpose.msra.mxu0 0.0
    %874 = vmatprep.subr.mxu0 0.0
    %875 = vmatpush1.xpose.msra.mxu0 0.0
    %876 = vmatprep.subr.mxu0 0.0
    %877 = vmatpush1.xpose.msra.mxu0 0.0
    %878 = vmatprep.subr.mxu0 0.0
    %879 = vmatpush1.xpose.msra.mxu0 0.0
    %880 = vmatprep.subr.mxu0 0.0
    %881 = vmatpush1.xpose.msra.mxu0 0.0
    %882 = vmatprep.subr.mxu0 0.0
    %883 = vmatpush1.xpose.msra.mxu0 0.0
    %884 = vmatprep.subr.mxu0 0.0
    %885 = vmatpush1.xpose.msra.mxu0 0.0
    %886 = vmatprep.subr.mxu0 0.0
    %887 = vmatpush1.xpose.msra.mxu0 0.0
    %888 = vmatprep.subr.mxu0 0.0
    %889 = vmatpush1.xpose.msra.mxu0 0.0
    %890 = vmatprep.subr.mxu0 0.0
    %891 = vmatpush1.xpose.msra.mxu0 0.0
    %892 = vmatprep.subr.mxu0 0.0
    %893 = vmatpush1.xpose.msra.mxu0 0.0
    %894 = vmatprep.subr.mxu0 0.0
    %895 = vmatpush1.xpose.msra.mxu0 0.0
    %896 = vmatprep.subr.mxu0 0.0
    %897 = vmatpush1.xpose.msra.mxu0 0.0
    %898 = vmatprep.subr.mxu0 0.0
    %899 = vmatpush1.xpose.msra.mxu0 0.0
    %900 = vmatprep.subr.mxu0 0.0
    %901 = vmatpush1.xpose.msra.mxu0 0.0
    %902 = vmatprep.subr.mxu0 0.0
    %903 = vmatpush1.xpose.msra.mxu0 0.0
    %904 = vmatprep.subr.mxu0 0.0
    %905 = vmatpush1.xpose.msra.mxu0 0.0
    %906 = vmatprep.subr.mxu0 0.0
    %907 = vmatpush1.xpose.msra.mxu0 0.0
    %908 = vmatprep.subr.mxu0 0.0
    %909 = vmatpush1.xpose.msra.mxu0 0.0
    %910 = vmatprep.subr.mxu0 0.0
    %911 = vmatpush1.xpose.msra.mxu0 0.0
    %912 = vmatprep.mubr.f32.mxu0 0.0
    %913 = vmatmul.mubr.f32.gmra.mrb[0].mxu0 %v844
    %v914 = vpop.f32.mrb[0].mxu0
    %v915 = vadd.f32 0.0, %v914
    %v916 = vpop.f32.mrb[0].mxu0
    %917 = vdwg.mxu0
    %v918 = vsel %vm473, %v454, 0
    %v920 = vsel %vm473, %v468, 0
    %922 = vmatprep.subr.mxu0 0.0
    %923 = vmatpush1.xpose.msra.mxu0 %v920
    %924 = vmatprep.subr.mxu0 0.0
    %925 = vmatpush1.xpose.msra.mxu0 0.0
    %926 = vmatprep.subr.mxu0 0.0
    %927 = vmatpush1.xpose.msra.mxu0 0.0
    %928 = vmatprep.subr.mxu0 0.0
    %929 = vmatpush1.xpose.msra.mxu0 0.0
    %930 = vmatprep.subr.mxu0 0.0
    %931 = vmatpush1.xpose.msra.mxu0 0.0
    %932 = vmatprep.subr.mxu0 0.0
    %933 = vmatpush1.xpose.msra.mxu0 0.0
    %934 = vmatprep.subr.mxu0 0.0
    %935 = vmatpush1.xpose.msra.mxu0 0.0
    %936 = vmatprep.subr.mxu0 0.0
    %937 = vmatpush1.xpose.msra.mxu0 0.0
    %938 = vmatprep.subr.mxu0 0.0
    %939 = vmatpush1.xpose.msra.mxu0 0.0
    %940 = vmatprep.subr.mxu0 0.0
    %941 = vmatpush1.xpose.msra.mxu0 0.0
    %942 = vmatprep.subr.mxu0 0.0
    %943 = vmatpush1.xpose.msra.mxu0 0.0
    %944 = vmatprep.subr.mxu0 0.0
    %945 = vmatpush1.xpose.msra.mxu0 0.0
    %946 = vmatprep.subr.mxu0 0.0
    %947 = vmatpush1.xpose.msra.mxu0 0.0
    %948 = vmatprep.subr.mxu0 0.0
    %949 = vmatpush1.xpose.msra.mxu0 0.0
    %950 = vmatprep.subr.mxu0 0.0
    %951 = vmatpush1.xpose.msra.mxu0 0.0
    %952 = vmatprep.subr.mxu0 0.0
    %953 = vmatpush1.xpose.msra.mxu0 0.0
    %954 = vmatprep.subr.mxu0 0.0
    %955 = vmatpush1.xpose.msra.mxu0 0.0
    %956 = vmatprep.subr.mxu0 0.0
    %957 = vmatpush1.xpose.msra.mxu0 0.0
    %958 = vmatprep.subr.mxu0 0.0
    %959 = vmatpush1.xpose.msra.mxu0 0.0
    %960 = vmatprep.subr.mxu0 0.0
    %961 = vmatpush1.xpose.msra.mxu0 0.0
    %962 = vmatprep.subr.mxu0 0.0
    %963 = vmatpush1.xpose.msra.mxu0 0.0
    %964 = vmatprep.subr.mxu0 0.0
    %965 = vmatpush1.xpose.msra.mxu0 0.0
    %966 = vmatprep.subr.mxu0 0.0
    %967 = vmatpush1.xpose.msra.mxu0 0.0
    %968 = vmatprep.subr.mxu0 0.0
    %969 = vmatpush1.xpose.msra.mxu0 0.0
    %970 = vmatprep.subr.mxu0 0.0
    %971 = vmatpush1.xpose.msra.mxu0 0.0
    %972 = vmatprep.subr.mxu0 0.0
    %973 = vmatpush1.xpose.msra.mxu0 0.0
    %974 = vmatprep.subr.mxu0 0.0
    %975 = vmatpush1.xpose.msra.mxu0 0.0
    %976 = vmatprep.subr.mxu0 0.0
    %977 = vmatpush1.xpose.msra.mxu0 0.0
    %978 = vmatprep.subr.mxu0 0.0
    %979 = vmatpush1.xpose.msra.mxu0 0.0
    %980 = vmatprep.subr.mxu0 0.0
    %981 = vmatpush1.xpose.msra.mxu0 0.0
    %982 = vmatprep.subr.mxu0 0.0
    %983 = vmatpush1.xpose.msra.mxu0 0.0
    %984 = vmatprep.subr.mxu0 0.0
    %985 = vmatpush1.xpose.msra.mxu0 0.0
    %986 = vmatprep.mubr.f32.mxu0 0.0
    %987 = vmatmul.mubr.f32.gmra.mrb[0].mxu0 %v918
    %v988 = vpop.f32.mrb[0].mxu0
    %v989 = vadd.f32 0.0, %v988
    %v990 = vpop.f32.mrb[0].mxu0
    %991 = vdwg.mxu0
    %v992 = vsel %vm473, %v458, 0
    %v994 = vsel %vm473, %v472, 0
    %996 = vmatprep.subr.mxu0 0.0
    %997 = vmatpush1.xpose.msra.mxu0 %v994
    %998 = vmatprep.subr.mxu0 0.0
    %999 = vmatpush1.xpose.msra.mxu0 0.0
    %1000 = vmatprep.subr.mxu0 0.0
    %1001 = vmatpush1.xpose.msra.mxu0 0.0
    %1002 = vmatprep.subr.mxu0 0.0
    %1003 = vmatpush1.xpose.msra.mxu0 0.0
    %1004 = vmatprep.subr.mxu0 0.0
    %1005 = vmatpush1.xpose.msra.mxu0 0.0
    %1006 = vmatprep.subr.mxu0 0.0
    %1007 = vmatpush1.xpose.msra.mxu0 0.0
    %1008 = vmatprep.subr.mxu0 0.0
    %1009 = vmatpush1.xpose.msra.mxu0 0.0
    %1010 = vmatprep.subr.mxu0 0.0
    %1011 = vmatpush1.xpose.msra.mxu0 0.0
    %1012 = vmatprep.subr.mxu0 0.0
    %1013 = vmatpush1.xpose.msra.mxu0 0.0
    %1014 = vmatprep.subr.mxu0 0.0
    %1015 = vmatpush1.xpose.msra.mxu0 0.0
    %1016 = vmatprep.subr.mxu0 0.0
    %1017 = vmatpush1.xpose.msra.mxu0 0.0
    %1018 = vmatprep.subr.mxu0 0.0
    %1019 = vmatpush1.xpose.msra.mxu0 0.0
    %1020 = vmatprep.subr.mxu0 0.0
    %1021 = vmatpush1.xpose.msra.mxu0 0.0
    %1022 = vmatprep.subr.mxu0 0.0
    %1023 = vmatpush1.xpose.msra.mxu0 0.0
    %1024 = vmatprep.subr.mxu0 0.0
    %1025 = vmatpush1.xpose.msra.mxu0 0.0
    %1026 = vmatprep.subr.mxu0 0.0
    %1027 = vmatpush1.xpose.msra.mxu0 0.0
    %1028 = vmatprep.subr.mxu0 0.0
    %1029 = vmatpush1.xpose.msra.mxu0 0.0
    %1030 = vmatprep.subr.mxu0 0.0
    %1031 = vmatpush1.xpose.msra.mxu0 0.0
    %1032 = vmatprep.subr.mxu0 0.0
    %1033 = vmatpush1.xpose.msra.mxu0 0.0
    %1034 = vmatprep.subr.mxu0 0.0
    %1035 = vmatpush1.xpose.msra.mxu0 0.0
    %1036 = vmatprep.subr.mxu0 0.0
    %1037 = vmatpush1.xpose.msra.mxu0 0.0
    %1038 = vmatprep.subr.mxu0 0.0
    %1039 = vmatpush1.xpose.msra.mxu0 0.0
    %1040 = vmatprep.subr.mxu0 0.0
    %1041 = vmatpush1.xpose.msra.mxu0 0.0
    %1042 = vmatprep.subr.mxu0 0.0
    %1043 = vmatpush1.xpose.msra.mxu0 0.0
    %1044 = vmatprep.subr.mxu0 0.0
    %1045 = vmatpush1.xpose.msra.mxu0 0.0
    %1046 = vmatprep.subr.mxu0 0.0
    %1047 = vmatpush1.xpose.msra.mxu0 0.0
    %1048 = vmatprep.subr.mxu0 0.0
    %1049 = vmatpush1.xpose.msra.mxu0 0.0
    %1050 = vmatprep.subr.mxu0 0.0
    %1051 = vmatpush1.xpose.msra.mxu0 0.0
    %1052 = vmatprep.subr.mxu0 0.0
    %1053 = vmatpush1.xpose.msra.mxu0 0.0
    %1054 = vmatprep.subr.mxu0 0.0
    %1055 = vmatpush1.xpose.msra.mxu0 0.0
    %1056 = vmatprep.subr.mxu0 0.0
    %1057 = vmatpush1.xpose.msra.mxu0 0.0
    %1058 = vmatprep.subr.mxu0 0.0
    %1059 = vmatpush1.xpose.msra.mxu0 0.0
    %1060 = vmatprep.mubr.f32.mxu0 0.0
    %1061 = vmatmul.mubr.f32.gmra.mrb[0].mxu0 %v992
    %v1062 = vpop.f32.mrb[0].mxu0
    %v1063 = vadd.f32 0.0, %v1062
    %v1064 = vpop.f32.mrb[0].mxu0
    %1065 = vdwg.mxu0
    %v1066 = vsel %vm473, %v545, -inf
    %1067 = vmax.xlane.f32.xlu0 %v1066
    %v1068 = vpop.xlane.xlu0 %1067
    %v1069 = vsel %vm473, %v619, -inf
    %1070 = vmax.xlane.f32.xlu0 %v1069
    %v1071 = vpop.xlane.xlu0 %1070
    %v1072 = vsel %vm473, %v693, -inf
    %1073 = vmax.xlane.f32.xlu0 %v1072
    %v1074 = vpop.xlane.xlu0 %1073
    %v1075 = vsel %vm473, %v767, -inf
    %1076 = vmax.xlane.f32.xlu0 %v1075
    %v1077 = vpop.xlane.xlu0 %1076
    %v1078 = vsel %vm473, %v841, -inf
    %1079 = vmax.xlane.f32.xlu0 %v1078
    %v1080 = vpop.xlane.xlu0 %1079
    %v1081 = vsel %vm473, %v915, -inf
    %1082 = vmax.xlane.f32.xlu0 %v1081
    %v1083 = vpop.xlane.xlu0 %1082
    %v1084 = vsel %vm473, %v989, -inf
    %1085 = vmax.xlane.f32.xlu0 %v1084
    %v1086 = vpop.xlane.xlu0 %1085
    %v1087 = vsel %vm473, %v1063, -inf
    %1088 = vmax.xlane.f32.xlu0 %v1087
    %v1089 = vpop.xlane.xlu0 %1088
    %v1090 = vsub.f32 %v545, %v1068
    %v1091 = vsub.f32 %v619, %v1071
    %v1092 = vsub.f32 %v693, %v1074
    %v1093 = vsub.f32 %v767, %v1077
    %v1094 = vsub.f32 %v841, %v1080
    %v1095 = vsub.f32 %v915, %v1083
    %v1096 = vsub.f32 %v989, %v1086
    %v1097 = vsub.f32 %v1063, %v1089
    %v1098 = vmul.f32 %v1090, 1.442695
    %v1099 = vpow.pop %v1098
    %v1100 = vmul.f32 %v1091, 1.442695
    %v1101 = vpow.pop %v1100
    %v1102 = vmul.f32 %v1092, 1.442695
    %v1103 = vpow.pop %v1102
    %v1104 = vmul.f32 %v1093, 1.442695
    %v1105 = vpow.pop %v1104
    %v1106 = vmul.f32 %v1094, 1.442695
    %v1107 = vpow.pop %v1106
    %v1108 = vmul.f32 %v1095, 1.442695
    %v1109 = vpow.pop %v1108
    %v1110 = vmul.f32 %v1096, 1.442695
    %v1111 = vpow.pop %v1110
    %v1112 = vmul.f32 %v1097, 1.442695
    %v1113 = vpow.pop %v1112
    %v1114 = vsel %vm473, %v1099, 0.0
    %1115 = vadd.xlane.f32.xlu0 %v1114
    %v1116 = vpop.xlane.xlu0 %1115
    %v1117 = vsel %vm473, %v1101, 0.0
    %1118 = vadd.xlane.f32.xlu0 %v1117
    %v1119 = vpop.xlane.xlu0 %1118
    %v1120 = vsel %vm473, %v1103, 0.0
    %1121 = vadd.xlane.f32.xlu0 %v1120
    %v1122 = vpop.xlane.xlu0 %1121
    %v1123 = vsel %vm473, %v1105, 0.0
    %1124 = vadd.xlane.f32.xlu0 %v1123
    %v1125 = vpop.xlane.xlu0 %1124
    %v1126 = vsel %vm473, %v1107, 0.0
    %1127 = vadd.xlane.f32.xlu0 %v1126
    %v1128 = vpop.xlane.xlu0 %1127
    %v1129 = vsel %vm473, %v1109, 0.0
    %1130 = vadd.xlane.f32.xlu0 %v1129
    %v1131 = vpop.xlane.xlu0 %1130
    %v1132 = vsel %vm473, %v1111, 0.0
    %1133 = vadd.xlane.f32.xlu0 %v1132
    %v1134 = vpop.xlane.xlu0 %1133
    %v1135 = vsel %vm473, %v1113, 0.0
    %1136 = vadd.xlane.f32.xlu0 %v1135
    %v1137 = vpop.xlane.xlu0 %1136
    %v1138 = vrcp.pop %v1116
    %v1139 = vrcp.pop %v1119
    %v1140 = vrcp.pop %v1122
    %v1141 = vrcp.pop %v1125
    %v1142 = vrcp.pop %v1128
    %v1143 = vrcp.pop %v1131
    %v1144 = vrcp.pop %v1134
    %v1145 = vrcp.pop %v1137
    %1146 = vrot.lane.b32.xlu0 %v437, 96
    %v1147 = vpop.permute.xlu0 %1146
    %v1150 = vsel %vm473, %v1099, 0
    %1152 = vmatprep.subr.mxu0 0.0
    %1153 = vmatpush1.msra.mxu0 %v1147
    %1154 = vmatprep.subr.mxu0 0.0
    %1155 = vmatpush1.msra.mxu0 0.0
    %1156 = vmatprep.subr.mxu0 0.0
    %1157 = vmatpush1.msra.mxu0 0.0
    %1158 = vmatprep.subr.mxu0 0.0
    %1159 = vmatpush1.msra.mxu0 0.0
    %1160 = vmatprep.subr.mxu0 0.0
    %1161 = vmatpush1.msra.mxu0 0.0
    %1162 = vmatprep.subr.mxu0 0.0
    %1163 = vmatpush1.msra.mxu0 0.0
    %1164 = vmatprep.subr.mxu0 0.0
    %1165 = vmatpush1.msra.mxu0 0.0
    %1166 = vmatprep.subr.mxu0 0.0
    %1167 = vmatpush1.msra.mxu0 0.0
    %1168 = vmatprep.subr.mxu0 0.0
    %1169 = vmatpush1.msra.mxu0 0.0
    %1170 = vmatprep.subr.mxu0 0.0
    %1171 = vmatpush1.msra.mxu0 0.0
    %1172 = vmatprep.subr.mxu0 0.0
    %1173 = vmatpush1.msra.mxu0 0.0
    %1174 = vmatprep.subr.mxu0 0.0
    %1175 = vmatpush1.msra.mxu0 0.0
    %1176 = vmatprep.subr.mxu0 0.0
    %1177 = vmatpush1.msra.mxu0 0.0
    %1178 = vmatprep.subr.mxu0 0.0
    %1179 = vmatpush1.msra.mxu0 0.0
    %1180 = vmatprep.subr.mxu0 0.0
    %1181 = vmatpush1.msra.mxu0 0.0
    %1182 = vmatprep.subr.mxu0 0.0
    %1183 = vmatpush1.msra.mxu0 0.0
    %1184 = vmatprep.subr.mxu0 0.0
    %1185 = vmatpush1.msra.mxu0 0.0
    %1186 = vmatprep.subr.mxu0 0.0
    %1187 = vmatpush1.msra.mxu0 0.0
    %1188 = vmatprep.subr.mxu0 0.0
    %1189 = vmatpush1.msra.mxu0 0.0
    %1190 = vmatprep.subr.mxu0 0.0
    %1191 = vmatpush1.msra.mxu0 0.0
    %1192 = vmatprep.subr.mxu0 0.0
    %1193 = vmatpush1.msra.mxu0 0.0
    %1194 = vmatprep.subr.mxu0 0.0
    %1195 = vmatpush1.msra.mxu0 0.0
    %1196 = vmatprep.subr.mxu0 0.0
    %1197 = vmatpush1.msra.mxu0 0.0
    %1198 = vmatprep.subr.mxu0 0.0
    %1199 = vmatpush1.msra.mxu0 0.0
    %1200 = vmatprep.subr.mxu0 0.0
    %1201 = vmatpush1.msra.mxu0 0.0
    %1202 = vmatprep.subr.mxu0 0.0
    %1203 = vmatpush1.msra.mxu0 0.0
    %1204 = vmatprep.subr.mxu0 0.0
    %1205 = vmatpush1.msra.mxu0 0.0
    %1206 = vmatprep.subr.mxu0 0.0
    %1207 = vmatpush1.msra.mxu0 0.0
    %1208 = vmatprep.subr.mxu0 0.0
    %1209 = vmatpush1.msra.mxu0 0.0
    %1210 = vmatprep.subr.mxu0 0.0
    %1211 = vmatpush1.msra.mxu0 0.0
    %1212 = vmatprep.subr.mxu0 0.0
    %1213 = vmatpush1.msra.mxu0 0.0
    %1214 = vmatprep.subr.mxu0 0.0
    %1215 = vmatpush1.msra.mxu0 0.0
    %1216 = vmatprep.mubr.f32.mxu0 0.0
    %1217 = vmatmul.mubr.f32.gmra.mrb[0].mxu0 %v1150
    %v1218 = vpop.f32.mrb[0].mxu0
    %v1219 = vadd.f32 0.0, %v1218
    %v1220 = vpop.f32.mrb[0].mxu0
    %1221 = vdwg.mxu0
    %1222 = vrot.lane.b32.xlu0 %v462, 96
    %v1223 = vpop.permute.xlu0 %1222
    %v1226 = vsel %vm473, %v1101, 0
    %1228 = vmatprep.subr.mxu0 0.0
    %1229 = vmatpush1.msra.mxu0 %v1223
    %1230 = vmatprep.subr.mxu0 0.0
    %1231 = vmatpush1.msra.mxu0 0.0
    %1232 = vmatprep.subr.mxu0 0.0
    %1233 = vmatpush1.msra.mxu0 0.0
    %1234 = vmatprep.subr.mxu0 0.0
    %1235 = vmatpush1.msra.mxu0 0.0
    %1236 = vmatprep.subr.mxu0 0.0
    %1237 = vmatpush1.msra.mxu0 0.0
    %1238 = vmatprep.subr.mxu0 0.0
    %1239 = vmatpush1.msra.mxu0 0.0
    %1240 = vmatprep.subr.mxu0 0.0
    %1241 = vmatpush1.msra.mxu0 0.0
    %1242 = vmatprep.subr.mxu0 0.0
    %1243 = vmatpush1.msra.mxu0 0.0
    %1244 = vmatprep.subr.mxu0 0.0
    %1245 = vmatpush1.msra.mxu0 0.0
    %1246 = vmatprep.subr.mxu0 0.0
    %1247 = vmatpush1.msra.mxu0 0.0
    %1248 = vmatprep.subr.mxu0 0.0
    %1249 = vmatpush1.msra.mxu0 0.0
    %1250 = vmatprep.subr.mxu0 0.0
    %1251 = vmatpush1.msra.mxu0 0.0
    %1252 = vmatprep.subr.mxu0 0.0
    %1253 = vmatpush1.msra.mxu0 0.0
    %1254 = vmatprep.subr.mxu0 0.0
    %1255 = vmatpush1.msra.mxu0 0.0
    %1256 = vmatprep.subr.mxu0 0.0
    %1257 = vmatpush1.msra.mxu0 0.0
    %1258 = vmatprep.subr.mxu0 0.0
    %1259 = vmatpush1.msra.mxu0 0.0
    %1260 = vmatprep.subr.mxu0 0.0
    %1261 = vmatpush1.msra.mxu0 0.0
    %1262 = vmatprep.subr.mxu0 0.0
    %1263 = vmatpush1.msra.mxu0 0.0
    %1264 = vmatprep.subr.mxu0 0.0
    %1265 = vmatpush1.msra.mxu0 0.0
    %1266 = vmatprep.subr.mxu0 0.0
    %1267 = vmatpush1.msra.mxu0 0.0
    %1268 = vmatprep.subr.mxu0 0.0
    %1269 = vmatpush1.msra.mxu0 0.0
    %1270 = vmatprep.subr.mxu0 0.0
    %1271 = vmatpush1.msra.mxu0 0.0
    %1272 = vmatprep.subr.mxu0 0.0
    %1273 = vmatpush1.msra.mxu0 0.0
    %1274 = vmatprep.subr.mxu0 0.0
    %1275 = vmatpush1.msra.mxu0 0.0
    %1276 = vmatprep.subr.mxu0 0.0
    %1277 = vmatpush1.msra.mxu0 0.0
    %1278 = vmatprep.subr.mxu0 0.0
    %1279 = vmatpush1.msra.mxu0 0.0
    %1280 = vmatprep.subr.mxu0 0.0
    %1281 = vmatpush1.msra.mxu0 0.0
    %1282 = vmatprep.subr.mxu0 0.0
    %1283 = vmatpush1.msra.mxu0 0.0
    %1284 = vmatprep.subr.mxu0 0.0
    %1285 = vmatpush1.msra.mxu0 0.0
    %1286 = vmatprep.subr.mxu0 0.0
    %1287 = vmatpush1.msra.mxu0 0.0
    %1288 = vmatprep.subr.mxu0 0.0
    %1289 = vmatpush1.msra.mxu0 0.0
    %1290 = vmatprep.subr.mxu0 0.0
    %1291 = vmatpush1.msra.mxu0 0.0
    %1292 = vmatprep.mubr.f32.mxu0 0.0
    %1293 = vmatmul.mubr.f32.gmra.mrb[0].mxu0 %v1226
    %v1294 = vpop.f32.mrb[0].mxu0
    %v1295 = vadd.f32 0.0, %v1294
    %v1296 = vpop.f32.mrb[0].mxu0
    %1297 = vdwg.mxu0
    %1298 = vrot.lane.b32.xlu0 %v466, 96
    %v1299 = vpop.permute.xlu0 %1298
    %v1302 = vsel %vm473, %v1103, 0
    %1304 = vmatprep.subr.mxu0 0.0
    %1305 = vmatpush1.msra.mxu0 %v1299
    %1306 = vmatprep.subr.mxu0 0.0
    %1307 = vmatpush1.msra.mxu0 0.0
    %1308 = vmatprep.subr.mxu0 0.0
    %1309 = vmatpush1.msra.mxu0 0.0
    %1310 = vmatprep.subr.mxu0 0.0
    %1311 = vmatpush1.msra.mxu0 0.0
    %1312 = vmatprep.subr.mxu0 0.0
    %1313 = vmatpush1.msra.mxu0 0.0
    %1314 = vmatprep.subr.mxu0 0.0
    %1315 = vmatpush1.msra.mxu0 0.0
    %1316 = vmatprep.subr.mxu0 0.0
    %1317 = vmatpush1.msra.mxu0 0.0
    %1318 = vmatprep.subr.mxu0 0.0
    %1319 = vmatpush1.msra.mxu0 0.0
    %1320 = vmatprep.subr.mxu0 0.0
    %1321 = vmatpush1.msra.mxu0 0.0
    %1322 = vmatprep.subr.mxu0 0.0
    %1323 = vmatpush1.msra.mxu0 0.0
    %1324 = vmatprep.subr.mxu0 0.0
    %1325 = vmatpush1.msra.mxu0 0.0
    %1326 = vmatprep.subr.mxu0 0.0
    %1327 = vmatpush1.msra.mxu0 0.0
    %1328 = vmatprep.subr.mxu0 0.0
    %1329 = vmatpush1.msra.mxu0 0.0
    %1330 = vmatprep.subr.mxu0 0.0
    %1331 = vmatpush1.msra.mxu0 0.0
    %1332 = vmatprep.subr.mxu0 0.0
    %1333 = vmatpush1.msra.mxu0 0.0
    %1334 = vmatprep.subr.mxu0 0.0
    %1335 = vmatpush1.msra.mxu0 0.0
    %1336 = vmatprep.subr.mxu0 0.0
    %1337 = vmatpush1.msra.mxu0 0.0
    %1338 = vmatprep.subr.mxu0 0.0
    %1339 = vmatpush1.msra.mxu0 0.0
    %1340 = vmatprep.subr.mxu0 0.0
    %1341 = vmatpush1.msra.mxu0 0.0
    %1342 = vmatprep.subr.mxu0 0.0
    %1343 = vmatpush1.msra.mxu0 0.0
    %1344 = vmatprep.subr.mxu0 0.0
    %1345 = vmatpush1.msra.mxu0 0.0
    %1346 = vmatprep.subr.mxu0 0.0
    %1347 = vmatpush1.msra.mxu0 0.0
    %1348 = vmatprep.subr.mxu0 0.0
    %1349 = vmatpush1.msra.mxu0 0.0
    %1350 = vmatprep.subr.mxu0 0.0
    %1351 = vmatpush1.msra.mxu0 0.0
    %1352 = vmatprep.subr.mxu0 0.0
    %1353 = vmatpush1.msra.mxu0 0.0
    %1354 = vmatprep.subr.mxu0 0.0
    %1355 = vmatpush1.msra.mxu0 0.0
    %1356 = vmatprep.subr.mxu0 0.0
    %1357 = vmatpush1.msra.mxu0 0.0
    %1358 = vmatprep.subr.mxu0 0.0
    %1359 = vmatpush1.msra.mxu0 0.0
    %1360 = vmatprep.subr.mxu0 0.0
    %1361 = vmatpush1.msra.mxu0 0.0
    %1362 = vmatprep.subr.mxu0 0.0
    %1363 = vmatpush1.msra.mxu0 0.0
    %1364 = vmatprep.subr.mxu0 0.0
    %1365 = vmatpush1.msra.mxu0 0.0
    %1366 = vmatprep.subr.mxu0 0.0
    %1367 = vmatpush1.msra.mxu0 0.0
    %1368 = vmatprep.mubr.f32.mxu0 0.0
    %1369 = vmatmul.mubr.f32.gmra.mrb[0].mxu0 %v1302
    %v1370 = vpop.f32.mrb[0].mxu0
    %v1371 = vadd.f32 0.0, %v1370
    %v1372 = vpop.f32.mrb[0].mxu0
    %1373 = vdwg.mxu0
    %1374 = vrot.lane.b32.xlu0 %v470, 96
    %v1375 = vpop.permute.xlu0 %1374
    %v1378 = vsel %vm473, %v1105, 0
    %1380 = vmatprep.subr.mxu0 0.0
    %1381 = vmatpush1.msra.mxu0 %v1375
    %1382 = vmatprep.subr.mxu0 0.0
    %1383 = vmatpush1.msra.mxu0 0.0
    %1384 = vmatprep.subr.mxu0 0.0
    %1385 = vmatpush1.msra.mxu0 0.0
    %1386 = vmatprep.subr.mxu0 0.0
    %1387 = vmatpush1.msra.mxu0 0.0
    %1388 = vmatprep.subr.mxu0 0.0
    %1389 = vmatpush1.msra.mxu0 0.0
    %1390 = vmatprep.subr.mxu0 0.0
    %1391 = vmatpush1.msra.mxu0 0.0
    %1392 = vmatprep.subr.mxu0 0.0
    %1393 = vmatpush1.msra.mxu0 0.0
    %1394 = vmatprep.subr.mxu0 0.0
    %1395 = vmatpush1.msra.mxu0 0.0
    %1396 = vmatprep.subr.mxu0 0.0
    %1397 = vmatpush1.msra.mxu0 0.0
    %1398 = vmatprep.subr.mxu0 0.0
    %1399 = vmatpush1.msra.mxu0 0.0
    %1400 = vmatprep.subr.mxu0 0.0
    %1401 = vmatpush1.msra.mxu0 0.0
    %1402 = vmatprep.subr.mxu0 0.0
    %1403 = vmatpush1.msra.mxu0 0.0
    %1404 = vmatprep.subr.mxu0 0.0
    %1405 = vmatpush1.msra.mxu0 0.0
    %1406 = vmatprep.subr.mxu0 0.0
    %1407 = vmatpush1.msra.mxu0 0.0
    %1408 = vmatprep.subr.mxu0 0.0
    %1409 = vmatpush1.msra.mxu0 0.0
    %1410 = vmatprep.subr.mxu0 0.0
    %1411 = vmatpush1.msra.mxu0 0.0
    %1412 = vmatprep.subr.mxu0 0.0
    %1413 = vmatpush1.msra.mxu0 0.0
    %1414 = vmatprep.subr.mxu0 0.0
    %1415 = vmatpush1.msra.mxu0 0.0
    %1416 = vmatprep.subr.mxu0 0.0
    %1417 = vmatpush1.msra.mxu0 0.0
    %1418 = vmatprep.subr.mxu0 0.0
    %1419 = vmatpush1.msra.mxu0 0.0
    %1420 = vmatprep.subr.mxu0 0.0
    %1421 = vmatpush1.msra.mxu0 0.0
    %1422 = vmatprep.subr.mxu0 0.0
    %1423 = vmatpush1.msra.mxu0 0.0
    %1424 = vmatprep.subr.mxu0 0.0
    %1425 = vmatpush1.msra.mxu0 0.0
    %1426 = vmatprep.subr.mxu0 0.0
    %1427 = vmatpush1.msra.mxu0 0.0
    %1428 = vmatprep.subr.mxu0 0.0
    %1429 = vmatpush1.msra.mxu0 0.0
    %1430 = vmatprep.subr.mxu0 0.0
    %1431 = vmatpush1.msra.mxu0 0.0
    %1432 = vmatprep.subr.mxu0 0.0
    %1433 = vmatpush1.msra.mxu0 0.0
    %1434 = vmatprep.subr.mxu0 0.0
    %1435 = vmatpush1.msra.mxu0 0.0
    %1436 = vmatprep.subr.mxu0 0.0
    %1437 = vmatpush1.msra.mxu0 0.0
    %1438 = vmatprep.subr.mxu0 0.0
    %1439 = vmatpush1.msra.mxu0 0.0
    %1440 = vmatprep.subr.mxu0 0.0
    %1441 = vmatpush1.msra.mxu0 0.0
    %1442 = vmatprep.subr.mxu0 0.0
    %1443 = vmatpush1.msra.mxu0 0.0
    %1444 = vmatprep.mubr.f32.mxu0 0.0
    %1445 = vmatmul.mubr.f32.gmra.mrb[0].mxu0 %v1378
    %v1446 = vpop.f32.mrb[0].mxu0
    %v1447 = vadd.f32 0.0, %v1446
    %v1448 = vpop.f32.mrb[0].mxu0
    %1449 = vdwg.mxu0
    %1450 = vrot.lane.b32.xlu0 %v442, 96
    %v1451 = vpop.permute.xlu0 %1450
    %v1454 = vsel %vm473, %v1107, 0
    %1456 = vmatprep.subr.mxu0 0.0
    %1457 = vmatpush1.msra.mxu0 %v1451
    %1458 = vmatprep.subr.mxu0 0.0
    %1459 = vmatpush1.msra.mxu0 0.0
    %1460 = vmatprep.subr.mxu0 0.0
    %1461 = vmatpush1.msra.mxu0 0.0
    %1462 = vmatprep.subr.mxu0 0.0
    %1463 = vmatpush1.msra.mxu0 0.0
    %1464 = vmatprep.subr.mxu0 0.0
    %1465 = vmatpush1.msra.mxu0 0.0
    %1466 = vmatprep.subr.mxu0 0.0
    %1467 = vmatpush1.msra.mxu0 0.0
    %1468 = vmatprep.subr.mxu0 0.0
    %1469 = vmatpush1.msra.mxu0 0.0
    %1470 = vmatprep.subr.mxu0 0.0
    %1471 = vmatpush1.msra.mxu0 0.0
    %1472 = vmatprep.subr.mxu0 0.0
    %1473 = vmatpush1.msra.mxu0 0.0
    %1474 = vmatprep.subr.mxu0 0.0
    %1475 = vmatpush1.msra.mxu0 0.0
    %1476 = vmatprep.subr.mxu0 0.0
    %1477 = vmatpush1.msra.mxu0 0.0
    %1478 = vmatprep.subr.mxu0 0.0
    %1479 = vmatpush1.msra.mxu0 0.0
    %1480 = vmatprep.subr.mxu0 0.0
    %1481 = vmatpush1.msra.mxu0 0.0
    %1482 = vmatprep.subr.mxu0 0.0
    %1483 = vmatpush1.msra.mxu0 0.0
    %1484 = vmatprep.subr.mxu0 0.0
    %1485 = vmatpush1.msra.mxu0 0.0
    %1486 = vmatprep.subr.mxu0 0.0
    %1487 = vmatpush1.msra.mxu0 0.0
    %1488 = vmatprep.subr.mxu0 0.0
    %1489 = vmatpush1.msra.mxu0 0.0
    %1490 = vmatprep.subr.mxu0 0.0
    %1491 = vmatpush1.msra.mxu0 0.0
    %1492 = vmatprep.subr.mxu0 0.0
    %1493 = vmatpush1.msra.mxu0 0.0
    %1494 = vmatprep.subr.mxu0 0.0
    %1495 = vmatpush1.msra.mxu0 0.0
    %1496 = vmatprep.subr.mxu0 0.0
    %1497 = vmatpush1.msra.mxu0 0.0
    %1498 = vmatprep.subr.mxu0 0.0
    %1499 = vmatpush1.msra.mxu0 0.0
    %1500 = vmatprep.subr.mxu0 0.0
    %1501 = vmatpush1.msra.mxu0 0.0
    %1502 = vmatprep.subr.mxu0 0.0
    %1503 = vmatpush1.msra.mxu0 0.0
    %1504 = vmatprep.subr.mxu0 0.0
    %1505 = vmatpush1.msra.mxu0 0.0
    %1506 = vmatprep.subr.mxu0 0.0
    %1507 = vmatpush1.msra.mxu0 0.0
    %1508 = vmatprep.subr.mxu0 0.0
    %1509 = vmatpush1.msra.mxu0 0.0
    %1510 = vmatprep.subr.mxu0 0.0
    %1511 = vmatpush1.msra.mxu0 0.0
    %1512 = vmatprep.subr.mxu0 0.0
    %1513 = vmatpush1.msra.mxu0 0.0
    %1514 = vmatprep.subr.mxu0 0.0
    %1515 = vmatpush1.msra.mxu0 0.0
    %1516 = vmatprep.subr.mxu0 0.0
    %1517 = vmatpush1.msra.mxu0 0.0
    %1518 = vmatprep.subr.mxu0 0.0
    %1519 = vmatpush1.msra.mxu0 0.0
    %1520 = vmatprep.mubr.f32.mxu0 0.0
    %1521 = vmatmul.mubr.f32.gmra.mrb[0].mxu0 %v1454
    %v1522 = vpop.f32.mrb[0].mxu0
    %v1523 = vadd.f32 0.0, %v1522
    %v1524 = vpop.f32.mrb[0].mxu0
    %1525 = vdwg.mxu0
    %1526 = vrot.lane.b32.xlu0 %v464, 96
    %v1527 = vpop.permute.xlu0 %1526
    %v1530 = vsel %vm473, %v1109, 0
    %1532 = vmatprep.subr.mxu0 0.0
    %1533 = vmatpush1.msra.mxu0 %v1527
    %1534 = vmatprep.subr.mxu0 0.0
    %1535 = vmatpush1.msra.mxu0 0.0
    %1536 = vmatprep.subr.mxu0 0.0
    %1537 = vmatpush1.msra.mxu0 0.0
    %1538 = vmatprep.subr.mxu0 0.0
    %1539 = vmatpush1.msra.mxu0 0.0
    %1540 = vmatprep.subr.mxu0 0.0
    %1541 = vmatpush1.msra.mxu0 0.0
    %1542 = vmatprep.subr.mxu0 0.0
    %1543 = vmatpush1.msra.mxu0 0.0
    %1544 = vmatprep.subr.mxu0 0.0
    %1545 = vmatpush1.msra.mxu0 0.0
    %1546 = vmatprep.subr.mxu0 0.0
    %1547 = vmatpush1.msra.mxu0 0.0
    %1548 = vmatprep.subr.mxu0 0.0
    %1549 = vmatpush1.msra.mxu0 0.0
    %1550 = vmatprep.subr.mxu0 0.0
    %1551 = vmatpush1.msra.mxu0 0.0
    %1552 = vmatprep.subr.mxu0 0.0
    %1553 = vmatpush1.msra.mxu0 0.0
    %1554 = vmatprep.subr.mxu0 0.0
    %1555 = vmatpush1.msra.mxu0 0.0
    %1556 = vmatprep.subr.mxu0 0.0
    %1557 = vmatpush1.msra.mxu0 0.0
    %1558 = vmatprep.subr.mxu0 0.0
    %1559 = vmatpush1.msra.mxu0 0.0
    %1560 = vmatprep.subr.mxu0 0.0
    %1561 = vmatpush1.msra.mxu0 0.0
    %1562 = vmatprep.subr.mxu0 0.0
    %1563 = vmatpush1.msra.mxu0 0.0
    %1564 = vmatprep.subr.mxu0 0.0
    %1565 = vmatpush1.msra.mxu0 0.0
    %1566 = vmatprep.subr.mxu0 0.0
    %1567 = vmatpush1.msra.mxu0 0.0
    %1568 = vmatprep.subr.mxu0 0.0
    %1569 = vmatpush1.msra.mxu0 0.0
    %1570 = vmatprep.subr.mxu0 0.0
    %1571 = vmatpush1.msra.mxu0 0.0
    %1572 = vmatprep.subr.mxu0 0.0
    %1573 = vmatpush1.msra.mxu0 0.0
    %1574 = vmatprep.subr.mxu0 0.0
    %1575 = vmatpush1.msra.mxu0 0.0
    %1576 = vmatprep.subr.mxu0 0.0
    %1577 = vmatpush1.msra.mxu0 0.0
    %1578 = vmatprep.subr.mxu0 0.0
    %1579 = vmatpush1.msra.mxu0 0.0
    %1580 = vmatprep.subr.mxu0 0.0
    %1581 = vmatpush1.msra.mxu0 0.0
    %1582 = vmatprep.subr.mxu0 0.0
    %1583 = vmatpush1.msra.mxu0 0.0
    %1584 = vmatprep.subr.mxu0 0.0
    %1585 = vmatpush1.msra.mxu0 0.0
    %1586 = vmatprep.subr.mxu0 0.0
    %1587 = vmatpush1.msra.mxu0 0.0
    %1588 = vmatprep.subr.mxu0 0.0
    %1589 = vmatpush1.msra.mxu0 0.0
    %1590 = vmatprep.subr.mxu0 0.0
    %1591 = vmatpush1.msra.mxu0 0.0
    %1592 = vmatprep.subr.mxu0 0.0
    %1593 = vmatpush1.msra.mxu0 0.0
    %1594 = vmatprep.subr.mxu0 0.0
    %1595 = vmatpush1.msra.mxu0 0.0
    %1596 = vmatprep.mubr.f32.mxu0 0.0
    %1597 = vmatmul.mubr.f32.gmra.mrb[0].mxu0 %v1530
    %v1598 = vpop.f32.mrb[0].mxu0
    %v1599 = vadd.f32 0.0, %v1598
    %v1600 = vpop.f32.mrb[0].mxu0
    %1601 = vdwg.mxu0
    %1602 = vrot.lane.b32.xlu0 %v468, 96
    %v1603 = vpop.permute.xlu0 %1602
    %v1606 = vsel %vm473, %v1111, 0
    %1608 = vmatprep.subr.mxu0 0.0
    %1609 = vmatpush1.msra.mxu0 %v1603
    %1610 = vmatprep.subr.mxu0 0.0
    %1611 = vmatpush1.msra.mxu0 0.0
    %1612 = vmatprep.subr.mxu0 0.0
    %1613 = vmatpush1.msra.mxu0 0.0
    %1614 = vmatprep.subr.mxu0 0.0
    %1615 = vmatpush1.msra.mxu0 0.0
    %1616 = vmatprep.subr.mxu0 0.0
    %1617 = vmatpush1.msra.mxu0 0.0
    %1618 = vmatprep.subr.mxu0 0.0
    %1619 = vmatpush1.msra.mxu0 0.0
    %1620 = vmatprep.subr.mxu0 0.0
    %1621 = vmatpush1.msra.mxu0 0.0
    %1622 = vmatprep.subr.mxu0 0.0
    %1623 = vmatpush1.msra.mxu0 0.0
    %1624 = vmatprep.subr.mxu0 0.0
    %1625 = vmatpush1.msra.mxu0 0.0
    %1626 = vmatprep.subr.mxu0 0.0
    %1627 = vmatpush1.msra.mxu0 0.0
    %1628 = vmatprep.subr.mxu0 0.0
    %1629 = vmatpush1.msra.mxu0 0.0
    %1630 = vmatprep.subr.mxu0 0.0
    %1631 = vmatpush1.msra.mxu0 0.0
    %1632 = vmatprep.subr.mxu0 0.0
    %1633 = vmatpush1.msra.mxu0 0.0
    %1634 = vmatprep.subr.mxu0 0.0
    %1635 = vmatpush1.msra.mxu0 0.0
    %1636 = vmatprep.subr.mxu0 0.0
    %1637 = vmatpush1.msra.mxu0 0.0
    %1638 = vmatprep.subr.mxu0 0.0
    %1639 = vmatpush1.msra.mxu0 0.0
    %1640 = vmatprep.subr.mxu0 0.0
    %1641 = vmatpush1.msra.mxu0 0.0
    %1642 = vmatprep.subr.mxu0 0.0
    %1643 = vmatpush1.msra.mxu0 0.0
    %1644 = vmatprep.subr.mxu0 0.0
    %1645 = vmatpush1.msra.mxu0 0.0
    %1646 = vmatprep.subr.mxu0 0.0
    %1647 = vmatpush1.msra.mxu0 0.0
    %1648 = vmatprep.subr.mxu0 0.0
    %1649 = vmatpush1.msra.mxu0 0.0
    %1650 = vmatprep.subr.mxu0 0.0
    %1651 = vmatpush1.msra.mxu0 0.0
    %1652 = vmatprep.subr.mxu0 0.0
    %1653 = vmatpush1.msra.mxu0 0.0
    %1654 = vmatprep.subr.mxu0 0.0
    %1655 = vmatpush1.msra.mxu0 0.0
    %1656 = vmatprep.subr.mxu0 0.0
    %1657 = vmatpush1.msra.mxu0 0.0
    %1658 = vmatprep.subr.mxu0 0.0
    %1659 = vmatpush1.msra.mxu0 0.0
    %1660 = vmatprep.subr.mxu0 0.0
    %1661 = vmatpush1.msra.mxu0 0.0
    %1662 = vmatprep.subr.mxu0 0.0
    %1663 = vmatpush1.msra.mxu0 0.0
    %1664 = vmatprep.subr.mxu0 0.0
    %1665 = vmatpush1.msra.mxu0 0.0
    %1666 = vmatprep.subr.mxu0 0.0
    %1667 = vmatpush1.msra.mxu0 0.0
    %1668 = vmatprep.subr.mxu0 0.0
    %1669 = vmatpush1.msra.mxu0 0.0
    %1670 = vmatprep.subr.mxu0 0.0
    %1671 = vmatpush1.msra.mxu0 0.0
    %1672 = vmatprep.mubr.f32.mxu0 0.0
    %1673 = vmatmul.mubr.f32.gmra.mrb[0].mxu0 %v1606
    %v1674 = vpop.f32.mrb[0].mxu0
    %v1675 = vadd.f32 0.0, %v1674
    %v1676 = vpop.f32.mrb[0].mxu0
    %1677 = vdwg.mxu0
    %1678 = vrot.lane.b32.xlu0 %v472, 96
    %v1679 = vpop.permute.xlu0 %1678
    %v1682 = vsel %vm473, %v1113, 0
    %1684 = vmatprep.subr.mxu0 0.0
    %1685 = vmatpush1.msra.mxu0 %v1679
    %1686 = vmatprep.subr.mxu0 0.0
    %1687 = vmatpush1.msra.mxu0 0.0
    %1688 = vmatprep.subr.mxu0 0.0
    %1689 = vmatpush1.msra.mxu0 0.0
    %1690 = vmatprep.subr.mxu0 0.0
    %1691 = vmatpush1.msra.mxu0 0.0
    %1692 = vmatprep.subr.mxu0 0.0
    %1693 = vmatpush1.msra.mxu0 0.0
    %1694 = vmatprep.subr.mxu0 0.0
    %1695 = vmatpush1.msra.mxu0 0.0
    %1696 = vmatprep.subr.mxu0 0.0
    %1697 = vmatpush1.msra.mxu0 0.0
    %1698 = vmatprep.subr.mxu0 0.0
    %1699 = vmatpush1.msra.mxu0 0.0
    %1700 = vmatprep.subr.mxu0 0.0
    %1701 = vmatpush1.msra.mxu0 0.0
    %1702 = vmatprep.subr.mxu0 0.0
    %1703 = vmatpush1.msra.mxu0 0.0
    %1704 = vmatprep.subr.mxu0 0.0
    %1705 = vmatpush1.msra.mxu0 0.0
    %1706 = vmatprep.subr.mxu0 0.0
    %1707 = vmatpush1.msra.mxu0 0.0
    %1708 = vmatprep.subr.mxu0 0.0
    %1709 = vmatpush1.msra.mxu0 0.0
    %1710 = vmatprep.subr.mxu0 0.0
    %1711 = vmatpush1.msra.mxu0 0.0
    %1712 = vmatprep.subr.mxu0 0.0
    %1713 = vmatpush1.msra.mxu0 0.0
    %1714 = vmatprep.subr.mxu0 0.0
    %1715 = vmatpush1.msra.mxu0 0.0
    %1716 = vmatprep.subr.mxu0 0.0
    %1717 = vmatpush1.msra.mxu0 0.0
    %1718 = vmatprep.subr.mxu0 0.0
    %1719 = vmatpush1.msra.mxu0 0.0
    %1720 = vmatprep.subr.mxu0 0.0
    %1721 = vmatpush1.msra.mxu0 0.0
    %1722 = vmatprep.subr.mxu0 0.0
    %1723 = vmatpush1.msra.mxu0 0.0
    %1724 = vmatprep.subr.mxu0 0.0
    %1725 = vmatpush1.msra.mxu0 0.0
    %1726 = vmatprep.subr.mxu0 0.0
    %1727 = vmatpush1.msra.mxu0 0.0
    %1728 = vmatprep.subr.mxu0 0.0
    %1729 = vmatpush1.msra.mxu0 0.0
    %1730 = vmatprep.subr.mxu0 0.0
    %1731 = vmatpush1.msra.mxu0 0.0
    %1732 = vmatprep.subr.mxu0 0.0
    %1733 = vmatpush1.msra.mxu0 0.0
    %1734 = vmatprep.subr.mxu0 0.0
    %1735 = vmatpush1.msra.mxu0 0.0
    %1736 = vmatprep.subr.mxu0 0.0
    %1737 = vmatpush1.msra.mxu0 0.0
    %1738 = vmatprep.subr.mxu0 0.0
    %1739 = vmatpush1.msra.mxu0 0.0
    %1740 = vmatprep.subr.mxu0 0.0
    %1741 = vmatpush1.msra.mxu0 0.0
    %1742 = vmatprep.subr.mxu0 0.0
    %1743 = vmatpush1.msra.mxu0 0.0
    %1744 = vmatprep.subr.mxu0 0.0
    %1745 = vmatpush1.msra.mxu0 0.0
    %1746 = vmatprep.subr.mxu0 0.0
    %1747 = vmatpush1.msra.mxu0 0.0
    %1748 = vmatprep.mubr.f32.mxu0 0.0
    %1749 = vmatmul.mubr.f32.gmra.mrb[0].mxu0 %v1682
    %v1750 = vpop.f32.mrb[0].mxu0
    %v1751 = vadd.f32 0.0, %v1750
    %v1752 = vpop.f32.mrb[0].mxu0
    %1753 = vdwg.mxu0
    %v1754 = vmul.f32 %v1219, %v1138
    %v1755 = vmul.f32 %v1295, %v1139
    %v1756 = vmul.f32 %v1371, %v1140
    %v1757 = vmul.f32 %v1447, %v1141
    %v1758 = vmul.f32 %v1523, %v1142
    %v1759 = vmul.f32 %v1599, %v1143
    %v1760 = vmul.f32 %v1675, %v1144
    %v1761 = vmul.f32 %v1751, %v1145
    %1764 = vrot.lane.b32.xlu0 %v1755, 8
    %v1765 = vpop.permute.xlu0 %1764
    %1766 = vrot.lane.b32.xlu0 %v1759, 8
    %v1767 = vpop.permute.xlu0 %1766
    %1772 = vrot.lane.b32.xlu0 %v1756, 16
    %v1773 = vpop.permute.xlu0 %1772
    %1774 = vrot.lane.b32.xlu0 %v1760, 16
    %v1775 = vpop.permute.xlu0 %1774
    %1780 = vrot.lane.b32.xlu0 %v1757, 24
    %v1781 = vpop.permute.xlu0 %1780
    %1782 = vrot.lane.b32.xlu0 %v1761, 24
    %v1783 = vpop.permute.xlu0 %1782
    %v1786 = vsel %vm473, %v1754, %v1765
    %v1787 = vsel %vm473, %v1758, %v1767
    %vm1788 = vcmask 130048
    %v1789 = vsel %vm1788, %v1786, %v1773
    %v1790 = vsel %vm1788, %v1787, %v1775
    %vm1791 = vcmask 195584
    %v1792 = vsel %vm1791, %v1789, %v1781
    %v1793 = vsel %vm1791, %v1790, %v1783
    %v1794 = vld [vmem:[#allocation8] sm:$0xff]
    %v1795 = vld [vmem:[#allocation8 + $0x8] sm:$0xff]
    %v1796 = vld [vmem:[#allocation8 + $0x10] sm:$0xff]
    %v1797 = vld [vmem:[#allocation8 + $0x18] sm:$0xff]
    %1798 = vrot.lane.b32.xlu0 %v265, 32
    %v1799 = vpop.permute.xlu0 %1798
    %v1802 = vsel %vm267, %v1792, 0
    %v1805 = vsel %vm267, %v1793, 0
    %1807 = vmatprep.subr.mxu0 0.0
    %1808 = vmatpush1.msra.mxu0 %v1794
    %1809 = vmatprep.subr.mxu0 0.0
    %1810 = vmatpush1.msra.mxu0 %v1795
    %1811 = vmatprep.subr.mxu0 0.0
    %1812 = vmatpush1.msra.mxu0 %v1796
    %1813 = vmatprep.subr.mxu0 0.0
    %1814 = vmatpush1.msra.mxu0 %v1797
    %1815 = vmatprep.subr.mxu0 0.0
    %1816 = vmatpush1.msra.mxu0 0.0
    %1817 = vmatprep.subr.mxu0 0.0
    %1818 = vmatpush1.msra.mxu0 0.0
    %1819 = vmatprep.subr.mxu0 0.0
    %1820 = vmatpush1.msra.mxu0 0.0
    %1821 = vmatprep.subr.mxu0 0.0
    %1822 = vmatpush1.msra.mxu0 0.0
    %1823 = vmatprep.subr.mxu0 0.0
    %1824 = vmatpush1.msra.mxu0 0.0
    %1825 = vmatprep.subr.mxu0 0.0
    %1826 = vmatpush1.msra.mxu0 0.0
    %1827 = vmatprep.subr.mxu0 0.0
    %1828 = vmatpush1.msra.mxu0 0.0
    %1829 = vmatprep.subr.mxu0 0.0
    %1830 = vmatpush1.msra.mxu0 0.0
    %1831 = vmatprep.subr.mxu0 0.0
    %1832 = vmatpush1.msra.mxu0 0.0
    %1833 = vmatprep.subr.mxu0 0.0
    %1834 = vmatpush1.msra.mxu0 0.0
    %1835 = vmatprep.subr.mxu0 0.0
    %1836 = vmatpush1.msra.mxu0 0.0
    %1837 = vmatprep.subr.mxu0 0.0
    %1838 = vmatpush1.msra.mxu0 0.0
    %1839 = vmatprep.subr.mxu0 0.0
    %1840 = vmatpush1.msra.mxu0 0.0
    %1841 = vmatprep.subr.mxu0 0.0
    %1842 = vmatpush1.msra.mxu0 0.0
    %1843 = vmatprep.subr.mxu0 0.0
    %1844 = vmatpush1.msra.mxu0 0.0
    %1845 = vmatprep.subr.mxu0 0.0
    %1846 = vmatpush1.msra.mxu0 0.0
    %1847 = vmatprep.subr.mxu0 0.0
    %1848 = vmatpush1.msra.mxu0 0.0
    %1849 = vmatprep.subr.mxu0 0.0
    %1850 = vmatpush1.msra.mxu0 0.0
    %1851 = vmatprep.subr.mxu0 0.0
    %1852 = vmatpush1.msra.mxu0 0.0
    %1853 = vmatprep.subr.mxu0 0.0
    %1854 = vmatpush1.msra.mxu0 0.0
    %1855 = vmatprep.subr.mxu0 0.0
    %1856 = vmatpush1.msra.mxu0 0.0
    %1857 = vmatprep.subr.mxu0 0.0
    %1858 = vmatpush1.msra.mxu0 0.0
    %1859 = vmatprep.subr.mxu0 0.0
    %1860 = vmatpush1.msra.mxu0 0.0
    %1861 = vmatprep.subr.mxu0 0.0
    %1862 = vmatpush1.msra.mxu0 0.0
    %1863 = vmatprep.subr.mxu0 0.0
    %1864 = vmatpush1.msra.mxu0 0.0
    %1865 = vmatprep.subr.mxu0 0.0
    %1866 = vmatpush1.msra.mxu0 0.0
    %1867 = vmatprep.subr.mxu0 0.0
    %1868 = vmatpush1.msra.mxu0 0.0
    %1869 = vmatprep.subr.mxu0 0.0
    %1870 = vmatpush1.msra.mxu0 0.0
    %1871 = vmatprep.mubr.f32.mxu0 0.0
    %1872 = vmatmul.mubr.f32.gmra.mrb[0].mxu0 %v1802
    %v1873 = vpop.f32.mrb[0].mxu0
    %v1874 = vadd.f32 %v1799, %v1873
    %v1875 = vpop.f32.mrb[0].mxu0
    %1876 = vmatprep.mubr.f32.mxu0 0.0
    %1877 = vmatmul.mubr.f32.gmra.mrb[0].mxu0 %v1805
    %v1878 = vpop.f32.mrb[0].mxu0
    %v1879 = vadd.f32 %v1799, %v1878
    %v1880 = vpop.f32.mrb[0].mxu0
    %1881 = vdwg.mxu0
    %v1882 = vadd.f32 %v1874, %v197
    %v1883 = vadd.f32 %v1879, %v198
    %v1884 = vsel %vm267, %v1882, 0.0
    %1885 = vadd.xlane.f32.xlu0 %v1884
    %v1886 = vpop.xlane.xlu0 %1885
    %v1887 = vsel %vm267, %v1883, 0.0
    %1888 = vadd.xlane.f32.xlu0 %v1887
    %v1889 = vpop.xlane.xlu0 %1888
    %v1890 = vrcp.pop 32.0
    %v1891 = vmul.f32 %v1886, %v1890
    %v1892 = vmul.f32 %v1889, %v1890
    %v1893 = vsub.f32 %v1882, %v1891
    %v1894 = vsub.f32 %v1883, %v1892
    %v1895 = vmul.f32 %v1893, %v1893
    %v1896 = vmul.f32 %v1894, %v1894
    %v1897 = vsel %vm267, %v1895, 0.0
    %1898 = vadd.xlane.f32.xlu0 %v1897
    %v1899 = vpop.xlane.xlu0 %1898
    %v1900 = vsel %vm267, %v1896, 0.0
    %1901 = vadd.xlane.f32.xlu0 %v1900
    %v1902 = vpop.xlane.xlu0 %1901
    %v1903 = vmul.f32 %v1899, 0.032258064
    %v1904 = vmul.f32 %v1902, 0.032258064
    %v1905 = vadd.f32 %v1903, 1e-12
    %v1906 = vadd.f32 %v1904, 1e-12
    %v1907 = vrsqrt.pop %v1905
    %v1908 = vrsqrt.pop %v1906
    %v1909 = vmul.f32 %v1893, %v1907
    %v1910 = vmul.f32 %v1894, %v1908
    %v1911 = vlaneseq
    %v1912 = vshrl.u32 %v1911, 7
    %v1913 = vsub.s32 0, %v1912
    %v1914 = vrot.slane %v255, %v1913
    %v1915 = vmul.f32 %v1914, %v1909
    %v1916 = vmul.f32 %v1914, %v1910
    %v1917 = vlaneseq
    %v1918 = vshrl.u32 %v1917, 7
    %v1919 = vsub.s32 1, %v1918
    %v1920 = vrot.slane %v255, %v1919
    %v1921 = vadd.f32 %v1915, %v1920
    %v1922 = vadd.f32 %v1916, %v1920
    %v1923 = vld [vmem:[#allocation14] sm:$0x1]
    %v1924 = vld [vmem:[#allocation11] sm:$0xff]
    %v1925 = vld [vmem:[#allocation11 + $0x8] sm:$0xff]
    %v1926 = vld [vmem:[#allocation11 + $0x10] sm:$0xff]
    %v1927 = vld [vmem:[#allocation11 + $0x18] sm:$0xff]
    %v1929 = vlaneseq
    %v1930 = vshrl.u32 %v1929, 7
    %v1931 = vsub.s32 0, %v1930
    %v1932 = vrot.slane %v1923, %v1931
    %v1935 = vsel %vm267, %v1921, 0
    %v1938 = vsel %vm267, %v1922, 0
    %1940 = vmatprep.subr.mxu0 0.0
    %1941 = vmatpush1.msra.mxu0 %v1924
    %1942 = vmatprep.subr.mxu0 0.0
    %1943 = vmatpush1.msra.mxu0 %v1925
    %1944 = vmatprep.subr.mxu0 0.0
    %1945 = vmatpush1.msra.mxu0 %v1926
    %1946 = vmatprep.subr.mxu0 0.0
    %1947 = vmatpush1.msra.mxu0 %v1927
    %1948 = vmatprep.subr.mxu0 0.0
    %1949 = vmatpush1.msra.mxu0 0.0
    %1950 = vmatprep.subr.mxu0 0.0
    %1951 = vmatpush1.msra.mxu0 0.0
    %1952 = vmatprep.subr.mxu0 0.0
    %1953 = vmatpush1.msra.mxu0 0.0
    %1954 = vmatprep.subr.mxu0 0.0
    %1955 = vmatpush1.msra.mxu0 0.0
    %1956 = vmatprep.subr.mxu0 0.0
    %1957 = vmatpush1.msra.mxu0 0.0
    %1958 = vmatprep.subr.mxu0 0.0
    %1959 = vmatpush1.msra.mxu0 0.0
    %1960 = vmatprep.subr.mxu0 0.0
    %1961 = vmatpush1.msra.mxu0 0.0
    %1962 = vmatprep.subr.mxu0 0.0
    %1963 = vmatpush1.msra.mxu0 0.0
    %1964 = vmatprep.subr.mxu0 0.0
    %1965 = vmatpush1.msra.mxu0 0.0
    %1966 = vmatprep.subr.mxu0 0.0
    %1967 = vmatpush1.msra.mxu0 0.0
    %1968 = vmatprep.subr.mxu0 0.0
    %1969 = vmatpush1.msra.mxu0 0.0
    %1970 = vmatprep.subr.mxu0 0.0
    %1971 = vmatpush1.msra.mxu0 0.0
    %1972 = vmatprep.subr.mxu0 0.0
    %1973 = vmatpush1.msra.mxu0 0.0
    %1974 = vmatprep.subr.mxu0 0.0
    %1975 = vmatpush1.msra.mxu0 0.0
    %1976 = vmatprep.subr.mxu0 0.0
    %1977 = vmatpush1.msra.mxu0 0.0
    %1978 = vmatprep.subr.mxu0 0.0
    %1979 = vmatpush1.msra.mxu0 0.0
    %1980 = vmatprep.subr.mxu0 0.0
    %1981 = vmatpush1.msra.mxu0 0.0
    %1982 = vmatprep.subr.mxu0 0.0
    %1983 = vmatpush1.msra.mxu0 0.0
    %1984 = vmatprep.subr.mxu0 0.0
    %1985 = vmatpush1.msra.mxu0 0.0
    %1986 = vmatprep.subr.mxu0 0.0
    %1987 = vmatpush1.msra.mxu0 0.0
    %1988 = vmatprep.subr.mxu0 0.0
    %1989 = vmatpush1.msra.mxu0 0.0
    %1990 = vmatprep.subr.mxu0 0.0
    %1991 = vmatpush1.msra.mxu0 0.0
    %1992 = vmatprep.subr.mxu0 0.0
    %1993 = vmatpush1.msra.mxu0 0.0
    %1994 = vmatprep.subr.mxu0 0.0
    %1995 = vmatpush1.msra.mxu0 0.0
    %1996 = vmatprep.subr.mxu0 0.0
    %1997 = vmatpush1.msra.mxu0 0.0
    %1998 = vmatprep.subr.mxu0 0.0
    %1999 = vmatpush1.msra.mxu0 0.0
    %2000 = vmatprep.subr.mxu0 0.0
    %2001 = vmatpush1.msra.mxu0 0.0
    %2002 = vmatprep.subr.mxu0 0.0
    %2003 = vmatpush1.msra.mxu0 0.0
    %2004 = vmatprep.mubr.f32.mxu0 0.0
    %2005 = vmatmul.mubr.f32.gmra.mrb[0].mxu0 %v1935
    %v2006 = vpop.f32.mrb[0].mxu0
    %v2007 = vadd.f32 %v1932, %v2006
    %v2008 = vpop.f32.mrb[0].mxu0
    %2009 = vmatprep.mubr.f32.mxu0 0.0
    %2010 = vmatmul.mubr.f32.gmra.mrb[0].mxu0 %v1938
    %v2011 = vpop.f32.mrb[0].mxu0
    %v2012 = vadd.f32 %v1932, %v2011
    %v2013 = vpop.f32.mrb[0].mxu0
    %2014 = vdwg.mxu0
    %v2015 = vmul.f32 %v2007, 0.35355338
    %v2016 = vmul.f32 %v2012, 0.35355338
    %v2017 = vcombine.low %v214, %v222
    %v2018 = vcombine.low %v221, %v223
    %v2020 = vunpack.c.l.s4 1983009808
    %v2021 = vunpack.c.0.s8 %v2020
    %v2022 = vlaneseq
    %v2023 = vshrl.u32 %v2022, 7
    %v2024 = vsub.s32 %v2021, %v2023
    %v2025 = vrot.slane %v2017, %v2024
    %v2027 = vunpack.c.l.s4 1983009808
    %v2028 = vunpack.c.0.s8 %v2027
    %v2029 = vlaneseq
    %v2030 = vshrl.u32 %v2029, 7
    %v2031 = vsub.s32 %v2028, %v2030
    %v2032 = vrot.slane %v2018, %v2031
    %v2033 = vcombine.low %v2025, %v2032
    %v2034 = vcombine.low %v230, %v238
    %v2035 = vcombine.low %v246, %v245
    %v2037 = vunpack.c.l.s4 1983009808
    %v2038 = vunpack.c.0.s8 %v2037
    %v2039 = vlaneseq
    %v2040 = vshrl.u32 %v2039, 7
    %v2041 = vsub.s32 %v2038, %v2040
    %v2042 = vrot.slane %v2034, %v2041
    %v2044 = vunpack.c.l.s4 1983009808
    %v2045 = vunpack.c.0.s8 %v2044
    %v2046 = vlaneseq
    %v2047 = vshrl.u32 %v2046, 7
    %v2048 = vsub.s32 %v2045, %v2047
    %v2049 = vrot.slane %v2035, %v2048
    %v2050 = vcombine.low %v2042, %v2049
    %v2051 = vcombine.low %v247, %v254
    %v2053 = vunpack.c.l.s4 1983009808
    %v2054 = vunpack.c.0.s8 %v2053
    %v2055 = vlaneseq
    %v2056 = vshrl.u32 %v2055, 7
    %v2057 = vsub.s32 %v2054, %v2056
    %v2058 = vrot.slane %v2051, %v2057
    %2063 = vrot.lane.b32.xlu0 %v1924, 96
    %v2064 = vpop.permute.xlu0 %2063
    %2065 = vrot.lane.b32.xlu0 %v1925, 96
    %v2066 = vpop.permute.xlu0 %2065
    %2067 = vrot.lane.b32.xlu0 %v1926, 96
    %v2068 = vpop.permute.xlu0 %2067
    %2069 = vrot.lane.b32.xlu0 %v1927, 96
    %v2070 = vpop.permute.xlu0 %2069
    %2075 = vrot.lane.b32.xlu0 %v1932, 96
    %v2076 = vpop.permute.xlu0 %2075
    %v2078 = vsel %vm267, %v2033, 0
    %v2080 = vsel %vm267, %v2050, 0
    %v2082 = vsel %vm267, %v2058, 0
    %2084 = vmatprep.subr.mxu0 0.0
    %2085 = vmatpush1.msra.mxu0 %v2064
    %2086 = vmatprep.subr.mxu0 0.0
    %2087 = vmatpush1.msra.mxu0 %v2066
    %2088 = vmatprep.subr.mxu0 0.0
    %2089 = vmatpush1.msra.mxu0 %v2068
    %2090 = vmatprep.subr.mxu0 0.0
    %2091 = vmatpush1.msra.mxu0 %v2070
    %2092 = vmatprep.subr.mxu0 0.0
    %2093 = vmatpush1.msra.mxu0 0.0
    %2094 = vmatprep.subr.mxu0 0.0
    %2095 = vmatpush1.msra.mxu0 0.0
    %2096 = vmatprep.subr.mxu0 0.0
    %2097 = vmatpush1.msra.mxu0 0.0
    %2098 = vmatprep.subr.mxu0 0.0
    %2099 = vmatpush1.msra.mxu0 0.0
    %2100 = vmatprep.subr.mxu0 0.0
    %2101 = vmatpush1.msra.mxu0 0.0
    %2102 = vmatprep.subr.mxu0 0.0
    %2103 = vmatpush1.msra.mxu0 0.0
    %2104 = vmatprep.subr.mxu0 0.0
    %2105 = vmatpush1.msra.mxu0 0.0
    %2106 = vmatprep.subr.mxu0 0.0
    %2107 = vmatpush1.msra.mxu0 0.0
    %2108 = vmatprep.subr.mxu0 0.0
    %2109 = vmatpush1.msra.mxu0 0.0
    %2110 = vmatprep.subr.mxu0 0.0
    %2111 = vmatpush1.msra.mxu0 0.0
    %2112 = vmatprep.subr.mxu0 0.0
    %2113 = vmatpush1.msra.mxu0 0.0
    %2114 = vmatprep.subr.mxu0 0.0
    %2115 = vmatpush1.msra.mxu0 0.0
    %2116 = vmatprep.subr.mxu0 0.0
    %2117 = vmatpush1.msra.mxu0 0.0
    %2118 = vmatprep.subr.mxu0 0.0
    %2119 = vmatpush1.msra.mxu0 0.0
    %2120 = vmatprep.subr.mxu0 0.0
    %2121 = vmatpush1.msra.mxu0 0.0
    %2122 = vmatprep.subr.mxu0 0.0
    %2123 = vmatpush1.msra.mxu0 0.0
    %2124 = vmatprep.subr.mxu0 0.0
    %2125 = vmatpush1.msra.mxu0 0.0
    %2126 = vmatprep.subr.mxu0 0.0
    %2127 = vmatpush1.msra.mxu0 0.0
    %2128 = vmatprep.subr.mxu0 0.0
    %2129 = vmatpush1.msra.mxu0 0.0
    %2130 = vmatprep.subr.mxu0 0.0
    %2131 = vmatpush1.msra.mxu0 0.0
    %2132 = vmatprep.subr.mxu0 0.0
    %2133 = vmatpush1.msra.mxu0 0.0
    %2134 = vmatprep.subr.mxu0 0.0
    %2135 = vmatpush1.msra.mxu0 0.0
    %2136 = vmatprep.subr.mxu0 0.0
    %2137 = vmatpush1.msra.mxu0 0.0
    %2138 = vmatprep.subr.mxu0 0.0
    %2139 = vmatpush1.msra.mxu0 0.0
    %2140 = vmatprep.subr.mxu0 0.0
    %2141 = vmatpush1.msra.mxu0 0.0
    %2142 = vmatprep.subr.mxu0 0.0
    %2143 = vmatpush1.msra.mxu0 0.0
    %2144 = vmatprep.subr.mxu0 0.0
    %2145 = vmatpush1.msra.mxu0 0.0
    %2146 = vmatprep.subr.mxu0 0.0
    %2147 = vmatpush1.msra.mxu0 0.0
    %2148 = vmatprep.mubr.f32.mxu0 0.0
    %2149 = vmatmul.mubr.f32.gmra.mrb[0].mxu0 %v2078
    %v2150 = vpop.f32.mrb[0].mxu0
    %v2151 = vadd.f32 %v2076, %v2150
    %v2152 = vpop.f32.mrb[0].mxu0
    %2153 = vmatprep.mubr.f32.mxu0 0.0
    %2154 = vmatmul.mubr.f32.gmra.mrb[0].mxu0 %v2080
    %v2155 = vpop.f32.mrb[0].mxu0
    %v2156 = vadd.f32 %v2076, %v2155
    %v2157 = vpop.f32.mrb[0].mxu0
    %2158 = vmatprep.mubr.f32.mxu0 0.0
    %2159 = vmatmul.mubr.f32.gmra.mrb[0].mxu0 %v2082
    %v2160 = vpop.f32.mrb[0].mxu0
    %v2161 = vadd.f32 %v2076, %v2160
    %v2162 = vpop.f32.mrb[0].mxu0
    %2163 = vdwg.mxu0
    %2166 = vrot.lane.b32.xlu0 %v2015, 120
    %v2167 = vpop.permute.xlu0 %2166
    %2168 = vrot.lane.b32.xlu0 %v2016, 120
    %v2169 = vpop.permute.xlu0 %2168
    %2170 = vrot.lane.b32.xlu0 %v2015, 112
    %v2171 = vpop.permute.xlu0 %2170
    %2172 = vrot.lane.b32.xlu0 %v2016, 112
    %v2173 = vpop.permute.xlu0 %2172
    %2174 = vrot.lane.b32.xlu0 %v2015, 104
    %v2175 = vpop.permute.xlu0 %2174
    %2176 = vrot.lane.b32.xlu0 %v2016, 104
    %v2177 = vpop.permute.xlu0 %2176
    %v2181 = vcombine.high %v2151, %v2151
    %v2183 = vunpack.c.l.s4 1983009808
    %v2184 = vunpack.c.0.s8 %v2183
    %v2185 = vlaneseq
    %v2186 = vshrl.u32 %v2185, 7
    %v2187 = vsub.s32 %v2184, %v2186
    %v2188 = vrot.slane %v2151, %v2187
    %v2190 = vunpack.c.l.s4 1983009808
    %v2191 = vunpack.c.0.s8 %v2190
    %v2192 = vlaneseq
    %v2193 = vshrl.u32 %v2192, 7
    %v2194 = vsub.s32 %v2191, %v2193
    %v2195 = vrot.slane %v2181, %v2194
    %v2196 = vcombine.high %v2188, %v2188
    %v2197 = vcombine.high %v2195, %v2195
    %v2198 = vcombine.high %v2156, %v2156
    %v2200 = vunpack.c.l.s4 1983009808
    %v2201 = vunpack.c.0.s8 %v2200
    %v2202 = vlaneseq
    %v2203 = vshrl.u32 %v2202, 7
    %v2204 = vsub.s32 %v2201, %v2203
    %v2205 = vrot.slane %v2156, %v2204
    %v2207 = vunpack.c.l.s4 1983009808
    %v2208 = vunpack.c.0.s8 %v2207
    %v2209 = vlaneseq
    %v2210 = vshrl.u32 %v2209, 7
    %v2211 = vsub.s32 %v2208, %v2210
    %v2212 = vrot.slane %v2198, %v2211
    %v2213 = vcombine.high %v2205, %v2205
    %v2214 = vcombine.high %v2212, %v2212
    %v2216 = vunpack.c.l.s4 1983009808
    %v2217 = vunpack.c.0.s8 %v2216
    %v2218 = vlaneseq
    %v2219 = vshrl.u32 %v2218, 7
    %v2220 = vsub.s32 %v2217, %v2219
    %v2221 = vrot.slane %v2161, %v2220
    %v2222 = vcombine.high %v2221, %v2221
    %2223 = vrot.lane.b32.xlu0 %v2188, 120
    %v2224 = vpop.permute.xlu0 %2223
    %2225 = vrot.lane.b32.xlu0 %v2196, 120
    %v2226 = vpop.permute.xlu0 %2225
    %2227 = vrot.lane.b32.xlu0 %v2195, 120
    %v2228 = vpop.permute.xlu0 %2227
    %2229 = vrot.lane.b32.xlu0 %v2197, 120
    %v2230 = vpop.permute.xlu0 %2229
    %2231 = vrot.lane.b32.xlu0 %v2205, 120
    %v2232 = vpop.permute.xlu0 %2231
    %2233 = vrot.lane.b32.xlu0 %v2213, 120
    %v2234 = vpop.permute.xlu0 %2233
    %2235 = vrot.lane.b32.xlu0 %v2212, 120
    %v2236 = vpop.permute.xlu0 %2235
    %2237 = vrot.lane.b32.xlu0 %v2214, 120
    %v2238 = vpop.permute.xlu0 %2237
    %2239 = vrot.lane.b32.xlu0 %v2221, 120
    %v2240 = vpop.permute.xlu0 %2239
    %2241 = vrot.lane.b32.xlu0 %v2222, 120
    %v2242 = vpop.permute.xlu0 %2241
    %2243 = vrot.lane.b32.xlu0 %v2188, 112
    %v2244 = vpop.permute.xlu0 %2243
    %2245 = vrot.lane.b32.xlu0 %v2196, 112
    %v2246 = vpop.permute.xlu0 %2245
    %2247 = vrot.lane.b32.xlu0 %v2195, 112
    %v2248 = vpop.permute.xlu0 %2247
    %2249 = vrot.lane.b32.xlu0 %v2197, 112
    %v2250 = vpop.permute.xlu0 %2249
    %2251 = vrot.lane.b32.xlu0 %v2205, 112
    %v2252 = vpop.permute.xlu0 %2251
    %2253 = vrot.lane.b32.xlu0 %v2213, 112
    %v2254 = vpop.permute.xlu0 %2253
    %2255 = vrot.lane.b32.xlu0 %v2212, 112
    %v2256 = vpop.permute.xlu0 %2255
    %2257 = vrot.lane.b32.xlu0 %v2214, 112
    %v2258 = vpop.permute.xlu0 %2257
    %2259 = vrot.lane.b32.xlu0 %v2221, 112
    %v2260 = vpop.permute.xlu0 %2259
    %2261 = vrot.lane.b32.xlu0 %v2222, 112
    %v2262 = vpop.permute.xlu0 %2261
    %2263 = vrot.lane.b32.xlu0 %v2188, 104
    %v2264 = vpop.permute.xlu0 %2263
    %2265 = vrot.lane.b32.xlu0 %v2196, 104
    %v2266 = vpop.permute.xlu0 %2265
    %2267 = vrot.lane.b32.xlu0 %v2195, 104
    %v2268 = vpop.permute.xlu0 %2267
    %2269 = vrot.lane.b32.xlu0 %v2197, 104
    %v2270 = vpop.permute.xlu0 %2269
    %2271 = vrot.lane.b32.xlu0 %v2205, 104
    %v2272 = vpop.permute.xlu0 %2271
    %2273 = vrot.lane.b32.xlu0 %v2213, 104
    %v2274 = vpop.permute.xlu0 %2273
    %2275 = vrot.lane.b32.xlu0 %v2212, 104
    %v2276 = vpop.permute.xlu0 %2275
    %2277 = vrot.lane.b32.xlu0 %v2214, 104
    %v2278 = vpop.permute.xlu0 %2277
    %2279 = vrot.lane.b32.xlu0 %v2221, 104
    %v2280 = vpop.permute.xlu0 %2279
    %2281 = vrot.lane.b32.xlu0 %v2222, 104
    %v2282 = vpop.permute.xlu0 %2281
    %v2283 = vcombine.low %v2188, %v2196
    %v2284 = vcombine.low %v2195, %v2197
    %v2286 = vunpack.c.l.s4 1983009808
    %v2287 = vunpack.c.0.s8 %v2286
    %v2288 = vlaneseq
    %v2289 = vshrl.u32 %v2288, 7
    %v2290 = vsub.s32 %v2287, %v2289
    %v2291 = vrot.slane %v2283, %v2290
    %v2293 = vunpack.c.l.s4 1983009808
    %v2294 = vunpack.c.0.s8 %v2293
    %v2295 = vlaneseq
    %v2296 = vshrl.u32 %v2295, 7
    %v2297 = vsub.s32 %v2294, %v2296
    %v2298 = vrot.slane %v2284, %v2297
    %v2299 = vcombine.low %v2291, %v2298
    %v2301 = vunpack.c.l.s4 1983009808
    %v2302 = vunpack.c.0.s8 %v2301
    %v2303 = vlaneseq
    %v2304 = vshrl.u32 %v2303, 7
    %v2305 = vsub.s32 %v2302, %v2304
    %v2306 = vrot.slane %v2205, %v2305
    %v2307 = vsel %vm473, %v2015, 0
    %v2309 = vsel %vm473, %v2299, 0
    %v2311 = vsel %vm473, %v2306, 0
    %2313 = vmatprep.subr.mxu0 0.0
    %2314 = vmatpush1.xpose.msra.mxu0 %v2309
    %2315 = vmatprep.subr.mxu0 0.0
    %2316 = vmatpush1.xpose.msra.mxu0 %v2311
    %2317 = vmatprep.subr.mxu0 0.0
    %2318 = vmatpush1.xpose.msra.mxu0 0.0
    %2319 = vmatprep.subr.mxu0 0.0
    %2320 = vmatpush1.xpose.msra.mxu0 0.0
    %2321 = vmatprep.subr.mxu0 0.0
    %2322 = vmatpush1.xpose.msra.mxu0 0.0
    %2323 = vmatprep.subr.mxu0 0.0
    %2324 = vmatpush1.xpose.msra.mxu0 0.0
    %2325 = vmatprep.subr.mxu0 0.0
    %2326 = vmatpush1.xpose.msra.mxu0 0.0
    %2327 = vmatprep.subr.mxu0 0.0
    %2328 = vmatpush1.xpose.msra.mxu0 0.0
    %2329 = vmatprep.subr.mxu0 0.0
    %2330 = vmatpush1.xpose.msra.mxu0 0.0
    %2331 = vmatprep.subr.mxu0 0.0
    %2332 = vmatpush1.xpose.msra.mxu0 0.0
    %2333 = vmatprep.subr.mxu0 0.0
    %2334 = vmatpush1.xpose.msra.mxu0 0.0
    %2335 = vmatprep.subr.mxu0 0.0
    %2336 = vmatpush1.xpose.msra.mxu0 0.0
    %2337 = vmatprep.subr.mxu0 0.0
    %2338 = vmatpush1.xpose.msra.mxu0 0.0
    %2339 = vmatprep.subr.mxu0 0.0
    %2340 = vmatpush1.xpose.msra.mxu0 0.0
    %2341 = vmatprep.subr.mxu0 0.0
    %2342 = vmatpush1.xpose.msra.mxu0 0.0
    %2343 = vmatprep.subr.mxu0 0.0
    %2344 = vmatpush1.xpose.msra.mxu0 0.0
    %2345 = vmatprep.subr.mxu0 0.0
    %2346 = vmatpush1.xpose.msra.mxu0 0.0
    %2347 = vmatprep.subr.mxu0 0.0
    %2348 = vmatpush1.xpose.msra.mxu0 0.0
    %2349 = vmatprep.subr.mxu0 0.0
    %2350 = vmatpush1.xpose.msra.mxu0 0.0
    %2351 = vmatprep.subr.mxu0 0.0
    %2352 = vmatpush1.xpose.msra.mxu0 0.0
    %2353 = vmatprep.subr.mxu0 0.0
    %2354 = vmatpush1.xpose.msra.mxu0 0.0
    %2355 = vmatprep.subr.mxu0 0.0
    %2356 = vmatpush1.xpose.msra.mxu0 0.0
    %2357 = vmatprep.subr.mxu0 0.0
    %2358 = vmatpush1.xpose.msra.mxu0 0.0
    %2359 = vmatprep.subr.mxu0 0.0
    %2360 = vmatpush1.xpose.msra.mxu0 0.0
    %2361 = vmatprep.subr.mxu0 0.0
    %2362 = vmatpush1.xpose.msra.mxu0 0.0
    %2363 = vmatprep.subr.mxu0 0.0
    %2364 = vmatpush1.xpose.msra.mxu0 0.0
    %2365 = vmatprep.subr.mxu0 0.0
    %2366 = vmatpush1.xpose.msra.mxu0 0.0
    %2367 = vmatprep.subr.mxu0 0.0
    %2368 = vmatpush1.xpose.msra.mxu0 0.0
    %2369 = vmatprep.subr.mxu0 0.0
    %2370 = vmatpush1.xpose.msra.mxu0 0.0
    %2371 = vmatprep.subr.mxu0 0.0
    %2372 = vmatpush1.xpose.msra.mxu0 0.0
    %2373 = vmatprep.subr.mxu0 0.0
    %2374 = vmatpush1.xpose.msra.mxu0 0.0
    %2375 = vmatprep.subr.mxu0 0.0
    %2376 = vmatpush1.xpose.msra.mxu0 0.0
    %2377 = vmatprep.mubr.f32.mxu0 0.0
    %2378 = vmatmul.mubr.f32.gmra.mrb[0].mxu0 %v2307
    %v2379 = vpop.f32.mrb[0].mxu0
    %v2380 = vadd.f32 0.0, %v2379
    %v2381 = vpop.f32.mrb[0].mxu0
    %2382 = vdwg.mxu0
    %v2383 = vcombine.low %v2224, %v2226
    %v2384 = vcombine.low %v2228, %v2230
    %v2386 = vunpack.c.l.s4 1983009808
    %v2387 = vunpack.c.0.s8 %v2386
    %v2388 = vlaneseq
    %v2389 = vshrl.u32 %v2388, 7
    %v2390 = vsub.s32 %v2387, %v2389
    %v2391 = vrot.slane %v2383, %v2390
    %v2393 = vunpack.c.l.s4 1983009808
    %v2394 = vunpack.c.0.s8 %v2393
    %v2395 = vlaneseq
    %v2396 = vshrl.u32 %v2395, 7
    %v2397 = vsub.s32 %v2394, %v2396
    %v2398 = vrot.slane %v2384, %v2397
    %v2399 = vcombine.low %v2391, %v2398
    %v2401 = vunpack.c.l.s4 1983009808
    %v2402 = vunpack.c.0.s8 %v2401
    %v2403 = vlaneseq
    %v2404 = vshrl.u32 %v2403, 7
    %v2405 = vsub.s32 %v2402, %v2404
    %v2406 = vrot.slane %v2232, %v2405
    %v2407 = vsel %vm473, %v2167, 0
    %v2409 = vsel %vm473, %v2399, 0
    %v2411 = vsel %vm473, %v2406, 0
    %2413 = vmatprep.subr.mxu0 0.0
    %2414 = vmatpush1.xpose.msra.mxu0 %v2409
    %2415 = vmatprep.subr.mxu0 0.0
    %2416 = vmatpush1.xpose.msra.mxu0 %v2411
    %2417 = vmatprep.subr.mxu0 0.0
    %2418 = vmatpush1.xpose.msra.mxu0 0.0
    %2419 = vmatprep.subr.mxu0 0.0
    %2420 = vmatpush1.xpose.msra.mxu0 0.0
    %2421 = vmatprep.subr.mxu0 0.0
    %2422 = vmatpush1.xpose.msra.mxu0 0.0
    %2423 = vmatprep.subr.mxu0 0.0
    %2424 = vmatpush1.xpose.msra.mxu0 0.0
    %2425 = vmatprep.subr.mxu0 0.0
    %2426 = vmatpush1.xpose.msra.mxu0 0.0
    %2427 = vmatprep.subr.mxu0 0.0
    %2428 = vmatpush1.xpose.msra.mxu0 0.0
    %2429 = vmatprep.subr.mxu0 0.0
    %2430 = vmatpush1.xpose.msra.mxu0 0.0
    %2431 = vmatprep.subr.mxu0 0.0
    %2432 = vmatpush1.xpose.msra.mxu0 0.0
    %2433 = vmatprep.subr.mxu0 0.0
    %2434 = vmatpush1.xpose.msra.mxu0 0.0
    %2435 = vmatprep.subr.mxu0 0.0
    %2436 = vmatpush1.xpose.msra.mxu0 0.0
    %2437 = vmatprep.subr.mxu0 0.0
    %2438 = vmatpush1.xpose.msra.mxu0 0.0
    %2439 = vmatprep.subr.mxu0 0.0
    %2440 = vmatpush1.xpose.msra.mxu0 0.0
    %2441 = vmatprep.subr.mxu0 0.0
    %2442 = vmatpush1.xpose.msra.mxu0 0.0
    %2443 = vmatprep.subr.mxu0 0.0
    %2444 = vmatpush1.xpose.msra.mxu0 0.0
    %2445 = vmatprep.subr.mxu0 0.0
    %2446 = vmatpush1.xpose.msra.mxu0 0.0
    %2447 = vmatprep.subr.mxu0 0.0
    %2448 = vmatpush1.xpose.msra.mxu0 0.0
    %2449 = vmatprep.subr.mxu0 0.0
    %2450 = vmatpush1.xpose.msra.mxu0 0.0
    %2451 = vmatprep.subr.mxu0 0.0
    %2452 = vmatpush1.xpose.msra.mxu0 0.0
    %2453 = vmatprep.subr.mxu0 0.0
    %2454 = vmatpush1.xpose.msra.mxu0 0.0
    %2455 = vmatprep.subr.mxu0 0.0
    %2456 = vmatpush1.xpose.msra.mxu0 0.0
    %2457 = vmatprep.subr.mxu0 0.0
    %2458 = vmatpush1.xpose.msra.mxu0 0.0
    %2459 = vmatprep.subr.mxu0 0.0
    %2460 = vmatpush1.xpose.msra.mxu0 0.0
    %2461 = vmatprep.subr.mxu0 0.0
    %2462 = vmatpush1.xpose.msra.mxu0 0.0
    %2463 = vmatprep.subr.mxu0 0.0
    %2464 = vmatpush1.xpose.msra.mxu0 0.0
    %2465 = vmatprep.subr.mxu0 0.0
    %2466 = vmatpush1.xpose.msra.mxu0 0.0
    %2467 = vmatprep.subr.mxu0 0.0
    %2468 = vmatpush1.xpose.msra.mxu0 0.0
    %2469 = vmatprep.subr.mxu0 0.0
    %2470 = vmatpush1.xpose.msra.mxu0 0.0
    %2471 = vmatprep.subr.mxu0 0.0
    %2472 = vmatpush1.xpose.msra.mxu0 0.0
    %2473 = vmatprep.subr.mxu0 0.0
    %2474 = vmatpush1.xpose.msra.mxu0 0.0
    %2475 = vmatprep.subr.mxu0 0.0
    %2476 = vmatpush1.xpose.msra.mxu0 0.0
    %2477 = vmatprep.mubr.f32.mxu0 0.0
    %2478 = vmatmul.mubr.f32.gmra.mrb[0].mxu0 %v2407
    %v2479 = vpop.f32.mrb[0].mxu0
    %v2480 = vadd.f32 0.0, %v2479
    %v2481 = vpop.f32.mrb[0].mxu0
    %2482 = vdwg.mxu0
    %v2483 = vcombine.low %v2244, %v2246
    %v2484 = vcombine.low %v2248, %v2250
    %v2486 = vunpack.c.l.s4 1983009808
    %v2487 = vunpack.c.0.s8 %v2486
    %v2488 = vlaneseq
    %v2489 = vshrl.u32 %v2488, 7
    %v2490 = vsub.s32 %v2487, %v2489
    %v2491 = vrot.slane %v2483, %v2490
    %v2493 = vunpack.c.l.s4 1983009808
    %v2494 = vunpack.c.0.s8 %v2493
    %v2495 = vlaneseq
    %v2496 = vshrl.u32 %v2495, 7
    %v2497 = vsub.s32 %v2494, %v2496
    %v2498 = vrot.slane %v2484, %v2497
    %v2499 = vcombine.low %v2491, %v2498
    %v2501 = vunpack.c.l.s4 1983009808
    %v2502 = vunpack.c.0.s8 %v2501
    %v2503 = vlaneseq
    %v2504 = vshrl.u32 %v2503, 7
    %v2505 = vsub.s32 %v2502, %v2504
    %v2506 = vrot.slane %v2252, %v2505
    %v2507 = vsel %vm473, %v2171, 0
    %v2509 = vsel %vm473, %v2499, 0
    %v2511 = vsel %vm473, %v2506, 0
    %2513 = vmatprep.subr.mxu0 0.0
    %2514 = vmatpush1.xpose.msra.mxu0 %v2509
    %2515 = vmatprep.subr.mxu0 0.0
    %2516 = vmatpush1.xpose.msra.mxu0 %v2511
    %2517 = vmatprep.subr.mxu0 0.0
    %2518 = vmatpush1.xpose.msra.mxu0 0.0
    %2519 = vmatprep.subr.mxu0 0.0
    %2520 = vmatpush1.xpose.msra.mxu0 0.0
    %2521 = vmatprep.subr.mxu0 0.0
    %2522 = vmatpush1.xpose.msra.mxu0 0.0
    %2523 = vmatprep.subr.mxu0 0.0
    %2524 = vmatpush1.xpose.msra.mxu0 0.0
    %2525 = vmatprep.subr.mxu0 0.0
    %2526 = vmatpush1.xpose.msra.mxu0 0.0
    %2527 = vmatprep.subr.mxu0 0.0
    %2528 = vmatpush1.xpose.msra.mxu0 0.0
    %2529 = vmatprep.subr.mxu0 0.0
    %2530 = vmatpush1.xpose.msra.mxu0 0.0
    %2531 = vmatprep.subr.mxu0 0.0
    %2532 = vmatpush1.xpose.msra.mxu0 0.0
    %2533 = vmatprep.subr.mxu0 0.0
    %2534 = vmatpush1.xpose.msra.mxu0 0.0
    %2535 = vmatprep.subr.mxu0 0.0
    %2536 = vmatpush1.xpose.msra.mxu0 0.0
    %2537 = vmatprep.subr.mxu0 0.0
    %2538 = vmatpush1.xpose.msra.mxu0 0.0
    %2539 = vmatprep.subr.mxu0 0.0
    %2540 = vmatpush1.xpose.msra.mxu0 0.0
    %2541 = vmatprep.subr.mxu0 0.0
    %2542 = vmatpush1.xpose.msra.mxu0 0.0
    %2543 = vmatprep.subr.mxu0 0.0
    %2544 = vmatpush1.xpose.msra.mxu0 0.0
    %2545 = vmatprep.subr.mxu0 0.0
    %2546 = vmatpush1.xpose.msra.mxu0 0.0
    %2547 = vmatprep.subr.mxu0 0.0
    %2548 = vmatpush1.xpose.msra.mxu0 0.0
    %2549 = vmatprep.subr.mxu0 0.0
    %2550 = vmatpush1.xpose.msra.mxu0 0.0
    %2551 = vmatprep.subr.mxu0 0.0
    %2552 = vmatpush1.xpose.msra.mxu0 0.0
    %2553 = vmatprep.subr.mxu0 0.0
    %2554 = vmatpush1.xpose.msra.mxu0 0.0
    %2555 = vmatprep.subr.mxu0 0.0
    %2556 = vmatpush1.xpose.msra.mxu0 0.0
    %2557 = vmatprep.subr.mxu0 0.0
    %2558 = vmatpush1.xpose.msra.mxu0 0.0
    %2559 = vmatprep.subr.mxu0 0.0
    %2560 = vmatpush1.xpose.msra.mxu0 0.0
    %2561 = vmatprep.subr.mxu0 0.0
    %2562 = vmatpush1.xpose.msra.mxu0 0.0
    %2563 = vmatprep.subr.mxu0 0.0
    %2564 = vmatpush1.xpose.msra.mxu0 0.0
    %2565 = vmatprep.subr.mxu0 0.0
    %2566 = vmatpush1.xpose.msra.mxu0 0.0
    %2567 = vmatprep.subr.mxu0 0.0
    %2568 = vmatpush1.xpose.msra.mxu0 0.0
    %2569 = vmatprep.subr.mxu0 0.0
    %2570 = vmatpush1.xpose.msra.mxu0 0.0
    %2571 = vmatprep.subr.mxu0 0.0
    %2572 = vmatpush1.xpose.msra.mxu0 0.0
    %2573 = vmatprep.subr.mxu0 0.0
    %2574 = vmatpush1.xpose.msra.mxu0 0.0
    %2575 = vmatprep.subr.mxu0 0.0
    %2576 = vmatpush1.xpose.msra.mxu0 0.0
    %2577 = vmatprep.mubr.f32.mxu0 0.0
    %2578 = vmatmul.mubr.f32.gmra.mrb[0].mxu0 %v2507
    %v2579 = vpop.f32.mrb[0].mxu0
    %v2580 = vadd.f32 0.0, %v2579
    %v2581 = vpop.f32.mrb[0].mxu0
    %2582 = vdwg.mxu0
    %v2583 = vcombine.low %v2264, %v2266
    %v2584 = vcombine.low %v2268, %v2270
    %v2586 = vunpack.c.l.s4 1983009808
    %v2587 = vunpack.c.0.s8 %v2586
    %v2588 = vlaneseq
    %v2589 = vshrl.u32 %v2588, 7
    %v2590 = vsub.s32 %v2587, %v2589
    %v2591 = vrot.slane %v2583, %v2590
    %v2593 = vunpack.c.l.s4 1983009808
    %v2594 = vunpack.c.0.s8 %v2593
    %v2595 = vlaneseq
    %v2596 = vshrl.u32 %v2595, 7
    %v2597 = vsub.s32 %v2594, %v2596
    %v2598 = vrot.slane %v2584, %v2597
    %v2599 = vcombine.low %v2591, %v2598
    %v2601 = vunpack.c.l.s4 1983009808
    %v2602 = vunpack.c.0.s8 %v2601
    %v2603 = vlaneseq
    %v2604 = vshrl.u32 %v2603, 7
    %v2605 = vsub.s32 %v2602, %v2604
    %v2606 = vrot.slane %v2272, %v2605
    %v2607 = vsel %vm473, %v2175, 0
    %v2609 = vsel %vm473, %v2599, 0
    %v2611 = vsel %vm473, %v2606, 0
    %2613 = vmatprep.subr.mxu0 0.0
    %2614 = vmatpush1.xpose.msra.mxu0 %v2609
    %2615 = vmatprep.subr.mxu0 0.0
    %2616 = vmatpush1.xpose.msra.mxu0 %v2611
    %2617 = vmatprep.subr.mxu0 0.0
    %2618 = vmatpush1.xpose.msra.mxu0 0.0
    %2619 = vmatprep.subr.mxu0 0.0
    %2620 = vmatpush1.xpose.msra.mxu0 0.0
    %2621 = vmatprep.subr.mxu0 0.0
    %2622 = vmatpush1.xpose.msra.mxu0 0.0
    %2623 = vmatprep.subr.mxu0 0.0
    %2624 = vmatpush1.xpose.msra.mxu0 0.0
    %2625 = vmatprep.subr.mxu0 0.0
    %2626 = vmatpush1.xpose.msra.mxu0 0.0
    %2627 = vmatprep.subr.mxu0 0.0
    %2628 = vmatpush1.xpose.msra.mxu0 0.0
    %2629 = vmatprep.subr.mxu0 0.0
    %2630 = vmatpush1.xpose.msra.mxu0 0.0
    %2631 = vmatprep.subr.mxu0 0.0
    %2632 = vmatpush1.xpose.msra.mxu0 0.0
    %2633 = vmatprep.subr.mxu0 0.0
    %2634 = vmatpush1.xpose.msra.mxu0 0.0
    %2635 = vmatprep.subr.mxu0 0.0
    %2636 = vmatpush1.xpose.msra.mxu0 0.0
    %2637 = vmatprep.subr.mxu0 0.0
    %2638 = vmatpush1.xpose.msra.mxu0 0.0
    %2639 = vmatprep.subr.mxu0 0.0
    %2640 = vmatpush1.xpose.msra.mxu0 0.0
    %2641 = vmatprep.subr.mxu0 0.0
    %2642 = vmatpush1.xpose.msra.mxu0 0.0
    %2643 = vmatprep.subr.mxu0 0.0
    %2644 = vmatpush1.xpose.msra.mxu0 0.0
    %2645 = vmatprep.subr.mxu0 0.0
    %2646 = vmatpush1.xpose.msra.mxu0 0.0
    %2647 = vmatprep.subr.mxu0 0.0
    %2648 = vmatpush1.xpose.msra.mxu0 0.0
    %2649 = vmatprep.subr.mxu0 0.0
    %2650 = vmatpush1.xpose.msra.mxu0 0.0
    %2651 = vmatprep.subr.mxu0 0.0
    %2652 = vmatpush1.xpose.msra.mxu0 0.0
    %2653 = vmatprep.subr.mxu0 0.0
    %2654 = vmatpush1.xpose.msra.mxu0 0.0
    %2655 = vmatprep.subr.mxu0 0.0
    %2656 = vmatpush1.xpose.msra.mxu0 0.0
    %2657 = vmatprep.subr.mxu0 0.0
    %2658 = vmatpush1.xpose.msra.mxu0 0.0
    %2659 = vmatprep.subr.mxu0 0.0
    %2660 = vmatpush1.xpose.msra.mxu0 0.0
    %2661 = vmatprep.subr.mxu0 0.0
    %2662 = vmatpush1.xpose.msra.mxu0 0.0
    %2663 = vmatprep.subr.mxu0 0.0
    %2664 = vmatpush1.xpose.msra.mxu0 0.0
    %2665 = vmatprep.subr.mxu0 0.0
    %2666 = vmatpush1.xpose.msra.mxu0 0.0
    %2667 = vmatprep.subr.mxu0 0.0
    %2668 = vmatpush1.xpose.msra.mxu0 0.0
    %2669 = vmatprep.subr.mxu0 0.0
    %2670 = vmatpush1.xpose.msra.mxu0 0.0
    %2671 = vmatprep.subr.mxu0 0.0
    %2672 = vmatpush1.xpose.msra.mxu0 0.0
    %2673 = vmatprep.subr.mxu0 0.0
    %2674 = vmatpush1.xpose.msra.mxu0 0.0
    %2675 = vmatprep.subr.mxu0 0.0
    %2676 = vmatpush1.xpose.msra.mxu0 0.0
    %2677 = vmatprep.mubr.f32.mxu0 0.0
    %2678 = vmatmul.mubr.f32.gmra.mrb[0].mxu0 %v2607
    %v2679 = vpop.f32.mrb[0].mxu0
    %v2680 = vadd.f32 0.0, %v2679
    %v2681 = vpop.f32.mrb[0].mxu0
    %2682 = vdwg.mxu0
    %v2683 = vcombine.low %v2213, %v2212
    %v2684 = vcombine.low %v2214, %v2221
    %v2686 = vunpack.c.l.s4 1983009808
    %v2687 = vunpack.c.0.s8 %v2686
    %v2688 = vlaneseq
    %v2689 = vshrl.u32 %v2688, 7
    %v2690 = vsub.s32 %v2687, %v2689
    %v2691 = vrot.slane %v2683, %v2690
    %v2693 = vunpack.c.l.s4 1983009808
    %v2694 = vunpack.c.0.s8 %v2693
    %v2695 = vlaneseq
    %v2696 = vshrl.u32 %v2695, 7
    %v2697 = vsub.s32 %v2694, %v2696
    %v2698 = vrot.slane %v2684, %v2697
    %v2699 = vcombine.low %v2691, %v2698
    %v2701 = vunpack.c.l.s4 1983009808
    %v2702 = vunpack.c.0.s8 %v2701
    %v2703 = vlaneseq
    %v2704 = vshrl.u32 %v2703, 7
    %v2705 = vsub.s32 %v2702, %v2704
    %v2706 = vrot.slane %v2222, %v2705
    %v2707 = vsel %vm473, %v2016, 0
    %v2709 = vsel %vm473, %v2699, 0
    %v2711 = vsel %vm473, %v2706, 0
    %2713 = vmatprep.subr.mxu0 0.0
    %2714 = vmatpush1.xpose.msra.mxu0 %v2709
    %2715 = vmatprep.subr.mxu0 0.0
    %2716 = vmatpush1.xpose.msra.mxu0 %v2711
    %2717 = vmatprep.subr.mxu0 0.0
    %2718 = vmatpush1.xpose.msra.mxu0 0.0
    %2719 = vmatprep.subr.mxu0 0.0
    %2720 = vmatpush1.xpose.msra.mxu0 0.0
    %2721 = vmatprep.subr.mxu0 0.0
    %2722 = vmatpush1.xpose.msra.mxu0 0.0
    %2723 = vmatprep.subr.mxu0 0.0
    %2724 = vmatpush1.xpose.msra.mxu0 0.0
    %2725 = vmatprep.subr.mxu0 0.0
    %2726 = vmatpush1.xpose.msra.mxu0 0.0
    %2727 = vmatprep.subr.mxu0 0.0
    %2728 = vmatpush1.xpose.msra.mxu0 0.0
    %2729 = vmatprep.subr.mxu0 0.0
    %2730 = vmatpush1.xpose.msra.mxu0 0.0
    %2731 = vmatprep.subr.mxu0 0.0
    %2732 = vmatpush1.xpose.msra.mxu0 0.0
    %2733 = vmatprep.subr.mxu0 0.0
    %2734 = vmatpush1.xpose.msra.mxu0 0.0
    %2735 = vmatprep.subr.mxu0 0.0
    %2736 = vmatpush1.xpose.msra.mxu0 0.0
    %2737 = vmatprep.subr.mxu0 0.0
    %2738 = vmatpush1.xpose.msra.mxu0 0.0
    %2739 = vmatprep.subr.mxu0 0.0
    %2740 = vmatpush1.xpose.msra.mxu0 0.0
    %2741 = vmatprep.subr.mxu0 0.0
    %2742 = vmatpush1.xpose.msra.mxu0 0.0
    %2743 = vmatprep.subr.mxu0 0.0
    %2744 = vmatpush1.xpose.msra.mxu0 0.0
    %2745 = vmatprep.subr.mxu0 0.0
    %2746 = vmatpush1.xpose.msra.mxu0 0.0
    %2747 = vmatprep.subr.mxu0 0.0
    %2748 = vmatpush1.xpose.msra.mxu0 0.0
    %2749 = vmatprep.subr.mxu0 0.0
    %2750 = vmatpush1.xpose.msra.mxu0 0.0
    %2751 = vmatprep.subr.mxu0 0.0
    %2752 = vmatpush1.xpose.msra.mxu0 0.0
    %2753 = vmatprep.subr.mxu0 0.0
    %2754 = vmatpush1.xpose.msra.mxu0 0.0
    %2755 = vmatprep.subr.mxu0 0.0
    %2756 = vmatpush1.xpose.msra.mxu0 0.0
    %2757 = vmatprep.subr.mxu0 0.0
    %2758 = vmatpush1.xpose.msra.mxu0 0.0
    %2759 = vmatprep.subr.mxu0 0.0
    %2760 = vmatpush1.xpose.msra.mxu0 0.0
    %2761 = vmatprep.subr.mxu0 0.0
    %2762 = vmatpush1.xpose.msra.mxu0 0.0
    %2763 = vmatprep.subr.mxu0 0.0
    %2764 = vmatpush1.xpose.msra.mxu0 0.0
    %2765 = vmatprep.subr.mxu0 0.0
    %2766 = vmatpush1.xpose.msra.mxu0 0.0
    %2767 = vmatprep.subr.mxu0 0.0
    %2768 = vmatpush1.xpose.msra.mxu0 0.0
    %2769 = vmatprep.subr.mxu0 0.0
    %2770 = vmatpush1.xpose.msra.mxu0 0.0
    %2771 = vmatprep.subr.mxu0 0.0
    %2772 = vmatpush1.xpose.msra.mxu0 0.0
    %2773 = vmatprep.subr.mxu0 0.0
    %2774 = vmatpush1.xpose.msra.mxu0 0.0
    %2775 = vmatprep.subr.mxu0 0.0
    %2776 = vmatpush1.xpose.msra.mxu0 0.0
    %2777 = vmatprep.mubr.f32.mxu0 0.0
    %2778 = vmatmul.mubr.f32.gmra.mrb[0].mxu0 %v2707
    %v2779 = vpop.f32.mrb[0].mxu0
    %v2780 = vadd.f32 0.0, %v2779
    %v2781 = vpop.f32.mrb[0].mxu0
    %2782 = vdwg.mxu0
    %v2783 = vcombine.low %v2234, %v2236
    %v2784 = vcombine.low %v2238, %v2240
    %v2786 = vunpack.c.l.s4 1983009808
    %v2787 = vunpack.c.0.s8 %v2786
    %v2788 = vlaneseq
    %v2789 = vshrl.u32 %v2788, 7
    %v2790 = vsub.s32 %v2787, %v2789
    %v2791 = vrot.slane %v2783, %v2790
    %v2793 = vunpack.c.l.s4 1983009808
    %v2794 = vunpack.c.0.s8 %v2793
    %v2795 = vlaneseq
    %v2796 = vshrl.u32 %v2795, 7
    %v2797 = vsub.s32 %v2794, %v2796
    %v2798 = vrot.slane %v2784, %v2797
    %v2799 = vcombine.low %v2791, %v2798
    %v2801 = vunpack.c.l.s4 1983009808
    %v2802 = vunpack.c.0.s8 %v2801
    %v2803 = vlaneseq
    %v2804 = vshrl.u32 %v2803, 7
    %v2805 = vsub.s32 %v2802, %v2804
    %v2806 = vrot.slane %v2242, %v2805
    %v2807 = vsel %vm473, %v2169, 0
    %v2809 = vsel %vm473, %v2799, 0
    %v2811 = vsel %vm473, %v2806, 0
    %2813 = vmatprep.subr.mxu0 0.0
    %2814 = vmatpush1.xpose.msra.mxu0 %v2809
    %2815 = vmatprep.subr.mxu0 0.0
    %2816 = vmatpush1.xpose.msra.mxu0 %v2811
    %2817 = vmatprep.subr.mxu0 0.0
    %2818 = vmatpush1.xpose.msra.mxu0 0.0
    %2819 = vmatprep.subr.mxu0 0.0
    %2820 = vmatpush1.xpose.msra.mxu0 0.0
    %2821 = vmatprep.subr.mxu0 0.0
    %2822 = vmatpush1.xpose.msra.mxu0 0.0
    %2823 = vmatprep.subr.mxu0 0.0
    %2824 = vmatpush1.xpose.msra.mxu0 0.0
    %2825 = vmatprep.subr.mxu0 0.0
    %2826 = vmatpush1.xpose.msra.mxu0 0.0
    %2827 = vmatprep.subr.mxu0 0.0
    %2828 = vmatpush1.xpose.msra.mxu0 0.0
    %2829 = vmatprep.subr.mxu0 0.0
    %2830 = vmatpush1.xpose.msra.mxu0 0.0
    %2831 = vmatprep.subr.mxu0 0.0
    %2832 = vmatpush1.xpose.msra.mxu0 0.0
    %2833 = vmatprep.subr.mxu0 0.0
    %2834 = vmatpush1.xpose.msra.mxu0 0.0
    %2835 = vmatprep.subr.mxu0 0.0
    %2836 = vmatpush1.xpose.msra.mxu0 0.0
    %2837 = vmatprep.subr.mxu0 0.0
    %2838 = vmatpush1.xpose.msra.mxu0 0.0
    %2839 = vmatprep.subr.mxu0 0.0
    %2840 = vmatpush1.xpose.msra.mxu0 0.0
    %2841 = vmatprep.subr.mxu0 0.0
    %2842 = vmatpush1.xpose.msra.mxu0 0.0
    %2843 = vmatprep.subr.mxu0 0.0
    %2844 = vmatpush1.xpose.msra.mxu0 0.0
    %2845 = vmatprep.subr.mxu0 0.0
    %2846 = vmatpush1.xpose.msra.mxu0 0.0
    %2847 = vmatprep.subr.mxu0 0.0
    %2848 = vmatpush1.xpose.msra.mxu0 0.0
    %2849 = vmatprep.subr.mxu0 0.0
    %2850 = vmatpush1.xpose.msra.mxu0 0.0
    %2851 = vmatprep.subr.mxu0 0.0
    %2852 = vmatpush1.xpose.msra.mxu0 0.0
    %2853 = vmatprep.subr.mxu0 0.0
    %2854 = vmatpush1.xpose.msra.mxu0 0.0
    %2855 = vmatprep.subr.mxu0 0.0
    %2856 = vmatpush1.xpose.msra.mxu0 0.0
    %2857 = vmatprep.subr.mxu0 0.0
    %2858 = vmatpush1.xpose.msra.mxu0 0.0
    %2859 = vmatprep.subr.mxu0 0.0
    %2860 = vmatpush1.xpose.msra.mxu0 0.0
    %2861 = vmatprep.subr.mxu0 0.0
    %2862 = vmatpush1.xpose.msra.mxu0 0.0
    %2863 = vmatprep.subr.mxu0 0.0
    %2864 = vmatpush1.xpose.msra.mxu0 0.0
    %2865 = vmatprep.subr.mxu0 0.0
    %2866 = vmatpush1.xpose.msra.mxu0 0.0
    %2867 = vmatprep.subr.mxu0 0.0
    %2868 = vmatpush1.xpose.msra.mxu0 0.0
    %2869 = vmatprep.subr.mxu0 0.0
    %2870 = vmatpush1.xpose.msra.mxu0 0.0
    %2871 = vmatprep.subr.mxu0 0.0
    %2872 = vmatpush1.xpose.msra.mxu0 0.0
    %2873 = vmatprep.subr.mxu0 0.0
    %2874 = vmatpush1.xpose.msra.mxu0 0.0
    %2875 = vmatprep.subr.mxu0 0.0
    %2876 = vmatpush1.xpose.msra.mxu0 0.0
    %2877 = vmatprep.mubr.f32.mxu0 0.0
    %2878 = vmatmul.mubr.f32.gmra.mrb[0].mxu0 %v2807
    %v2879 = vpop.f32.mrb[0].mxu0
    %v2880 = vadd.f32 0.0, %v2879
    %v2881 = vpop.f32.mrb[0].mxu0
    %2882 = vdwg.mxu0
    %v2883 = vcombine.low %v2254, %v2256
    %v2884 = vcombine.low %v2258, %v2260
    %v2886 = vunpack.c.l.s4 1983009808
    %v2887 = vunpack.c.0.s8 %v2886
    %v2888 = vlaneseq
    %v2889 = vshrl.u32 %v2888, 7
    %v2890 = vsub.s32 %v2887, %v2889
    %v2891 = vrot.slane %v2883, %v2890
    %v2893 = vunpack.c.l.s4 1983009808
    %v2894 = vunpack.c.0.s8 %v2893
    %v2895 = vlaneseq
    %v2896 = vshrl.u32 %v2895, 7
    %v2897 = vsub.s32 %v2894, %v2896
    %v2898 = vrot.slane %v2884, %v2897
    %v2899 = vcombine.low %v2891, %v2898
    %v2901 = vunpack.c.l.s4 1983009808
    %v2902 = vunpack.c.0.s8 %v2901
    %v2903 = vlaneseq
    %v2904 = vshrl.u32 %v2903, 7
    %v2905 = vsub.s32 %v2902, %v2904
    %v2906 = vrot.slane %v2262, %v2905
    %v2907 = vsel %vm473, %v2173, 0
    %v2909 = vsel %vm473, %v2899, 0
    %v2911 = vsel %vm473, %v2906, 0
    %2913 = vmatprep.subr.mxu0 0.0
    %2914 = vmatpush1.xpose.msra.mxu0 %v2909
    %2915 = vmatprep.subr.mxu0 0.0
    %2916 = vmatpush1.xpose.msra.mxu0 %v2911
    %2917 = vmatprep.subr.mxu0 0.0
    %2918 = vmatpush1.xpose.msra.mxu0 0.0
    %2919 = vmatprep.subr.mxu0 0.0
    %2920 = vmatpush1.xpose.msra.mxu0 0.0
    %2921 = vmatprep.subr.mxu0 0.0
    %2922 = vmatpush1.xpose.msra.mxu0 0.0
    %2923 = vmatprep.subr.mxu0 0.0
    %2924 = vmatpush1.xpose.msra.mxu0 0.0
    %2925 = vmatprep.subr.mxu0 0.0
    %2926 = vmatpush1.xpose.msra.mxu0 0.0
    %2927 = vmatprep.subr.mxu0 0.0
    %2928 = vmatpush1.xpose.msra.mxu0 0.0
    %2929 = vmatprep.subr.mxu0 0.0
    %2930 = vmatpush1.xpose.msra.mxu0 0.0
    %2931 = vmatprep.subr.mxu0 0.0
    %2932 = vmatpush1.xpose.msra.mxu0 0.0
    %2933 = vmatprep.subr.mxu0 0.0
    %2934 = vmatpush1.xpose.msra.mxu0 0.0
    %2935 = vmatprep.subr.mxu0 0.0
    %2936 = vmatpush1.xpose.msra.mxu0 0.0
    %2937 = vmatprep.subr.mxu0 0.0
    %2938 = vmatpush1.xpose.msra.mxu0 0.0
    %2939 = vmatprep.subr.mxu0 0.0
    %2940 = vmatpush1.xpose.msra.mxu0 0.0
    %2941 = vmatprep.subr.mxu0 0.0
    %2942 = vmatpush1.xpose.msra.mxu0 0.0
    %2943 = vmatprep.subr.mxu0 0.0
    %2944 = vmatpush1.xpose.msra.mxu0 0.0
    %2945 = vmatprep.subr.mxu0 0.0
    %2946 = vmatpush1.xpose.msra.mxu0 0.0
    %2947 = vmatprep.subr.mxu0 0.0
    %2948 = vmatpush1.xpose.msra.mxu0 0.0
    %2949 = vmatprep.subr.mxu0 0.0
    %2950 = vmatpush1.xpose.msra.mxu0 0.0
    %2951 = vmatprep.subr.mxu0 0.0
    %2952 = vmatpush1.xpose.msra.mxu0 0.0
    %2953 = vmatprep.subr.mxu0 0.0
    %2954 = vmatpush1.xpose.msra.mxu0 0.0
    %2955 = vmatprep.subr.mxu0 0.0
    %2956 = vmatpush1.xpose.msra.mxu0 0.0
    %2957 = vmatprep.subr.mxu0 0.0
    %2958 = vmatpush1.xpose.msra.mxu0 0.0
    %2959 = vmatprep.subr.mxu0 0.0
    %2960 = vmatpush1.xpose.msra.mxu0 0.0
    %2961 = vmatprep.subr.mxu0 0.0
    %2962 = vmatpush1.xpose.msra.mxu0 0.0
    %2963 = vmatprep.subr.mxu0 0.0
    %2964 = vmatpush1.xpose.msra.mxu0 0.0
    %2965 = vmatprep.subr.mxu0 0.0
    %2966 = vmatpush1.xpose.msra.mxu0 0.0
    %2967 = vmatprep.subr.mxu0 0.0
    %2968 = vmatpush1.xpose.msra.mxu0 0.0
    %2969 = vmatprep.subr.mxu0 0.0
    %2970 = vmatpush1.xpose.msra.mxu0 0.0
    %2971 = vmatprep.subr.mxu0 0.0
    %2972 = vmatpush1.xpose.msra.mxu0 0.0
    %2973 = vmatprep.subr.mxu0 0.0
    %2974 = vmatpush1.xpose.msra.mxu0 0.0
    %2975 = vmatprep.subr.mxu0 0.0
    %2976 = vmatpush1.xpose.msra.mxu0 0.0
    %2977 = vmatprep.mubr.f32.mxu0 0.0
    %2978 = vmatmul.mubr.f32.gmra.mrb[0].mxu0 %v2907
    %v2979 = vpop.f32.mrb[0].mxu0
    %v2980 = vadd.f32 0.0, %v2979
    %v2981 = vpop.f32.mrb[0].mxu0
    %2982 = vdwg.mxu0
    %v2983 = vcombine.low %v2274, %v2276
    %v2984 = vcombine.low %v2278, %v2280
    %v2986 = vunpack.c.l.s4 1983009808
    %v2987 = vunpack.c.0.s8 %v2986
    %v2988 = vlaneseq
    %v2989 = vshrl.u32 %v2988, 7
    %v2990 = vsub.s32 %v2987, %v2989
    %v2991 = vrot.slane %v2983, %v2990
    %v2993 = vunpack.c.l.s4 1983009808
    %v2994 = vunpack.c.0.s8 %v2993
    %v2995 = vlaneseq
    %v2996 = vshrl.u32 %v2995, 7
    %v2997 = vsub.s32 %v2994, %v2996
    %v2998 = vrot.slane %v2984, %v2997
    %v2999 = vcombine.low %v2991, %v2998
    %v3001 = vunpack.c.l.s4 1983009808
    %v3002 = vunpack.c.0.s8 %v3001
    %v3003 = vlaneseq
    %v3004 = vshrl.u32 %v3003, 7
    %v3005 = vsub.s32 %v3002, %v3004
    %v3006 = vrot.slane %v2282, %v3005
    %v3007 = vsel %vm473, %v2177, 0
    %v3009 = vsel %vm473, %v2999, 0
    %v3011 = vsel %vm473, %v3006, 0
    %3013 = vmatprep.subr.mxu0 0.0
    %3014 = vmatpush1.xpose.msra.mxu0 %v3009
    %3015 = vmatprep.subr.mxu0 0.0
    %3016 = vmatpush1.xpose.msra.mxu0 %v3011
    %3017 = vmatprep.subr.mxu0 0.0
    %3018 = vmatpush1.xpose.msra.mxu0 0.0
    %3019 = vmatprep.subr.mxu0 0.0
    %3020 = vmatpush1.xpose.msra.mxu0 0.0
    %3021 = vmatprep.subr.mxu0 0.0
    %3022 = vmatpush1.xpose.msra.mxu0 0.0
    %3023 = vmatprep.subr.mxu0 0.0
    %3024 = vmatpush1.xpose.msra.mxu0 0.0
    %3025 = vmatprep.subr.mxu0 0.0
    %3026 = vmatpush1.xpose.msra.mxu0 0.0
    %3027 = vmatprep.subr.mxu0 0.0
    %3028 = vmatpush1.xpose.msra.mxu0 0.0
    %3029 = vmatprep.subr.mxu0 0.0
    %3030 = vmatpush1.xpose.msra.mxu0 0.0
    %3031 = vmatprep.subr.mxu0 0.0
    %3032 = vmatpush1.xpose.msra.mxu0 0.0
    %3033 = vmatprep.subr.mxu0 0.0
    %3034 = vmatpush1.xpose.msra.mxu0 0.0
    %3035 = vmatprep.subr.mxu0 0.0
    %3036 = vmatpush1.xpose.msra.mxu0 0.0
    %3037 = vmatprep.subr.mxu0 0.0
    %3038 = vmatpush1.xpose.msra.mxu0 0.0
    %3039 = vmatprep.subr.mxu0 0.0
    %3040 = vmatpush1.xpose.msra.mxu0 0.0
    %3041 = vmatprep.subr.mxu0 0.0
    %3042 = vmatpush1.xpose.msra.mxu0 0.0
    %3043 = vmatprep.subr.mxu0 0.0
    %3044 = vmatpush1.xpose.msra.mxu0 0.0
    %3045 = vmatprep.subr.mxu0 0.0
    %3046 = vmatpush1.xpose.msra.mxu0 0.0
    %3047 = vmatprep.subr.mxu0 0.0
    %3048 = vmatpush1.xpose.msra.mxu0 0.0
    %3049 = vmatprep.subr.mxu0 0.0
    %3050 = vmatpush1.xpose.msra.mxu0 0.0
    %3051 = vmatprep.subr.mxu0 0.0
    %3052 = vmatpush1.xpose.msra.mxu0 0.0
    %3053 = vmatprep.subr.mxu0 0.0
    %3054 = vmatpush1.xpose.msra.mxu0 0.0
    %3055 = vmatprep.subr.mxu0 0.0
    %3056 = vmatpush1.xpose.msra.mxu0 0.0
    %3057 = vmatprep.subr.mxu0 0.0
    %3058 = vmatpush1.xpose.msra.mxu0 0.0
    %3059 = vmatprep.subr.mxu0 0.0
    %3060 = vmatpush1.xpose.msra.mxu0 0.0
    %3061 = vmatprep.subr.mxu0 0.0
    %3062 = vmatpush1.xpose.msra.mxu0 0.0
    %3063 = vmatprep.subr.mxu0 0.0
    %3064 = vmatpush1.xpose.msra.mxu0 0.0
    %3065 = vmatprep.subr.mxu0 0.0
    %3066 = vmatpush1.xpose.msra.mxu0 0.0
    %3067 = vmatprep.subr.mxu0 0.0
    %3068 = vmatpush1.xpose.msra.mxu0 0.0
    %3069 = vmatprep.subr.mxu0 0.0
    %3070 = vmatpush1.xpose.msra.mxu0 0.0
    %3071 = vmatprep.subr.mxu0 0.0
    %3072 = vmatpush1.xpose.msra.mxu0 0.0
    %3073 = vmatprep.subr.mxu0 0.0
    %3074 = vmatpush1.xpose.msra.mxu0 0.0
    %3075 = vmatprep.subr.mxu0 0.0
    %3076 = vmatpush1.xpose.msra.mxu0 0.0
    %3077 = vmatprep.mubr.f32.mxu0 0.0
    %3078 = vmatmul.mubr.f32.gmra.mrb[0].mxu0 %v3007
    %v3079 = vpop.f32.mrb[0].mxu0
    %v3080 = vadd.f32 0.0, %v3079
    %v3081 = vpop.f32.mrb[0].mxu0
    %3082 = vdwg.mxu0
    %vm3083 = vcmask 80896
    %v3084 = vsel %vm3083, %v2380, -inf
    %3085 = vmax.xlane.f32.xlu0 %v3084
    %v3086 = vpop.xlane.xlu0 %3085
    %v3087 = vsel %vm3083, %v2480, -inf
    %3088 = vmax.xlane.f32.xlu0 %v3087
    %v3089 = vpop.xlane.xlu0 %3088
    %v3090 = vsel %vm3083, %v2580, -inf
    %3091 = vmax.xlane.f32.xlu0 %v3090
    %v3092 = vpop.xlane.xlu0 %3091
    %v3093 = vsel %vm3083, %v2680, -inf
    %3094 = vmax.xlane.f32.xlu0 %v3093
    %v3095 = vpop.xlane.xlu0 %3094
    %v3096 = vsel %vm3083, %v2780, -inf
    %3097 = vmax.xlane.f32.xlu0 %v3096
    %v3098 = vpop.xlane.xlu0 %3097
    %v3099 = vsel %vm3083, %v2880, -inf
    %3100 = vmax.xlane.f32.xlu0 %v3099
    %v3101 = vpop.xlane.xlu0 %3100
    %v3102 = vsel %vm3083, %v2980, -inf
    %3103 = vmax.xlane.f32.xlu0 %v3102
    %v3104 = vpop.xlane.xlu0 %3103
    %v3105 = vsel %vm3083, %v3080, -inf
    %3106 = vmax.xlane.f32.xlu0 %v3105
    %v3107 = vpop.xlane.xlu0 %3106
    %v3108 = vsub.f32 %v2380, %v3086
    %v3109 = vsub.f32 %v2480, %v3089
    %v3110 = vsub.f32 %v2580, %v3092
    %v3111 = vsub.f32 %v2680, %v3095
    %v3112 = vsub.f32 %v2780, %v3098
    %v3113 = vsub.f32 %v2880, %v3101
    %v3114 = vsub.f32 %v2980, %v3104
    %v3115 = vsub.f32 %v3080, %v3107
    %v3116 = vmul.f32 %v3108, 1.442695
    %v3117 = vpow.pop %v3116
    %v3118 = vmul.f32 %v3109, 1.442695
    %v3119 = vpow.pop %v3118
    %v3120 = vmul.f32 %v3110, 1.442695
    %v3121 = vpow.pop %v3120
    %v3122 = vmul.f32 %v3111, 1.442695
    %v3123 = vpow.pop %v3122
    %v3124 = vmul.f32 %v3112, 1.442695
    %v3125 = vpow.pop %v3124
    %v3126 = vmul.f32 %v3113, 1.442695
    %v3127 = vpow.pop %v3126
    %v3128 = vmul.f32 %v3114, 1.442695
    %v3129 = vpow.pop %v3128
    %v3130 = vmul.f32 %v3115, 1.442695
    %v3131 = vpow.pop %v3130
    %v3132 = vsel %vm3083, %v3117, 0.0
    %3133 = vadd.xlane.f32.xlu0 %v3132
    %v3134 = vpop.xlane.xlu0 %3133
    %v3135 = vsel %vm3083, %v3119, 0.0
    %3136 = vadd.xlane.f32.xlu0 %v3135
    %v3137 = vpop.xlane.xlu0 %3136
    %v3138 = vsel %vm3083, %v3121, 0.0
    %3139 = vadd.xlane.f32.xlu0 %v3138
    %v3140 = vpop.xlane.xlu0 %3139
    %v3141 = vsel %vm3083, %v3123, 0.0
    %3142 = vadd.xlane.f32.xlu0 %v3141
    %v3143 = vpop.xlane.xlu0 %3142
    %v3144 = vsel %vm3083, %v3125, 0.0
    %3145 = vadd.xlane.f32.xlu0 %v3144
    %v3146 = vpop.xlane.xlu0 %3145
    %v3147 = vsel %vm3083, %v3127, 0.0
    %3148 = vadd.xlane.f32.xlu0 %v3147
    %v3149 = vpop.xlane.xlu0 %3148
    %v3150 = vsel %vm3083, %v3129, 0.0
    %3151 = vadd.xlane.f32.xlu0 %v3150
    %v3152 = vpop.xlane.xlu0 %3151
    %v3153 = vsel %vm3083, %v3131, 0.0
    %3154 = vadd.xlane.f32.xlu0 %v3153
    %v3155 = vpop.xlane.xlu0 %3154
    %v3156 = vrcp.pop %v3134
    %v3157 = vrcp.pop %v3137
    %v3158 = vrcp.pop %v3140
    %v3159 = vrcp.pop %v3143
    %v3160 = vrcp.pop %v3146
    %v3161 = vrcp.pop %v3149
    %v3162 = vrcp.pop %v3152
    %v3163 = vrcp.pop %v3155
    %3164 = vrot.lane.b32.xlu0 %v2299, 96
    %v3165 = vpop.permute.xlu0 %3164
    %3166 = vrot.lane.b32.xlu0 %v2306, 96
    %v3167 = vpop.permute.xlu0 %3166
    %v3170 = vsel %vm3083, %v3117, 0
    %vm3172 = vcmask 1041408
    %v3173 = vsel %vm3172, %v3167, 0
    %3175 = vmatprep.subr.mxu0 0.0
    %3176 = vmatpush1.msra.mxu0 %v3165
    %3177 = vmatprep.subr.mxu0 0.0
    %3178 = vmatpush1.msra.mxu0 %v3173
    %3179 = vmatprep.subr.mxu0 0.0
    %3180 = vmatpush1.msra.mxu0 0.0
    %3181 = vmatprep.subr.mxu0 0.0
    %3182 = vmatpush1.msra.mxu0 0.0
    %3183 = vmatprep.subr.mxu0 0.0
    %3184 = vmatpush1.msra.mxu0 0.0
    %3185 = vmatprep.subr.mxu0 0.0
    %3186 = vmatpush1.msra.mxu0 0.0
    %3187 = vmatprep.subr.mxu0 0.0
    %3188 = vmatpush1.msra.mxu0 0.0
    %3189 = vmatprep.subr.mxu0 0.0
    %3190 = vmatpush1.msra.mxu0 0.0
    %3191 = vmatprep.subr.mxu0 0.0
    %3192 = vmatpush1.msra.mxu0 0.0
    %3193 = vmatprep.subr.mxu0 0.0
    %3194 = vmatpush1.msra.mxu0 0.0
    %3195 = vmatprep.subr.mxu0 0.0
    %3196 = vmatpush1.msra.mxu0 0.0
    %3197 = vmatprep.subr.mxu0 0.0
    %3198 = vmatpush1.msra.mxu0 0.0
    %3199 = vmatprep.subr.mxu0 0.0
    %3200 = vmatpush1.msra.mxu0 0.0
    %3201 = vmatprep.subr.mxu0 0.0
    %3202 = vmatpush1.msra.mxu0 0.0
    %3203 = vmatprep.subr.mxu0 0.0
    %3204 = vmatpush1.msra.mxu0 0.0
    %3205 = vmatprep.subr.mxu0 0.0
    %3206 = vmatpush1.msra.mxu0 0.0
    %3207 = vmatprep.subr.mxu0 0.0
    %3208 = vmatpush1.msra.mxu0 0.0
    %3209 = vmatprep.subr.mxu0 0.0
    %3210 = vmatpush1.msra.mxu0 0.0
    %3211 = vmatprep.subr.mxu0 0.0
    %3212 = vmatpush1.msra.mxu0 0.0
    %3213 = vmatprep.subr.mxu0 0.0
    %3214 = vmatpush1.msra.mxu0 0.0
    %3215 = vmatprep.subr.mxu0 0.0
    %3216 = vmatpush1.msra.mxu0 0.0
    %3217 = vmatprep.subr.mxu0 0.0
    %3218 = vmatpush1.msra.mxu0 0.0
    %3219 = vmatprep.subr.mxu0 0.0
    %3220 = vmatpush1.msra.mxu0 0.0
    %3221 = vmatprep.subr.mxu0 0.0
    %3222 = vmatpush1.msra.mxu0 0.0
    %3223 = vmatprep.subr.mxu0 0.0
    %3224 = vmatpush1.msra.mxu0 0.0
    %3225 = vmatprep.subr.mxu0 0.0
    %3226 = vmatpush1.msra.mxu0 0.0
    %3227 = vmatprep.subr.mxu0 0.0
    %3228 = vmatpush1.msra.mxu0 0.0
    %3229 = vmatprep.subr.mxu0 0.0
    %3230 = vmatpush1.msra.mxu0 0.0
    %3231 = vmatprep.subr.mxu0 0.0
    %3232 = vmatpush1.msra.mxu0 0.0
    %3233 = vmatprep.subr.mxu0 0.0
    %3234 = vmatpush1.msra.mxu0 0.0
    %3235 = vmatprep.subr.mxu0 0.0
    %3236 = vmatpush1.msra.mxu0 0.0
    %3237 = vmatprep.subr.mxu0 0.0
    %3238 = vmatpush1.msra.mxu0 0.0
    %3239 = vmatprep.mubr.f32.mxu0 0.0
    %3240 = vmatmul.mubr.f32.gmra.mrb[0].mxu0 %v3170
    %v3241 = vpop.f32.mrb[0].mxu0
    %v3242 = vadd.f32 0.0, %v3241
    %v3243 = vpop.f32.mrb[0].mxu0
    %3244 = vdwg.mxu0
    %3245 = vrot.lane.b32.xlu0 %v2399, 96
    %v3246 = vpop.permute.xlu0 %3245
    %3247 = vrot.lane.b32.xlu0 %v2406, 96
    %v3248 = vpop.permute.xlu0 %3247
    %v3251 = vsel %vm3083, %v3119, 0
    %v3253 = vsel %vm3172, %v3248, 0
    %3255 = vmatprep.subr.mxu0 0.0
    %3256 = vmatpush1.msra.mxu0 %v3246
    %3257 = vmatprep.subr.mxu0 0.0
    %3258 = vmatpush1.msra.mxu0 %v3253
    %3259 = vmatprep.subr.mxu0 0.0
    %3260 = vmatpush1.msra.mxu0 0.0
    %3261 = vmatprep.subr.mxu0 0.0
    %3262 = vmatpush1.msra.mxu0 0.0
    %3263 = vmatprep.subr.mxu0 0.0
    %3264 = vmatpush1.msra.mxu0 0.0
    %3265 = vmatprep.subr.mxu0 0.0
    %3266 = vmatpush1.msra.mxu0 0.0
    %3267 = vmatprep.subr.mxu0 0.0
    %3268 = vmatpush1.msra.mxu0 0.0
    %3269 = vmatprep.subr.mxu0 0.0
    %3270 = vmatpush1.msra.mxu0 0.0
    %3271 = vmatprep.subr.mxu0 0.0
    %3272 = vmatpush1.msra.mxu0 0.0
    %3273 = vmatprep.subr.mxu0 0.0
    %3274 = vmatpush1.msra.mxu0 0.0
    %3275 = vmatprep.subr.mxu0 0.0
    %3276 = vmatpush1.msra.mxu0 0.0
    %3277 = vmatprep.subr.mxu0 0.0
    %3278 = vmatpush1.msra.mxu0 0.0
    %3279 = vmatprep.subr.mxu0 0.0
    %3280 = vmatpush1.msra.mxu0 0.0
    %3281 = vmatprep.subr.mxu0 0.0
    %3282 = vmatpush1.msra.mxu0 0.0
    %3283 = vmatprep.subr.mxu0 0.0
    %3284 = vmatpush1.msra.mxu0 0.0
    %3285 = vmatprep.subr.mxu0 0.0
    %3286 = vmatpush1.msra.mxu0 0.0
    %3287 = vmatprep.subr.mxu0 0.0
    %3288 = vmatpush1.msra.mxu0 0.0
    %3289 = vmatprep.subr.mxu0 0.0
    %3290 = vmatpush1.msra.mxu0 0.0
    %3291 = vmatprep.subr.mxu0 0.0
    %3292 = vmatpush1.msra.mxu0 0.0
    %3293 = vmatprep.subr.mxu0 0.0
    %3294 = vmatpush1.msra.mxu0 0.0
    %3295 = vmatprep.subr.mxu0 0.0
    %3296 = vmatpush1.msra.mxu0 0.0
    %3297 = vmatprep.subr.mxu0 0.0
    %3298 = vmatpush1.msra.mxu0 0.0
    %3299 = vmatprep.subr.mxu0 0.0
    %3300 = vmatpush1.msra.mxu0 0.0
    %3301 = vmatprep.subr.mxu0 0.0
    %3302 = vmatpush1.msra.mxu0 0.0
    %3303 = vmatprep.subr.mxu0 0.0
    %3304 = vmatpush1.msra.mxu0 0.0
    %3305 = vmatprep.subr.mxu0 0.0
    %3306 = vmatpush1.msra.mxu0 0.0
    %3307 = vmatprep.subr.mxu0 0.0
    %3308 = vmatpush1.msra.mxu0 0.0
    %3309 = vmatprep.subr.mxu0 0.0
    %3310 = vmatpush1.msra.mxu0 0.0
    %3311 = vmatprep.subr.mxu0 0.0
    %3312 = vmatpush1.msra.mxu0 0.0
    %3313 = vmatprep.subr.mxu0 0.0
    %3314 = vmatpush1.msra.mxu0 0.0
    %3315 = vmatprep.subr.mxu0 0.0
    %3316 = vmatpush1.msra.mxu0 0.0
    %3317 = vmatprep.subr.mxu0 0.0
    %3318 = vmatpush1.msra.mxu0 0.0
    %3319 = vmatprep.mubr.f32.mxu0 0.0
    %3320 = vmatmul.mubr.f32.gmra.mrb[0].mxu0 %v3251
    %v3321 = vpop.f32.mrb[0].mxu0
    %v3322 = vadd.f32 0.0, %v3321
    %v3323 = vpop.f32.mrb[0].mxu0
    %3324 = vdwg.mxu0
    %3325 = vrot.lane.b32.xlu0 %v2499, 96
    %v3326 = vpop.permute.xlu0 %3325
    %3327 = vrot.lane.b32.xlu0 %v2506, 96
    %v3328 = vpop.permute.xlu0 %3327
    %v3331 = vsel %vm3083, %v3121, 0
    %v3333 = vsel %vm3172, %v3328, 0
    %3335 = vmatprep.subr.mxu0 0.0
    %3336 = vmatpush1.msra.mxu0 %v3326
    %3337 = vmatprep.subr.mxu0 0.0
    %3338 = vmatpush1.msra.mxu0 %v3333
    %3339 = vmatprep.subr.mxu0 0.0
    %3340 = vmatpush1.msra.mxu0 0.0
    %3341 = vmatprep.subr.mxu0 0.0
    %3342 = vmatpush1.msra.mxu0 0.0
    %3343 = vmatprep.subr.mxu0 0.0
    %3344 = vmatpush1.msra.mxu0 0.0
    %3345 = vmatprep.subr.mxu0 0.0
    %3346 = vmatpush1.msra.mxu0 0.0
    %3347 = vmatprep.subr.mxu0 0.0
    %3348 = vmatpush1.msra.mxu0 0.0
    %3349 = vmatprep.subr.mxu0 0.0
    %3350 = vmatpush1.msra.mxu0 0.0
    %3351 = vmatprep.subr.mxu0 0.0
    %3352 = vmatpush1.msra.mxu0 0.0
    %3353 = vmatprep.subr.mxu0 0.0
    %3354 = vmatpush1.msra.mxu0 0.0
    %3355 = vmatprep.subr.mxu0 0.0
    %3356 = vmatpush1.msra.mxu0 0.0
    %3357 = vmatprep.subr.mxu0 0.0
    %3358 = vmatpush1.msra.mxu0 0.0
    %3359 = vmatprep.subr.mxu0 0.0
    %3360 = vmatpush1.msra.mxu0 0.0
    %3361 = vmatprep.subr.mxu0 0.0
    %3362 = vmatpush1.msra.mxu0 0.0
    %3363 = vmatprep.subr.mxu0 0.0
    %3364 = vmatpush1.msra.mxu0 0.0
    %3365 = vmatprep.subr.mxu0 0.0
    %3366 = vmatpush1.msra.mxu0 0.0
    %3367 = vmatprep.subr.mxu0 0.0
    %3368 = vmatpush1.msra.mxu0 0.0
    %3369 = vmatprep.subr.mxu0 0.0
    %3370 = vmatpush1.msra.mxu0 0.0
    %3371 = vmatprep.subr.mxu0 0.0
    %3372 = vmatpush1.msra.mxu0 0.0
    %3373 = vmatprep.subr.mxu0 0.0
    %3374 = vmatpush1.msra.mxu0 0.0
    %3375 = vmatprep.subr.mxu0 0.0
    %3376 = vmatpush1.msra.mxu0 0.0
    %3377 = vmatprep.subr.mxu0 0.0
    %3378 = vmatpush1.msra.mxu0 0.0
    %3379 = vmatprep.subr.mxu0 0.0
    %3380 = vmatpush1.msra.mxu0 0.0
    %3381 = vmatprep.subr.mxu0 0.0
    %3382 = vmatpush1.msra.mxu0 0.0
    %3383 = vmatprep.subr.mxu0 0.0
    %3384 = vmatpush1.msra.mxu0 0.0
    %3385 = vmatprep.subr.mxu0 0.0
    %3386 = vmatpush1.msra.mxu0 0.0
    %3387 = vmatprep.subr.mxu0 0.0
    %3388 = vmatpush1.msra.mxu0 0.0
    %3389 = vmatprep.subr.mxu0 0.0
    %3390 = vmatpush1.msra.mxu0 0.0
    %3391 = vmatprep.subr.mxu0 0.0
    %3392 = vmatpush1.msra.mxu0 0.0
    %3393 = vmatprep.subr.mxu0 0.0
    %3394 = vmatpush1.msra.mxu0 0.0
    %3395 = vmatprep.subr.mxu0 0.0
    %3396 = vmatpush1.msra.mxu0 0.0
    %3397 = vmatprep.subr.mxu0 0.0
    %3398 = vmatpush1.msra.mxu0 0.0
    %3399 = vmatprep.mubr.f32.mxu0 0.0
    %3400 = vmatmul.mubr.f32.gmra.mrb[0].mxu0 %v3331
    %v3401 = vpop.f32.mrb[0].mxu0
    %v3402 = vadd.f32 0.0, %v3401
    %v3403 = vpop.f32.mrb[0].mxu0
    %3404 = vdwg.mxu0
    %3405 = vrot.lane.b32.xlu0 %v2599, 96
    %v3406 = vpop.permute.xlu0 %3405
    %3407 = vrot.lane.b32.xlu0 %v2606, 96
    %v3408 = vpop.permute.xlu0 %3407
    %v3411 = vsel %vm3083, %v3123, 0
    %v3413 = vsel %vm3172, %v3408, 0
    %3415 = vmatprep.subr.mxu0 0.0
    %3416 = vmatpush1.msra.mxu0 %v3406
    %3417 = vmatprep.subr.mxu0 0.0
    %3418 = vmatpush1.msra.mxu0 %v3413
    %3419 = vmatprep.subr.mxu0 0.0
    %3420 = vmatpush1.msra.mxu0 0.0
    %3421 = vmatprep.subr.mxu0 0.0
    %3422 = vmatpush1.msra.mxu0 0.0
    %3423 = vmatprep.subr.mxu0 0.0
    %3424 = vmatpush1.msra.mxu0 0.0
    %3425 = vmatprep.subr.mxu0 0.0
    %3426 = vmatpush1.msra.mxu0 0.0
    %3427 = vmatprep.subr.mxu0 0.0
    %3428 = vmatpush1.msra.mxu0 0.0
    %3429 = vmatprep.subr.mxu0 0.0
    %3430 = vmatpush1.msra.mxu0 0.0
    %3431 = vmatprep.subr.mxu0 0.0
    %3432 = vmatpush1.msra.mxu0 0.0
    %3433 = vmatprep.subr.mxu0 0.0
    %3434 = vmatpush1.msra.mxu0 0.0
    %3435 = vmatprep.subr.mxu0 0.0
    %3436 = vmatpush1.msra.mxu0 0.0
    %3437 = vmatprep.subr.mxu0 0.0
    %3438 = vmatpush1.msra.mxu0 0.0
    %3439 = vmatprep.subr.mxu0 0.0
    %3440 = vmatpush1.msra.mxu0 0.0
    %3441 = vmatprep.subr.mxu0 0.0
    %3442 = vmatpush1.msra.mxu0 0.0
    %3443 = vmatprep.subr.mxu0 0.0
    %3444 = vmatpush1.msra.mxu0 0.0
    %3445 = vmatprep.subr.mxu0 0.0
    %3446 = vmatpush1.msra.mxu0 0.0
    %3447 = vmatprep.subr.mxu0 0.0
    %3448 = vmatpush1.msra.mxu0 0.0
    %3449 = vmatprep.subr.mxu0 0.0
    %3450 = vmatpush1.msra.mxu0 0.0
    %3451 = vmatprep.subr.mxu0 0.0
    %3452 = vmatpush1.msra.mxu0 0.0
    %3453 = vmatprep.subr.mxu0 0.0
    %3454 = vmatpush1.msra.mxu0 0.0
    %3455 = vmatprep.subr.mxu0 0.0
    %3456 = vmatpush1.msra.mxu0 0.0
    %3457 = vmatprep.subr.mxu0 0.0
    %3458 = vmatpush1.msra.mxu0 0.0
    %3459 = vmatprep.subr.mxu0 0.0
    %3460 = vmatpush1.msra.mxu0 0.0
    %3461 = vmatprep.subr.mxu0 0.0
    %3462 = vmatpush1.msra.mxu0 0.0
    %3463 = vmatprep.subr.mxu0 0.0
    %3464 = vmatpush1.msra.mxu0 0.0
    %3465 = vmatprep.subr.mxu0 0.0
    %3466 = vmatpush1.msra.mxu0 0.0
    %3467 = vmatprep.subr.mxu0 0.0
    %3468 = vmatpush1.msra.mxu0 0.0
    %3469 = vmatprep.subr.mxu0 0.0
    %3470 = vmatpush1.msra.mxu0 0.0
    %3471 = vmatprep.subr.mxu0 0.0
    %3472 = vmatpush1.msra.mxu0 0.0
    %3473 = vmatprep.subr.mxu0 0.0
    %3474 = vmatpush1.msra.mxu0 0.0
    %3475 = vmatprep.subr.mxu0 0.0
    %3476 = vmatpush1.msra.mxu0 0.0
    %3477 = vmatprep.subr.mxu0 0.0
    %3478 = vmatpush1.msra.mxu0 0.0
    %3479 = vmatprep.mubr.f32.mxu0 0.0
    %3480 = vmatmul.mubr.f32.gmra.mrb[0].mxu0 %v3411
    %v3481 = vpop.f32.mrb[0].mxu0
    %v3482 = vadd.f32 0.0, %v3481
    %v3483 = vpop.f32.mrb[0].mxu0
    %3484 = vdwg.mxu0
    %3485 = vrot.lane.b32.xlu0 %v2699, 96
    %v3486 = vpop.permute.xlu0 %3485
    %3487 = vrot.lane.b32.xlu0 %v2706, 96
    %v3488 = vpop.permute.xlu0 %3487
    %v3491 = vsel %vm3083, %v3125, 0
    %v3493 = vsel %vm3172, %v3488, 0
    %3495 = vmatprep.subr.mxu0 0.0
    %3496 = vmatpush1.msra.mxu0 %v3486
    %3497 = vmatprep.subr.mxu0 0.0
    %3498 = vmatpush1.msra.mxu0 %v3493
    %3499 = vmatprep.subr.mxu0 0.0
    %3500 = vmatpush1.msra.mxu0 0.0
    %3501 = vmatprep.subr.mxu0 0.0
    %3502 = vmatpush1.msra.mxu0 0.0
    %3503 = vmatprep.subr.mxu0 0.0
    %3504 = vmatpush1.msra.mxu0 0.0
    %3505 = vmatprep.subr.mxu0 0.0
    %3506 = vmatpush1.msra.mxu0 0.0
    %3507 = vmatprep.subr.mxu0 0.0
    %3508 = vmatpush1.msra.mxu0 0.0
    %3509 = vmatprep.subr.mxu0 0.0
    %3510 = vmatpush1.msra.mxu0 0.0
    %3511 = vmatprep.subr.mxu0 0.0
    %3512 = vmatpush1.msra.mxu0 0.0
    %3513 = vmatprep.subr.mxu0 0.0
    %3514 = vmatpush1.msra.mxu0 0.0
    %3515 = vmatprep.subr.mxu0 0.0
    %3516 = vmatpush1.msra.mxu0 0.0
    %3517 = vmatprep.subr.mxu0 0.0
    %3518 = vmatpush1.msra.mxu0 0.0
    %3519 = vmatprep.subr.mxu0 0.0
    %3520 = vmatpush1.msra.mxu0 0.0
    %3521 = vmatprep.subr.mxu0 0.0
    %3522 = vmatpush1.msra.mxu0 0.0
    %3523 = vmatprep.subr.mxu0 0.0
    %3524 = vmatpush1.msra.mxu0 0.0
    %3525 = vmatprep.subr.mxu0 0.0
    %3526 = vmatpush1.msra.mxu0 0.0
    %3527 = vmatprep.subr.mxu0 0.0
    %3528 = vmatpush1.msra.mxu0 0.0
    %3529 = vmatprep.subr.mxu0 0.0
    %3530 = vmatpush1.msra.mxu0 0.0
    %3531 = vmatprep.subr.mxu0 0.0
    %3532 = vmatpush1.msra.mxu0 0.0
    %3533 = vmatprep.subr.mxu0 0.0
    %3534 = vmatpush1.msra.mxu0 0.0
    %3535 = vmatprep.subr.mxu0 0.0
    %3536 = vmatpush1.msra.mxu0 0.0
    %3537 = vmatprep.subr.mxu0 0.0
    %3538 = vmatpush1.msra.mxu0 0.0
    %3539 = vmatprep.subr.mxu0 0.0
    %3540 = vmatpush1.msra.mxu0 0.0
    %3541 = vmatprep.subr.mxu0 0.0
    %3542 = vmatpush1.msra.mxu0 0.0
    %3543 = vmatprep.subr.mxu0 0.0
    %3544 = vmatpush1.msra.mxu0 0.0
    %3545 = vmatprep.subr.mxu0 0.0
    %3546 = vmatpush1.msra.mxu0 0.0
    %3547 = vmatprep.subr.mxu0 0.0
    %3548 = vmatpush1.msra.mxu0 0.0
    %3549 = vmatprep.subr.mxu0 0.0
    %3550 = vmatpush1.msra.mxu0 0.0
    %3551 = vmatprep.subr.mxu0 0.0
    %3552 = vmatpush1.msra.mxu0 0.0
    %3553 = vmatprep.subr.mxu0 0.0
    %3554 = vmatpush1.msra.mxu0 0.0
    %3555 = vmatprep.subr.mxu0 0.0
    %3556 = vmatpush1.msra.mxu0 0.0
    %3557 = vmatprep.subr.mxu0 0.0
    %3558 = vmatpush1.msra.mxu0 0.0
    %3559 = vmatprep.mubr.f32.mxu0 0.0
    %3560 = vmatmul.mubr.f32.gmra.mrb[0].mxu0 %v3491
    %v3561 = vpop.f32.mrb[0].mxu0
    %v3562 = vadd.f32 0.0, %v3561
    %v3563 = vpop.f32.mrb[0].mxu0
    %3564 = vdwg.mxu0
    %3565 = vrot.lane.b32.xlu0 %v2799, 96
    %v3566 = vpop.permute.xlu0 %3565
    %3567 = vrot.lane.b32.xlu0 %v2806, 96
    %v3568 = vpop.permute.xlu0 %3567
    %v3571 = vsel %vm3083, %v3127, 0
    %v3573 = vsel %vm3172, %v3568, 0
    %3575 = vmatprep.subr.mxu0 0.0
    %3576 = vmatpush1.msra.mxu0 %v3566
    %3577 = vmatprep.subr.mxu0 0.0
    %3578 = vmatpush1.msra.mxu0 %v3573
    %3579 = vmatprep.subr.mxu0 0.0
    %3580 = vmatpush1.msra.mxu0 0.0
    %3581 = vmatprep.subr.mxu0 0.0
    %3582 = vmatpush1.msra.mxu0 0.0
    %3583 = vmatprep.subr.mxu0 0.0
    %3584 = vmatpush1.msra.mxu0 0.0
    %3585 = vmatprep.subr.mxu0 0.0
    %3586 = vmatpush1.msra.mxu0 0.0
    %3587 = vmatprep.subr.mxu0 0.0
    %3588 = vmatpush1.msra.mxu0 0.0
    %3589 = vmatprep.subr.mxu0 0.0
    %3590 = vmatpush1.msra.mxu0 0.0
    %3591 = vmatprep.subr.mxu0 0.0
    %3592 = vmatpush1.msra.mxu0 0.0
    %3593 = vmatprep.subr.mxu0 0.0
    %3594 = vmatpush1.msra.mxu0 0.0
    %3595 = vmatprep.subr.mxu0 0.0
    %3596 = vmatpush1.msra.mxu0 0.0
    %3597 = vmatprep.subr.mxu0 0.0
    %3598 = vmatpush1.msra.mxu0 0.0
    %3599 = vmatprep.subr.mxu0 0.0
    %3600 = vmatpush1.msra.mxu0 0.0
    %3601 = vmatprep.subr.mxu0 0.0
    %3602 = vmatpush1.msra.mxu0 0.0
    %3603 = vmatprep.subr.mxu0 0.0
    %3604 = vmatpush1.msra.mxu0 0.0
    %3605 = vmatprep.subr.mxu0 0.0
    %3606 = vmatpush1.msra.mxu0 0.0
    %3607 = vmatprep.subr.mxu0 0.0
    %3608 = vmatpush1.msra.mxu0 0.0
    %3609 = vmatprep.subr.mxu0 0.0
    %3610 = vmatpush1.msra.mxu0 0.0
    %3611 = vmatprep.subr.mxu0 0.0
    %3612 = vmatpush1.msra.mxu0 0.0
    %3613 = vmatprep.subr.mxu0 0.0
    %3614 = vmatpush1.msra.mxu0 0.0
    %3615 = vmatprep.subr.mxu0 0.0
    %3616 = vmatpush1.msra.mxu0 0.0
    %3617 = vmatprep.subr.mxu0 0.0
    %3618 = vmatpush1.msra.mxu0 0.0
    %3619 = vmatprep.subr.mxu0 0.0
    %3620 = vmatpush1.msra.mxu0 0.0
    %3621 = vmatprep.subr.mxu0 0.0
    %3622 = vmatpush1.msra.mxu0 0.0
    %3623 = vmatprep.subr.mxu0 0.0
    %3624 = vmatpush1.msra.mxu0 0.0
    %3625 = vmatprep.subr.mxu0 0.0
    %3626 = vmatpush1.msra.mxu0 0.0
    %3627 = vmatprep.subr.mxu0 0.0
    %3628 = vmatpush1.msra.mxu0 0.0
    %3629 = vmatprep.subr.mxu0 0.0
    %3630 = vmatpush1.msra.mxu0 0.0
    %3631 = vmatprep.subr.mxu0 0.0
    %3632 = vmatpush1.msra.mxu0 0.0
    %3633 = vmatprep.subr.mxu0 0.0
    %3634 = vmatpush1.msra.mxu0 0.0
    %3635 = vmatprep.subr.mxu0 0.0
    %3636 = vmatpush1.msra.mxu0 0.0
    %3637 = vmatprep.subr.mxu0 0.0
    %3638 = vmatpush1.msra.mxu0 0.0
    %3639 = vmatprep.mubr.f32.mxu0 0.0
    %3640 = vmatmul.mubr.f32.gmra.mrb[0].mxu0 %v3571
    %v3641 = vpop.f32.mrb[0].mxu0
    %v3642 = vadd.f32 0.0, %v3641
    %v3643 = vpop.f32.mrb[0].mxu0
    %3644 = vdwg.mxu0
    %3645 = vrot.lane.b32.xlu0 %v2899, 96
    %v3646 = vpop.permute.xlu0 %3645
    %3647 = vrot.lane.b32.xlu0 %v2906, 96
    %v3648 = vpop.permute.xlu0 %3647
    %v3651 = vsel %vm3083, %v3129, 0
    %v3653 = vsel %vm3172, %v3648, 0
    %3655 = vmatprep.subr.mxu0 0.0
    %3656 = vmatpush1.msra.mxu0 %v3646
    %3657 = vmatprep.subr.mxu0 0.0
    %3658 = vmatpush1.msra.mxu0 %v3653
    %3659 = vmatprep.subr.mxu0 0.0
    %3660 = vmatpush1.msra.mxu0 0.0
    %3661 = vmatprep.subr.mxu0 0.0
    %3662 = vmatpush1.msra.mxu0 0.0
    %3663 = vmatprep.subr.mxu0 0.0
    %3664 = vmatpush1.msra.mxu0 0.0
    %3665 = vmatprep.subr.mxu0 0.0
    %3666 = vmatpush1.msra.mxu0 0.0
    %3667 = vmatprep.subr.mxu0 0.0
    %3668 = vmatpush1.msra.mxu0 0.0
    %3669 = vmatprep.subr.mxu0 0.0
    %3670 = vmatpush1.msra.mxu0 0.0
    %3671 = vmatprep.subr.mxu0 0.0
    %3672 = vmatpush1.msra.mxu0 0.0
    %3673 = vmatprep.subr.mxu0 0.0
    %3674 = vmatpush1.msra.mxu0 0.0
    %3675 = vmatprep.subr.mxu0 0.0
    %3676 = vmatpush1.msra.mxu0 0.0
    %3677 = vmatprep.subr.mxu0 0.0
    %3678 = vmatpush1.msra.mxu0 0.0
    %3679 = vmatprep.subr.mxu0 0.0
    %3680 = vmatpush1.msra.mxu0 0.0
    %3681 = vmatprep.subr.mxu0 0.0
    %3682 = vmatpush1.msra.mxu0 0.0
    %3683 = vmatprep.subr.mxu0 0.0
    %3684 = vmatpush1.msra.mxu0 0.0
    %3685 = vmatprep.subr.mxu0 0.0
    %3686 = vmatpush1.msra.mxu0 0.0
    %3687 = vmatprep.subr.mxu0 0.0
    %3688 = vmatpush1.msra.mxu0 0.0
    %3689 = vmatprep.subr.mxu0 0.0
    %3690 = vmatpush1.msra.mxu0 0.0
    %3691 = vmatprep.subr.mxu0 0.0
    %3692 = vmatpush1.msra.mxu0 0.0
    %3693 = vmatprep.subr.mxu0 0.0
    %3694 = vmatpush1.msra.mxu0 0.0
    %3695 = vmatprep.subr.mxu0 0.0
    %3696 = vmatpush1.msra.mxu0 0.0
    %3697 = vmatprep.subr.mxu0 0.0
    %3698 = vmatpush1.msra.mxu0 0.0
    %3699 = vmatprep.subr.mxu0 0.0
    %3700 = vmatpush1.msra.mxu0 0.0
    %3701 = vmatprep.subr.mxu0 0.0
    %3702 = vmatpush1.msra.mxu0 0.0
    %3703 = vmatprep.subr.mxu0 0.0
    %3704 = vmatpush1.msra.mxu0 0.0
    %3705 = vmatprep.subr.mxu0 0.0
    %3706 = vmatpush1.msra.mxu0 0.0
    %3707 = vmatprep.subr.mxu0 0.0
    %3708 = vmatpush1.msra.mxu0 0.0
    %3709 = vmatprep.subr.mxu0 0.0
    %3710 = vmatpush1.msra.mxu0 0.0
    %3711 = vmatprep.subr.mxu0 0.0
    %3712 = vmatpush1.msra.mxu0 0.0
    %3713 = vmatprep.subr.mxu0 0.0
    %3714 = vmatpush1.msra.mxu0 0.0
    %3715 = vmatprep.subr.mxu0 0.0
    %3716 = vmatpush1.msra.mxu0 0.0
    %3717 = vmatprep.subr.mxu0 0.0
    %3718 = vmatpush1.msra.mxu0 0.0
    %3719 = vmatprep.mubr.f32.mxu0 0.0
    %3720 = vmatmul.mubr.f32.gmra.mrb[0].mxu0 %v3651
    %v3721 = vpop.f32.mrb[0].mxu0
    %v3722 = vadd.f32 0.0, %v3721
    %v3723 = vpop.f32.mrb[0].mxu0
    %3724 = vdwg.mxu0
    %3725 = vrot.lane.b32.xlu0 %v2999, 96
    %v3726 = vpop.permute.xlu0 %3725
    %3727 = vrot.lane.b32.xlu0 %v3006, 96
    %v3728 = vpop.permute.xlu0 %3727
    %v3731 = vsel %vm3083, %v3131, 0
    %v3733 = vsel %vm3172, %v3728, 0
    %3735 = vmatprep.subr.mxu0 0.0
    %3736 = vmatpush1.msra.mxu0 %v3726
    %3737 = vmatprep.subr.mxu0 0.0
    %3738 = vmatpush1.msra.mxu0 %v3733
    %3739 = vmatprep.subr.mxu0 0.0
    %3740 = vmatpush1.msra.mxu0 0.0
    %3741 = vmatprep.subr.mxu0 0.0
    %3742 = vmatpush1.msra.mxu0 0.0
    %3743 = vmatprep.subr.mxu0 0.0
    %3744 = vmatpush1.msra.mxu0 0.0
    %3745 = vmatprep.subr.mxu0 0.0
    %3746 = vmatpush1.msra.mxu0 0.0
    %3747 = vmatprep.subr.mxu0 0.0
    %3748 = vmatpush1.msra.mxu0 0.0
    %3749 = vmatprep.subr.mxu0 0.0
    %3750 = vmatpush1.msra.mxu0 0.0
    %3751 = vmatprep.subr.mxu0 0.0
    %3752 = vmatpush1.msra.mxu0 0.0
    %3753 = vmatprep.subr.mxu0 0.0
    %3754 = vmatpush1.msra.mxu0 0.0
    %3755 = vmatprep.subr.mxu0 0.0
    %3756 = vmatpush1.msra.mxu0 0.0
    %3757 = vmatprep.subr.mxu0 0.0
    %3758 = vmatpush1.msra.mxu0 0.0
    %3759 = vmatprep.subr.mxu0 0.0
    %3760 = vmatpush1.msra.mxu0 0.0
    %3761 = vmatprep.subr.mxu0 0.0
    %3762 = vmatpush1.msra.mxu0 0.0
    %3763 = vmatprep.subr.mxu0 0.0
    %3764 = vmatpush1.msra.mxu0 0.0
    %3765 = vmatprep.subr.mxu0 0.0
    %3766 = vmatpush1.msra.mxu0 0.0
    %3767 = vmatprep.subr.mxu0 0.0
    %3768 = vmatpush1.msra.mxu0 0.0
    %3769 = vmatprep.subr.mxu0 0.0
    %3770 = vmatpush1.msra.mxu0 0.0
    %3771 = vmatprep.subr.mxu0 0.0
    %3772 = vmatpush1.msra.mxu0 0.0
    %3773 = vmatprep.subr.mxu0 0.0
    %3774 = vmatpush1.msra.mxu0 0.0
    %3775 = vmatprep.subr.mxu0 0.0
    %3776 = vmatpush1.msra.mxu0 0.0
    %3777 = vmatprep.subr.mxu0 0.0
    %3778 = vmatpush1.msra.mxu0 0.0
    %3779 = vmatprep.subr.mxu0 0.0
    %3780 = vmatpush1.msra.mxu0 0.0
    %3781 = vmatprep.subr.mxu0 0.0
    %3782 = vmatpush1.msra.mxu0 0.0
    %3783 = vmatprep.subr.mxu0 0.0
    %3784 = vmatpush1.msra.mxu0 0.0
    %3785 = vmatprep.subr.mxu0 0.0
    %3786 = vmatpush1.msra.mxu0 0.0
    %3787 = vmatprep.subr.mxu0 0.0
    %3788 = vmatpush1.msra.mxu0 0.0
    %3789 = vmatprep.subr.mxu0 0.0
    %3790 = vmatpush1.msra.mxu0 0.0
    %3791 = vmatprep.subr.mxu0 0.0
    %3792 = vmatpush1.msra.mxu0 0.0
    %3793 = vmatprep.subr.mxu0 0.0
    %3794 = vmatpush1.msra.mxu0 0.0
    %3795 = vmatprep.subr.mxu0 0.0
    %3796 = vmatpush1.msra.mxu0 0.0
    %3797 = vmatprep.subr.mxu0 0.0
    %3798 = vmatpush1.msra.mxu0 0.0
    %3799 = vmatprep.mubr.f32.mxu0 0.0
    %3800 = vmatmul.mubr.f32.gmra.mrb[0].mxu0 %v3731
    %v3801 = vpop.f32.mrb[0].mxu0
    %v3802 = vadd.f32 0.0, %v3801
    %v3803 = vpop.f32.mrb[0].mxu0
    %3804 = vdwg.mxu0
    %v3805 = vmul.f32 %v3242, %v3156
    %v3806 = vmul.f32 %v3322, %v3157
    %v3807 = vmul.f32 %v3402, %v3158
    %v3808 = vmul.f32 %v3482, %v3159
    %v3809 = vmul.f32 %v3562, %v3160
    %v3810 = vmul.f32 %v3642, %v3161
    %v3811 = vmul.f32 %v3722, %v3162
    %v3812 = vmul.f32 %v3802, %v3163
    %3815 = vrot.lane.b32.xlu0 %v3806, 8
    %v3816 = vpop.permute.xlu0 %3815
    %3817 = vrot.lane.b32.xlu0 %v3810, 8
    %v3818 = vpop.permute.xlu0 %3817
    %3823 = vrot.lane.b32.xlu0 %v3807, 16
    %v3824 = vpop.permute.xlu0 %3823
    %3825 = vrot.lane.b32.xlu0 %v3811, 16
    %v3826 = vpop.permute.xlu0 %3825
    %3831 = vrot.lane.b32.xlu0 %v3808, 24
    %v3832 = vpop.permute.xlu0 %3831
    %3833 = vrot.lane.b32.xlu0 %v3812, 24
    %v3834 = vpop.permute.xlu0 %3833
    %v3837 = vsel %vm473, %v3805, %v3816
    %v3838 = vsel %vm473, %v3809, %v3818
    %v3839 = vsel %vm1788, %v3837, %v3824
    %v3840 = vsel %vm1788, %v3838, %v3826
    %v3841 = vsel %vm1791, %v3839, %v3832
    %v3842 = vsel %vm1791, %v3840, %v3834
    %v3843 = vld [vmem:[#allocation13] sm:$0xff]
    %v3844 = vld [vmem:[#allocation13 + $0x8] sm:$0xff]
    %v3845 = vld [vmem:[#allocation13 + $0x10] sm:$0xff]
    %v3846 = vld [vmem:[#allocation13 + $0x18] sm:$0xff]
    %3847 = vrot.lane.b32.xlu0 %v1932, 32
    %v3848 = vpop.permute.xlu0 %3847
    %v3851 = vsel %vm267, %v3841, 0
    %v3854 = vsel %vm267, %v3842, 0
    %3856 = vmatprep.subr.mxu0 0.0
    %3857 = vmatpush1.msra.mxu0 %v3843
    %3858 = vmatprep.subr.mxu0 0.0
    %3859 = vmatpush1.msra.mxu0 %v3844
    %3860 = vmatprep.subr.mxu0 0.0
    %3861 = vmatpush1.msra.mxu0 %v3845
    %3862 = vmatprep.subr.mxu0 0.0
    %3863 = vmatpush1.msra.mxu0 %v3846
    %3864 = vmatprep.subr.mxu0 0.0
    %3865 = vmatpush1.msra.mxu0 0.0
    %3866 = vmatprep.subr.mxu0 0.0
    %3867 = vmatpush1.msra.mxu0 0.0
    %3868 = vmatprep.subr.mxu0 0.0
    %3869 = vmatpush1.msra.mxu0 0.0
    %3870 = vmatprep.subr.mxu0 0.0
    %3871 = vmatpush1.msra.mxu0 0.0
    %3872 = vmatprep.subr.mxu0 0.0
    %3873 = vmatpush1.msra.mxu0 0.0
    %3874 = vmatprep.subr.mxu0 0.0
    %3875 = vmatpush1.msra.mxu0 0.0
    %3876 = vmatprep.subr.mxu0 0.0
    %3877 = vmatpush1.msra.mxu0 0.0
    %3878 = vmatprep.subr.mxu0 0.0
    %3879 = vmatpush1.msra.mxu0 0.0
    %3880 = vmatprep.subr.mxu0 0.0
    %3881 = vmatpush1.msra.mxu0 0.0
    %3882 = vmatprep.subr.mxu0 0.0
    %3883 = vmatpush1.msra.mxu0 0.0
    %3884 = vmatprep.subr.mxu0 0.0
    %3885 = vmatpush1.msra.mxu0 0.0
    %3886 = vmatprep.subr.mxu0 0.0
    %3887 = vmatpush1.msra.mxu0 0.0
    %3888 = vmatprep.subr.mxu0 0.0
    %3889 = vmatpush1.msra.mxu0 0.0
    %3890 = vmatprep.subr.mxu0 0.0
    %3891 = vmatpush1.msra.mxu0 0.0
    %3892 = vmatprep.subr.mxu0 0.0
    %3893 = vmatpush1.msra.mxu0 0.0
    %3894 = vmatprep.subr.mxu0 0.0
    %3895 = vmatpush1.msra.mxu0 0.0
    %3896 = vmatprep.subr.mxu0 0.0
    %3897 = vmatpush1.msra.mxu0 0.0
    %3898 = vmatprep.subr.mxu0 0.0
    %3899 = vmatpush1.msra.mxu0 0.0
    %3900 = vmatprep.subr.mxu0 0.0
    %3901 = vmatpush1.msra.mxu0 0.0
    %3902 = vmatprep.subr.mxu0 0.0
    %3903 = vmatpush1.msra.mxu0 0.0
    %3904 = vmatprep.subr.mxu0 0.0
    %3905 = vmatpush1.msra.mxu0 0.0
    %3906 = vmatprep.subr.mxu0 0.0
    %3907 = vmatpush1.msra.mxu0 0.0
    %3908 = vmatprep.subr.mxu0 0.0
    %3909 = vmatpush1.msra.mxu0 0.0
    %3910 = vmatprep.subr.mxu0 0.0
    %3911 = vmatpush1.msra.mxu0 0.0
    %3912 = vmatprep.subr.mxu0 0.0
    %3913 = vmatpush1.msra.mxu0 0.0
    %3914 = vmatprep.subr.mxu0 0.0
    %3915 = vmatpush1.msra.mxu0 0.0
    %3916 = vmatprep.subr.mxu0 0.0
    %3917 = vmatpush1.msra.mxu0 0.0
    %3918 = vmatprep.subr.mxu0 0.0
    %3919 = vmatpush1.msra.mxu0 0.0
    %3920 = vmatprep.mubr.f32.mxu0 0.0
    %3921 = vmatmul.mubr.f32.gmra.mrb[0].mxu0 %v3851
    %v3922 = vpop.f32.mrb[0].mxu0
    %v3923 = vadd.f32 %v3848, %v3922
    %v3924 = vpop.f32.mrb[0].mxu0
    %3925 = vmatprep.mubr.f32.mxu0 0.0
    %3926 = vmatmul.mubr.f32.gmra.mrb[0].mxu0 %v3854
    %v3927 = vpop.f32.mrb[0].mxu0
    %v3928 = vadd.f32 %v3848, %v3927
    %v3929 = vpop.f32.mrb[0].mxu0
    %3930 = vdwg.mxu0
    %v3931 = vadd.f32 %v3923, %v1921
    %v3932 = vadd.f32 %v3928, %v1922
    %v3933 = vsel %vm267, %v3931, 0.0
    %3934 = vadd.xlane.f32.xlu0 %v3933
    %v3935 = vpop.xlane.xlu0 %3934
    %v3936 = vsel %vm267, %v3932, 0.0
    %3937 = vadd.xlane.f32.xlu0 %v3936
    %v3938 = vpop.xlane.xlu0 %3937
    %v3939 = vmul.f32 %v3935, %v1890
    %v3940 = vmul.f32 %v3938, %v1890
    %v3941 = vsub.f32 %v3931, %v3939
    %v3942 = vsub.f32 %v3932, %v3940
    %v3943 = vmul.f32 %v3941, %v3941
    %v3944 = vmul.f32 %v3942, %v3942
    %v3945 = vsel %vm267, %v3943, 0.0
    %3946 = vadd.xlane.f32.xlu0 %v3945
    %v3947 = vpop.xlane.xlu0 %3946
    %v3948 = vsel %vm267, %v3944, 0.0
    %3949 = vadd.xlane.f32.xlu0 %v3948
    %v3950 = vpop.xlane.xlu0 %3949
    %v3951 = vmul.f32 %v3947, 0.032258064
    %v3952 = vmul.f32 %v3950, 0.032258064
    %v3953 = vadd.f32 %v3951, 1e-12
    %v3954 = vadd.f32 %v3952, 1e-12
    %v3955 = vrsqrt.pop %v3953
    %v3956 = vrsqrt.pop %v3954
    %v3957 = vmul.f32 %v3941, %v3955
    %v3958 = vmul.f32 %v3942, %v3956
    %v3959 = vlaneseq
    %v3960 = vshrl.u32 %v3959, 7
    %v3961 = vsub.s32 2, %v3960
    %v3962 = vrot.slane %v255, %v3961
    %v3963 = vmul.f32 %v3962, %v3957
    %v3964 = vmul.f32 %v3962, %v3958
    %v3965 = vlaneseq
    %v3966 = vshrl.u32 %v3965, 7
    %v3967 = vsub.s32 3, %v3966
    %v3968 = vrot.slane %v255, %v3967
    %v3969 = vadd.f32 %v3963, %v3968
    %v3970 = vadd.f32 %v3964, %v3968
    %v3971 = vld [vmem:[#allocation16] sm:$0xff]
    %v3972 = vld [vmem:[#allocation16 + $0x8] sm:$0xff]
    %v3973 = vld [vmem:[#allocation16 + $0x10] sm:$0xff]
    %v3974 = vld [vmem:[#allocation16 + $0x18] sm:$0xff]
    %v3975 = vld [vmem:[#allocation19] sm:$0x1]
    %v3977 = vlaneseq
    %v3978 = vshrl.u32 %v3977, 7
    %v3979 = vsub.s32 0, %v3978
    %v3980 = vrot.slane %v3975, %v3979
    %v3983 = vsel %vm267, %v3969, 0
    %v3986 = vsel %vm267, %v3970, 0
    %3988 = vmatprep.subr.mxu0 0.0
    %3989 = vmatpush1.msra.mxu0 %v3971
    %3990 = vmatprep.subr.mxu0 0.0
    %3991 = vmatpush1.msra.mxu0 %v3972
    %3992 = vmatprep.subr.mxu0 0.0
    %3993 = vmatpush1.msra.mxu0 %v3973
    %3994 = vmatprep.subr.mxu0 0.0
    %3995 = vmatpush1.msra.mxu0 %v3974
    %3996 = vmatprep.subr.mxu0 0.0
    %3997 = vmatpush1.msra.mxu0 0.0
    %3998 = vmatprep.subr.mxu0 0.0
    %3999 = vmatpush1.msra.mxu0 0.0
    %4000 = vmatprep.subr.mxu0 0.0
    %4001 = vmatpush1.msra.mxu0 0.0
    %4002 = vmatprep.subr.mxu0 0.0
    %4003 = vmatpush1.msra.mxu0 0.0
    %4004 = vmatprep.subr.mxu0 0.0
    %4005 = vmatpush1.msra.mxu0 0.0
    %4006 = vmatprep.subr.mxu0 0.0
    %4007 = vmatpush1.msra.mxu0 0.0
    %4008 = vmatprep.subr.mxu0 0.0
    %4009 = vmatpush1.msra.mxu0 0.0
    %4010 = vmatprep.subr.mxu0 0.0
    %4011 = vmatpush1.msra.mxu0 0.0
    %4012 = vmatprep.subr.mxu0 0.0
    %4013 = vmatpush1.msra.mxu0 0.0
    %4014 = vmatprep.subr.mxu0 0.0
    %4015 = vmatpush1.msra.mxu0 0.0
    %4016 = vmatprep.subr.mxu0 0.0
    %4017 = vmatpush1.msra.mxu0 0.0
    %4018 = vmatprep.subr.mxu0 0.0
    %4019 = vmatpush1.msra.mxu0 0.0
    %4020 = vmatprep.subr.mxu0 0.0
    %4021 = vmatpush1.msra.mxu0 0.0
    %4022 = vmatprep.subr.mxu0 0.0
    %4023 = vmatpush1.msra.mxu0 0.0
    %4024 = vmatprep.subr.mxu0 0.0
    %4025 = vmatpush1.msra.mxu0 0.0
    %4026 = vmatprep.subr.mxu0 0.0
    %4027 = vmatpush1.msra.mxu0 0.0
    %4028 = vmatprep.subr.mxu0 0.0
    %4029 = vmatpush1.msra.mxu0 0.0
    %4030 = vmatprep.subr.mxu0 0.0
    %4031 = vmatpush1.msra.mxu0 0.0
    %4032 = vmatprep.subr.mxu0 0.0
    %4033 = vmatpush1.msra.mxu0 0.0
    %4034 = vmatprep.subr.mxu0 0.0
    %4035 = vmatpush1.msra.mxu0 0.0
    %4036 = vmatprep.subr.mxu0 0.0
    %4037 = vmatpush1.msra.mxu0 0.0
    %4038 = vmatprep.subr.mxu0 0.0
    %4039 = vmatpush1.msra.mxu0 0.0
    %4040 = vmatprep.subr.mxu0 0.0
    %4041 = vmatpush1.msra.mxu0 0.0
    %4042 = vmatprep.subr.mxu0 0.0
    %4043 = vmatpush1.msra.mxu0 0.0
    %4044 = vmatprep.subr.mxu0 0.0
    %4045 = vmatpush1.msra.mxu0 0.0
    %4046 = vmatprep.subr.mxu0 0.0
    %4047 = vmatpush1.msra.mxu0 0.0
    %4048 = vmatprep.subr.mxu0 0.0
    %4049 = vmatpush1.msra.mxu0 0.0
    %4050 = vmatprep.subr.mxu0 0.0
    %4051 = vmatpush1.msra.mxu0 0.0
    %4052 = vmatprep.mubr.f32.mxu0 0.0
    %4053 = vmatmul.mubr.f32.gmra.mrb[0].mxu0 %v3983
    %v4054 = vpop.f32.mrb[0].mxu0
    %v4055 = vadd.f32 %v3980, %v4054
    %v4056 = vpop.f32.mrb[0].mxu0
    %4057 = vmatprep.mubr.f32.mxu0 0.0
    %4058 = vmatmul.mubr.f32.gmra.mrb[0].mxu0 %v3986
    %v4059 = vpop.f32.mrb[0].mxu0
    %v4060 = vadd.f32 %v3980, %v4059
    %v4061 = vpop.f32.mrb[0].mxu0
    %4062 = vdwg.mxu0
    %v4063 = vmax.f32 %v4055, 0.0
    %v4064 = vmax.f32 %v4060, 0.0
    %v4065 = vld [vmem:[#allocation17] sm:$0xff]
    %v4066 = vld [vmem:[#allocation17 + $0x8] sm:$0xff]
    %v4067 = vld [vmem:[#allocation17 + $0x10] sm:$0xff]
    %v4068 = vld [vmem:[#allocation17 + $0x18] sm:$0xff]
    %v4069 = vld [vmem:[#allocation17 + $0x20] sm:$0xff]
    %v4070 = vld [vmem:[#allocation17 + $0x28] sm:$0xff]
    %v4071 = vld [vmem:[#allocation17 + $0x30] sm:$0xff]
    %v4072 = vld [vmem:[#allocation17 + $0x38] sm:$0xff]
    %4073 = vrot.lane.b32.xlu0 %v3980, 64
    %v4074 = vpop.permute.xlu0 %4073
    %vm4076 = vcmask 523264
    %v4078 = vsel %vm4076, %v4063, 0
    %v4081 = vsel %vm4076, %v4064, 0
    %4083 = vmatprep.subr.mxu0 0.0
    %4084 = vmatpush1.msra.mxu0 %v4065
    %4085 = vmatprep.subr.mxu0 0.0
    %4086 = vmatpush1.msra.mxu0 %v4066
    %4087 = vmatprep.subr.mxu0 0.0
    %4088 = vmatpush1.msra.mxu0 %v4067
    %4089 = vmatprep.subr.mxu0 0.0
    %4090 = vmatpush1.msra.mxu0 %v4068
    %4091 = vmatprep.subr.mxu0 0.0
    %4092 = vmatpush1.msra.mxu0 %v4069
    %4093 = vmatprep.subr.mxu0 0.0
    %4094 = vmatpush1.msra.mxu0 %v4070
    %4095 = vmatprep.subr.mxu0 0.0
    %4096 = vmatpush1.msra.mxu0 %v4071
    %4097 = vmatprep.subr.mxu0 0.0
    %4098 = vmatpush1.msra.mxu0 %v4072
    %4099 = vmatprep.subr.mxu0 0.0
    %4100 = vmatpush1.msra.mxu0 0.0
    %4101 = vmatprep.subr.mxu0 0.0
    %4102 = vmatpush1.msra.mxu0 0.0
    %4103 = vmatprep.subr.mxu0 0.0
    %4104 = vmatpush1.msra.mxu0 0.0
    %4105 = vmatprep.subr.mxu0 0.0
    %4106 = vmatpush1.msra.mxu0 0.0
    %4107 = vmatprep.subr.mxu0 0.0
    %4108 = vmatpush1.msra.mxu0 0.0
    %4109 = vmatprep.subr.mxu0 0.0
    %4110 = vmatpush1.msra.mxu0 0.0
    %4111 = vmatprep.subr.mxu0 0.0
    %4112 = vmatpush1.msra.mxu0 0.0
    %4113 = vmatprep.subr.mxu0 0.0
    %4114 = vmatpush1.msra.mxu0 0.0
    %4115 = vmatprep.subr.mxu0 0.0
    %4116 = vmatpush1.msra.mxu0 0.0
    %4117 = vmatprep.subr.mxu0 0.0
    %4118 = vmatpush1.msra.mxu0 0.0
    %4119 = vmatprep.subr.mxu0 0.0
    %4120 = vmatpush1.msra.mxu0 0.0
    %4121 = vmatprep.subr.mxu0 0.0
    %4122 = vmatpush1.msra.mxu0 0.0
    %4123 = vmatprep.subr.mxu0 0.0
    %4124 = vmatpush1.msra.mxu0 0.0
    %4125 = vmatprep.subr.mxu0 0.0
    %4126 = vmatpush1.msra.mxu0 0.0
    %4127 = vmatprep.subr.mxu0 0.0
    %4128 = vmatpush1.msra.mxu0 0.0
    %4129 = vmatprep.subr.mxu0 0.0
    %4130 = vmatpush1.msra.mxu0 0.0
    %4131 = vmatprep.subr.mxu0 0.0
    %4132 = vmatpush1.msra.mxu0 0.0
    %4133 = vmatprep.subr.mxu0 0.0
    %4134 = vmatpush1.msra.mxu0 0.0
    %4135 = vmatprep.subr.mxu0 0.0
    %4136 = vmatpush1.msra.mxu0 0.0
    %4137 = vmatprep.subr.mxu0 0.0
    %4138 = vmatpush1.msra.mxu0 0.0
    %4139 = vmatprep.subr.mxu0 0.0
    %4140 = vmatpush1.msra.mxu0 0.0
    %4141 = vmatprep.subr.mxu0 0.0
    %4142 = vmatpush1.msra.mxu0 0.0
    %4143 = vmatprep.subr.mxu0 0.0
    %4144 = vmatpush1.msra.mxu0 0.0
    %4145 = vmatprep.subr.mxu0 0.0
    %4146 = vmatpush1.msra.mxu0 0.0
    %4147 = vmatprep.mubr.f32.mxu0 0.0
    %4148 = vmatmul.mubr.f32.gmra.mrb[0].mxu0 %v4078
    %v4149 = vpop.f32.mrb[0].mxu0
    %v4150 = vadd.f32 %v4074, %v4149
    %v4151 = vpop.f32.mrb[0].mxu0
    %4152 = vmatprep.mubr.f32.mxu0 0.0
    %4153 = vmatmul.mubr.f32.gmra.mrb[0].mxu0 %v4081
    %v4154 = vpop.f32.mrb[0].mxu0
    %v4155 = vadd.f32 %v4074, %v4154
    %v4156 = vpop.f32.mrb[0].mxu0
    %4157 = vdwg.mxu0
    %v4158 = vadd.f32 %v4150, %v3969
    %v4159 = vadd.f32 %v4155, %v3970
    %v4160 = vsel %vm267, %v4158, 0.0
    %4161 = vadd.xlane.f32.xlu0 %v4160
    %v4162 = vpop.xlane.xlu0 %4161
    %v4163 = vsel %vm267, %v4159, 0.0
    %4164 = vadd.xlane.f32.xlu0 %v4163
    %v4165 = vpop.xlane.xlu0 %4164
    %v4166 = vmul.f32 %v4162, %v1890
    %v4167 = vmul.f32 %v4165, %v1890
    %v4168 = vsub.f32 %v4158, %v4166
    %v4169 = vsub.f32 %v4159, %v4167
    %v4170 = vmul.f32 %v4168, %v4168
    %v4171 = vmul.f32 %v4169, %v4169
    %v4172 = vsel %vm267, %v4170, 0.0
    %4173 = vadd.xlane.f32.xlu0 %v4172
    %v4174 = vpop.xlane.xlu0 %4173
    %v4175 = vsel %vm267, %v4171, 0.0
    %4176 = vadd.xlane.f32.xlu0 %v4175
    %v4177 = vpop.xlane.xlu0 %4176
    %v4178 = vmul.f32 %v4174, 0.032258064
    %v4179 = vmul.f32 %v4177, 0.032258064
    %v4180 = vadd.f32 %v4178, 1e-12
    %v4181 = vadd.f32 %v4179, 1e-12
    %v4182 = vrsqrt.pop %v4180
    %v4183 = vrsqrt.pop %v4181
    %v4184 = vmul.f32 %v4168, %v4182
    %v4185 = vmul.f32 %v4169, %v4183
    %v4186 = vlaneseq
    %v4187 = vshrl.u32 %v4186, 7
    %v4188 = vsub.s32 4, %v4187
    %v4189 = vrot.slane %v255, %v4188
    %v4190 = vmul.f32 %v4189, %v4184
    %v4191 = vmul.f32 %v4189, %v4185
    %v4192 = vlaneseq
    %v4193 = vshrl.u32 %v4192, 7
    %v4194 = vsub.s32 5, %v4193
    %v4195 = vrot.slane %v255, %v4194
    %v4196 = vadd.f32 %v4190, %v4195
    %v4197 = vadd.f32 %v4191, %v4195
    %4198 = vst.msk [vmem:[#allocation22] sm:$0xff] %vm267, %v4196
    %4199 = vst.msk [vmem:[#allocation22 + $0x8] sm:$0xff] %vm267, %v4197
    // Predicated region
    $region98: #{tpu_custom_call.1} parent=1 // pred_check
      _
    $region99: #{tpu_custom_call.1} parent=1 // pred_check_branch
      %4201 = sbr.rel (0) target = $region101
    $region100: #{tpu_custom_call.1} parent=1 // pred_region
      %s4203 = ssub.s32 256, 256
      %4204 = vsyncadd [#allocation4], %s4203
      %s4205 = sshll.u32 [#allocation22], 4
      %s4206 = int_to_ptr.vmem [resolvable:$true] %s4205
      %4211 = dma.vmem_to_hbm [thread:$0]  %s4206, 256, %s12, [#allocation4], 128, 128, 8
    $region101: #{tpu_custom_call.1} parent=1 // pred_fallthru
      _
    // Predicated region
    $region102: #{tpu_custom_call.1} parent=1 // pred_check
      _
    $region103: #{tpu_custom_call.1} parent=1 // pred_check_branch
      %4213 = sbr.rel (0) target = $region105
    $region104: #{tpu_custom_call.1} parent=1 // pred_region
      %4214 = dma.done [#allocation4], 256
    $region105: #{tpu_custom_call.1} parent=1 // pred_fallthru
      _
    %4215 = vsyncpa [#allocation3], 1
    %4216 = vsyncpa [#allocation6], 1
    %4217 = vsyncpa [#allocation9], 1
    %4218 = vsyncpa [#allocation12], 1
    %4219 = vsyncpa [#allocation15], 1
    %4220 = vsyncpa [#allocation18], 1
    %4221 = vsyncpa [#allocation21], 1
    %4222 = vsyncpa [#allocation4], 1

</llo_original>
